<compile_context>
chip_gen: v7x
topology: tpu7x:2x2x1
jax: 0.10.0
libtpu: 0.0.40
codegen_flags: <defaults>
</compile_context>

<pallas_src>
import math
import functools

import jax
import jax.numpy as jnp
from jax import lax
from jax.experimental import pallas as pl
from jax.experimental.pallas import tpu as pltpu


# ----------------------------- tiling helpers -----------------------------

def _pick_tile(dim, target, align):
    """Largest tile <= target that is a multiple of `align` and divides `dim`;
    falls back to the full dim (a full-extent block is always legal)."""
    if dim <= target:
        return dim
    t = (target // align) * align
    while t >= align:
        if dim % t == 0:
            return t
        t -= align
    return dim


# ----------------------------- tiled linear: x @ w + b -----------------------------

def _linear_kernel(x_ref, w_ref, b_ref, o_ref, acc_ref):
    @pl.when(pl.program_id(2) == 0)
    def _():
        acc_ref[...] = jnp.zeros_like(acc_ref)

    acc_ref[...] += jnp.dot(x_ref[...], w_ref[...],
                            preferred_element_type=jnp.float32)

    @pl.when(pl.program_id(2) == pl.num_programs(2) - 1)
    def _():
        o_ref[...] = (acc_ref[...] + b_ref[...]).astype(o_ref.dtype)


def linear(x, w, b, *, tm_target=512, tn_target=512, tk_target=512):
    """Tiled, pipelined x @ w + b on the MXU."""
    M, K = x.shape
    N = w.shape[1]
    tm = _pick_tile(M, tm_target, 8)
    tn = _pick_tile(N, tn_target, 128)
    tk = _pick_tile(K, tk_target, 128)
    grid = (M // tm, N // tn, K // tk)
    cost = pl.CostEstimate(
        flops=2 * M * N * K, transcendentals=0,
        bytes_accessed=4 * (M * K + K * N + M * N + N))
    return pl.pallas_call(
        _linear_kernel,
        out_shape=jax.ShapeDtypeStruct((M, N), x.dtype),
        grid=grid,
        in_specs=[
            pl.BlockSpec((tm, tk), lambda i, j, k: (i, k)),
            pl.BlockSpec((tk, tn), lambda i, j, k: (k, j)),
            pl.BlockSpec((1, tn), lambda i, j, k: (0, j)),
        ],
        out_specs=pl.BlockSpec((tm, tn), lambda i, j, k: (i, j)),
        scratch_shapes=[pltpu.VMEM((tm, tn), jnp.float32)],
        compiler_params=pltpu.CompilerParams(
            dimension_semantics=("parallel", "parallel", "arbitrary")),
        cost_estimate=cost,
    )(x, w, b.reshape(1, N))


# ----------------------------- fused fc -> out linear pair -----------------------------

def _fc_out_kernel(x_ref, w1_ref, b1_ref, w2_ref, b2_ref, o_ref):
    h = jnp.dot(x_ref[...], w1_ref[...],
                preferred_element_type=jnp.float32) + b1_ref[...]
    o_ref[...] = (jnp.dot(h.astype(w2_ref.dtype), w2_ref[...],
                          preferred_element_type=jnp.float32)
                  + b2_ref[...]).astype(o_ref.dtype)


def fused_fc_out(x, w1, b1, w2, b2, *, tm_target=512):
    """(x @ w1 + b1) @ w2 + b2, intermediate stays on-chip."""
    M, Kin = x.shape
    Hmid = w1.shape[1]
    Hout = w2.shape[1]
    tm = _pick_tile(M, tm_target, 8)
    cost = pl.CostEstimate(
        flops=2 * M * (Kin * Hmid + Hmid * Hout), transcendentals=0,
        bytes_accessed=4 * (M * Kin + Kin * Hmid + Hmid * Hout + M * Hout))
    return pl.pallas_call(
        _fc_out_kernel,
        out_shape=jax.ShapeDtypeStruct((M, Hout), x.dtype),
        grid=(M // tm,),
        in_specs=[
            pl.BlockSpec((tm, Kin), lambda i: (i, 0)),
            pl.BlockSpec((Kin, Hmid), lambda i: (0, 0)),
            pl.BlockSpec((1, Hmid), lambda i: (0, 0)),
            pl.BlockSpec((Hmid, Hout), lambda i: (0, 0)),
            pl.BlockSpec((1, Hout), lambda i: (0, 0)),
        ],
        out_specs=pl.BlockSpec((tm, Hout), lambda i: (i, 0)),
        compiler_params=pltpu.CompilerParams(dimension_semantics=("parallel",)),
        cost_estimate=cost,
    )(x, w1, b1.reshape(1, Hmid), w2, b2.reshape(1, Hout))


# ----------------------------- paired attention kernel -----------------------------

def _attn_heads(q, k, v, qp, *, nh, hs, scale):
    """q/k/v: [S1, H] token-major; qp: [S2, H].
    Returns merged outputs [S1, H], [S2, H] and per-head probability lists."""
    S1 = q.shape[0]
    o_parts, op_parts, w_parts, wp_parts = [], [], [], []
    for h in range(nh):
        sl = slice(h * hs, (h + 1) * hs)
        qh, kh, vh, qph = q[:, sl], k[:, sl], v[:, sl], qp[:, sl]
        # one scores matmul for self + guided queries; contract last dims (no k.T).
        qcat = jnp.concatenate([qh, qph], axis=0)                       # [S1+S2, hs]
        s = lax.dot_general(qcat, kh, (((1,), (1,)), ((), ())),
                            preferred_element_type=jnp.float32) * scale  # [S1+S2, S1]
        s = s - jnp.max(s, axis=-1, keepdims=True)
        e = jnp.exp(s)
        p = e * pl.reciprocal(jnp.sum(e, axis=-1, keepdims=True), approx=True)
        ov = jnp.dot(p.astype(vh.dtype), vh,
                     preferred_element_type=jnp.float32)                 # [S1+S2, hs]
        o_parts.append(ov[:S1])
        op_parts.append(ov[S1:])
        w_parts.append(p[:S1])
        wp_parts.append(p[S1:])
    return (jnp.concatenate(o_parts, axis=-1),
            jnp.concatenate(op_parts, axis=-1),
            w_parts, wp_parts)


def _paired_attn_kernel(q_ref, k_ref, v_ref, qp_ref, o_ref, op_ref, *,
                        nh, hs, scale):
    o, op, _, _ = _attn_heads(q_ref[...], k_ref[...], v_ref[...], qp_ref[...],
                              nh=nh, hs=hs, scale=scale)
    o_ref[...] = o.astype(o_ref.dtype)
    op_ref[...] = op.astype(op_ref.dtype)


def _paired_attn_w_kernel(q_ref, k_ref, v_ref, qp_ref,
                          o_ref, op_ref, w_ref, wp_ref, *, nh, hs, scale):
    o, op, w_parts, wp_parts = _attn_heads(
        q_ref[...], k_ref[...], v_ref[...], qp_ref[...],
        nh=nh, hs=hs, scale=scale)
    o_ref[...] = o.astype(o_ref.dtype)
    op_ref[...] = op.astype(op_ref.dtype)
    for h in range(nh):
        w_ref[h] = w_parts[h].astype(w_ref.dtype)
        wp_ref[h] = wp_parts[h].astype(wp_ref.dtype)


def paired_attention_core(q, k, v, qp, num_heads, emit_weights):
    """q, k, v: [B, S1, H] token-major; qp: [B, S2, H].
    Returns (o [B,S1,H], op [B,S2,H]) and, if emit_weights,
    (weights [B,nh,S1,S1], guided_weights [B,nh,S2,S1])."""
    B, S1, H = q.shape
    S2 = qp.shape[1]
    hs = H // num_heads
    scale = 1.0 / math.sqrt(hs)

    spec1 = pl.BlockSpec((None, S1, H), lambda b: (b, 0, 0))
    spec2 = pl.BlockSpec((None, S2, H), lambda b: (b, 0, 0))

    flops = 4 * B * num_heads * (S1 + S2) * S1 * hs
    trans = B * num_heads * (S1 + S2) * S1
    bytes_io = 4 * B * ((3 * S1 + S2) * H + (S1 + S2) * H)

    if emit_weights:
        kern = functools.partial(_paired_attn_w_kernel,
                                 nh=num_heads, hs=hs, scale=scale)
        out_shape = (
            jax.ShapeDtypeStruct((B, S1, H), q.dtype),
            jax.ShapeDtypeStruct((B, S2, H), q.dtype),
            jax.ShapeDtypeStruct((B, num_heads, S1, S1), q.dtype),
            jax.ShapeDtypeStruct((B, num_heads, S2, S1), q.dtype),
        )
        out_specs = (
            spec1, spec2,
            pl.BlockSpec((None, num_heads, S1, S1), lambda b: (b, 0, 0, 0)),
            pl.BlockSpec((None, num_heads, S2, S1), lambda b: (b, 0, 0, 0)),
        )
        bytes_io += 4 * B * num_heads * (S1 + S2) * S1
    else:
        kern = functools.partial(_paired_attn_kernel,
                                 nh=num_heads, hs=hs, scale=scale)
        out_shape = (
            jax.ShapeDtypeStruct((B, S1, H), q.dtype),
            jax.ShapeDtypeStruct((B, S2, H), q.dtype),
        )
        out_specs = (spec1, spec2)

    return pl.pallas_call(
        kern,
        grid=(B,),
        in_specs=[spec1, spec1, spec1, spec2],
        out_specs=out_specs,
        out_shape=out_shape,
        compiler_params=pltpu.CompilerParams(dimension_semantics=("parallel",)),
        cost_estimate=pl.CostEstimate(flops=flops, transcendentals=trans,
                                      bytes_accessed=bytes_io),
    )(q, k, v, qp)


# ----------------------------- full forward (mm=True path) -----------------------------

def init_params(key, hidden):
    names_in_out = {
        "query": (hidden, hidden), "key": (hidden, hidden), "value": (hidden, hidden),
        "query_mol": (hidden, hidden), "key_mol": (hidden, hidden), "value_mol": (hidden, hidden),
        "out": (hidden, hidden), "out_mol": (hidden, hidden),
        "fc": (2 * hidden, hidden), "fc_mol": (2 * hidden, hidden),
    }
    params = {}
    keys = jax.random.split(key, len(names_in_out))
    for k_i, (name, (din, dout)) in zip(keys, sorted(names_in_out.items())):
        w = (0.02 * jax.random.normal(k_i, (din, dout))).astype(jnp.float32)
        b = jnp.zeros((dout,), jnp.float32)
        params[name] = (w, b)
    return params


def attention_forward(params, hidden_states, mol, num_heads, vis=True):
    B, S, H = hidden_states.shape
    Bm, Sm, _ = mol.shape

    x2 = hidden_states.reshape(B * S, H)
    m2 = mol.reshape(Bm * Sm, H)

    # fused QKV projections (one HBM pass over x2 / m2 instead of three)
    wq, bq = params["query"]; wk, bk = params["key"]; wv, bv = params["value"]
    qkv = linear(x2, jnp.concatenate([wq, wk, wv], axis=1),
                 jnp.concatenate([bq, bk, bv], axis=0)).reshape(B, S, 3 * H)
    q, k, v = jnp.split(qkv, 3, axis=-1)

    wqm, bqm = params["query_mol"]; wkm, bkm = params["key_mol"]; wvm, bvm = params["value_mol"]
    qkv_m = linear(m2, jnp.concatenate([wqm, wkm, wvm], axis=1),
                   jnp.concatenate([bqm, bkm, bvm], axis=0)).reshape(Bm, Sm, 3 * H)
    qm, km, vm = jnp.split(qkv_m, 3, axis=-1)

    # --- paired_attention(label='prot') : weights only when vis ---
    if vis:
        o, op, w_prot, w_guided = paired_attention_core(
            q, k, v, qm, num_heads, emit_weights=True)
    else:
        o, op = paired_attention_core(q, k, v, qm, num_heads, emit_weights=False)
        w_prot = w_guided = None
    cat = jnp.concatenate([o, op], axis=-1).reshape(B * S, 2 * H)
    attn_prot = fused_fc_out(cat, *params["fc"], *params["out"]).reshape(B, S, H)

    # --- paired_attention(label='mol') : never needs weights ---
    om, omp = paired_attention_core(qm, km, vm, q, num_heads, emit_weights=False)
    catm = jnp.concatenate([om, omp], axis=-1).reshape(Bm * Sm, 2 * H)
    attn_mol = fused_fc_out(catm, *params["fc_mol"], *params["out_mol"]).reshape(Bm, Sm, H)

    return attn_prot, attn_mol, w_prot, w_guided


# ----------------------------- pure-JAX reference -----------------------------

def _transpose_for_scores(x, nh, hs):
    B, S, H = x.shape
    return x.reshape(B, S, nh, hs).transpose(0, 2, 1, 3)


def _merge_heads(x):
    B, nh, S, hs = x.shape
    return x.transpose(0, 2, 1, 3).reshape(B, S, nh * hs)


def _ref_paired(q, k, v, qp, hs):
    s = jnp.einsum("bhqd,bhkd->bhqk", q, k) / math.sqrt(hs)
    p = jax.nn.softmax(s, axis=-1)
    o = jnp.einsum("bhqk,bhkd->bhqd", p, v)
    sp = jnp.einsum("bhqd,bhkd->bhqk", qp, k) / math.sqrt(hs)
    pp = jax.nn.softmax(sp, axis=-1)
    op = jnp.einsum("bhqk,bhkd->bhqd", pp, v)
    return o, op, p, pp


def ref_forward(params, x, mol, num_heads):
    B, S, H = x.shape
    hs = H // num_heads
    lin = lambda t, n: t @ params[n][0] + params[n][1]
    q_l = _transpose_for_scores(lin(x, "query"), num_heads, hs)
    k_l = _transpose_for_scores(lin(x, "key"), num_heads, hs)
    v_l = _transpose_for_scores(lin(x, "value"), num_heads, hs)
    qm_l = _transpose_for_scores(lin(mol, "query_mol"), num_heads, hs)
    km_l = _transpose_for_scores(lin(mol, "key_mol"), num_heads, hs)
    vm_l = _transpose_for_scores(lin(mol, "value_mol"), num_heads, hs)

    o, op, w, wg = _ref_paired(q_l, k_l, v_l, qm_l, hs)
    cat = jnp.concatenate([_merge_heads(o), _merge_heads(op)], axis=-1)
    attn_prot = (cat @ params["fc"][0] + params["fc"][1]) @ params["out"][0] + params["out"][1]

    om, omp, _, _ = _ref_paired(qm_l, km_l, vm_l, q_l, hs)
    catm = jnp.concatenate([_merge_heads(om), _merge_heads(omp)], axis=-1)
    attn_mol = (catm @ params["fc_mol"][0] + params["fc_mol"][1]) @ params["out_mol"][0] + params["out_mol"][1]
    return attn_prot, attn_mol, w, wg


# ----------------------------- main -----------------------------

if __name__ == "__main__":
    B, S, H, NH = 2, 8, 32, 4   # batch, seq (prot == mol seq, required by torch cat), hidden, heads
    key = jax.random.PRNGKey(0)
    kp, kx, km = jax.random.split(key, 3)
    params = init_params(kp, H)
    hidden_states = jax.random.normal(kx, (B, S, H), jnp.float32)
    mol = jax.random.normal(km, (B, S, H), jnp.float32)

    fwd = jax.jit(functools.partial(attention_forward, num_heads=NH, vis=True))
    attn_prot, attn_mol, weights, guided_weights = fwd(params, hidden_states, mol)
    jax.block_until_ready((attn_prot, attn_mol, weights, guided_weights))

    # correctness check against pure-JAX reference
    r_prot, r_mol, r_w, r_wg = ref_forward(params, hidden_states, mol, NH)
    assert jnp.allclose(attn_prot, r_prot, atol=2e-3, rtol=2e-3), "attn_prot mismatch"
    assert jnp.allclose(attn_mol, r_mol, atol=2e-3, rtol=2e-3), "attn_mol mismatch"
    assert jnp.allclose(weights, r_w, atol=2e-3, rtol=2e-3), "weights mismatch"
    assert jnp.allclose(guided_weights, r_wg, atol=2e-3, rtol=2e-3), "guided_weights mismatch"

    print("KERNEL_OK")
</pallas_src>

<mosaic_0001>
module attributes {stable_mosaic.version = 11 : i64} {
  func.func @_linear_kernel(%arg0: i32, %arg1: i32, %arg2: i32, %arg3: memref<16x32xf32, #tpu.memory_space<vmem>>, %arg4: memref<32x96xf32, #tpu.memory_space<vmem>>, %arg5: memref<1x96xf32, #tpu.memory_space<vmem>>, %arg6: memref<16x96xf32, #tpu.memory_space<vmem>>, %arg7: memref<16x96xf32, #tpu.memory_space<vmem>>) attributes {dimension_semantics = [#tpu.dimension_semantics<parallel>, #tpu.dimension_semantics<parallel>, #tpu.dimension_semantics<arbitrary>], iteration_bounds = array<i64: 1, 1, 1>, scalar_prefetch = 0 : i64, scratch_operands = 1 : i64, tpu.core_type = #tpu.core_type<tc>, window_params = [{transform_indices = @transform_0, window_bounds = array<i64: 16, 32>}, {transform_indices = @transform_1, window_bounds = array<i64: 32, 96>}, {transform_indices = @transform_2, window_bounds = array<i64: 1, 96>}, {transform_indices = @transform_3, window_bounds = array<i64: 16, 96>}]} {
    %c0_i32 = arith.constant 0 : i32
    %0 = arith.cmpi eq, %arg2, %c0_i32 : i32
    %1 = arith.extui %0 : i1 to i32
    %c0_i32_0 = arith.constant 0 : i32
    %2 = arith.cmpi ne, %1, %c0_i32_0 : i32
    scf.if %2 {
      %cst_10 = arith.constant 0.000000e+00 : f32
      %12 = vector.broadcast %cst_10 : f32 to vector<16x96xf32>
      %c0_11 = arith.constant 0 : index
      %c0_12 = arith.constant 0 : index
      %13 = vector.load %arg7[%c0_11, %c0_12] : memref<16x96xf32, #tpu.memory_space<vmem>>, vector<16x96xf32>
      tpu.vector_store %arg7[%c0_11, %c0_12], %12 {strides = array<i32>} : memref<16x96xf32, #tpu.memory_space<vmem>>, vector<16x96xf32>,
    } else {
    }
    %c0 = arith.constant 0 : index
    %c0_1 = arith.constant 0 : index
    %3 = vector.load %arg7[%c0, %c0_1] : memref<16x96xf32, #tpu.memory_space<vmem>>, vector<16x96xf32>
    %c0_2 = arith.constant 0 : index
    %c0_3 = arith.constant 0 : index
    %4 = vector.load %arg3[%c0_2, %c0_3] : memref<16x32xf32, #tpu.memory_space<vmem>>, vector<16x32xf32>
    %c0_4 = arith.constant 0 : index
    %c0_5 = arith.constant 0 : index
    %5 = vector.load %arg4[%c0_4, %c0_5] : memref<32x96xf32, #tpu.memory_space<vmem>>, vector<32x96xf32>
    %cst = arith.constant dense<0.000000e+00> : vector<16x96xf32>
    %6 = tpu.matmul %4, %5, %cst {dimension_numbers = #tpu.dot_dimension_numbers<[1], [0], [0], [1], [0, 0, 1, 1], [], []>} : vector<16x32xf32>, vector<32x96xf32>, vector<16x96xf32> -> vector<16x96xf32>
    %7 = arith.addf %3, %6 : vector<16x96xf32>
    %c0_6 = arith.constant 0 : index
    %c0_7 = arith.constant 0 : index
    %8 = vector.load %arg7[%c0_6, %c0_7] : memref<16x96xf32, #tpu.memory_space<vmem>>, vector<16x96xf32>
    tpu.vector_store %arg7[%c0_6, %c0_7], %7 {strides = array<i32>} : memref<16x96xf32, #tpu.memory_space<vmem>>, vector<16x96xf32>,
    %c0_i32_8 = arith.constant 0 : i32
    %9 = arith.cmpi eq, %arg2, %c0_i32_8 : i32
    %10 = arith.extui %9 : i1 to i32
    %c0_i32_9 = arith.constant 0 : i32
    %11 = arith.cmpi ne, %10, %c0_i32_9 : i32
    scf.if %11 {
      %c0_10 = arith.constant 0 : index
      %c0_11 = arith.constant 0 : index
      %12 = vector.load %arg7[%c0_10, %c0_11] : memref<16x96xf32, #tpu.memory_space<vmem>>, vector<16x96xf32>
      %c0_12 = arith.constant 0 : index
      %c0_13 = arith.constant 0 : index
      %13 = vector.load %arg5[%c0_12, %c0_13] : memref<1x96xf32, #tpu.memory_space<vmem>>, vector<1x96xf32>
      %14 = vector.broadcast %13 : vector<1x96xf32> to vector<16x96xf32>
      %15 = arith.addf %12, %14 : vector<16x96xf32>
      %c0_14 = arith.constant 0 : index
      %c0_15 = arith.constant 0 : index
      %16 = vector.load %arg6[%c0_14, %c0_15] : memref<16x96xf32, #tpu.memory_space<vmem>>, vector<16x96xf32>
      tpu.vector_store %arg6[%c0_14, %c0_15], %15 {strides = array<i32>} : memref<16x96xf32, #tpu.memory_space<vmem>>, vector<16x96xf32>,
    } else {
    }
    return
  }
  func.func @transform_0(%arg0: i32, %arg1: i32, %arg2: i32) -> (i32, i32) {
    %c0_i32 = arith.constant 0 : i32
    return %arg0, %arg2 : i32, i32
  }
  func.func @transform_1(%arg0: i32, %arg1: i32, %arg2: i32) -> (i32, i32) {
    %c0_i32 = arith.constant 0 : i32
    return %arg2, %arg1 : i32, i32
  }
  func.func @transform_2(%arg0: i32, %arg1: i32, %arg2: i32) -> (i32, i32) {
    %c0_i32 = arith.constant 0 : i32
    %c0_i32_0 = arith.constant 0 : i32
    return %c0_i32, %arg1 : i32, i32
  }
  func.func @transform_3(%arg0: i32, %arg1: i32, %arg2: i32) -> (i32, i32) {
    %c0_i32 = arith.constant 0 : i32
    return %arg0, %arg1 : i32, i32
  }
}

module attributes {stable_mosaic.version = 11 : i64} {
  func.func @_paired_attn_w_kernel(%arg0: i32, %arg1: memref<1x8x32xf32, #tpu.memory_space<vmem>>, %arg2: memref<1x8x32xf32, #tpu.memory_space<vmem>>, %arg3: memref<1x8x32xf32, #tpu.memory_space<vmem>>, %arg4: memref<1x8x32xf32, #tpu.memory_space<vmem>>, %arg5: memref<1x8x32xf32, #tpu.memory_space<vmem>>, %arg6: memref<1x8x32xf32, #tpu.memory_space<vmem>>, %arg7: memref<1x4x8x8xf32, #tpu.memory_space<vmem>>, %arg8: memref<1x4x8x8xf32, #tpu.memory_space<vmem>>) attributes {dimension_semantics = [#tpu.dimension_semantics<parallel>], iteration_bounds = array<i64: 2>, scalar_prefetch = 0 : i64, scratch_operands = 0 : i64, tpu.core_type = #tpu.core_type<tc>, window_params = [{transform_indices = @transform_0, window_bounds = array<i64: 1, 8, 32>}, {transform_indices = @transform_1, window_bounds = array<i64: 1, 8, 32>}, {transform_indices = @transform_2, window_bounds = array<i64: 1, 8, 32>}, {transform_indices = @transform_3, window_bounds = array<i64: 1, 8, 32>}, {transform_indices = @transform_4, window_bounds = array<i64: 1, 8, 32>}, {transform_indices = @transform_5, window_bounds = array<i64: 1, 8, 32>}, {transform_indices = @transform_6, window_bounds = array<i64: 1, 4, 8, 8>}, {transform_indices = @transform_7, window_bounds = array<i64: 1, 4, 8, 8>}]} {
    %c0 = arith.constant 0 : index
    %c0_0 = arith.constant 0 : index
    %c0_1 = arith.constant 0 : index
    %0 = vector.load %arg1[%c0, %c0_0, %c0_1] : memref<1x8x32xf32, #tpu.memory_space<vmem>>, vector<1x8x32xf32>
    %1 = vector.shape_cast %0 : vector<1x8x32xf32> to vector<8x32xf32>
    %c0_2 = arith.constant 0 : index
    %c0_3 = arith.constant 0 : index
    %c0_4 = arith.constant 0 : index
    %2 = vector.load %arg2[%c0_2, %c0_3, %c0_4] : memref<1x8x32xf32, #tpu.memory_space<vmem>>, vector<1x8x32xf32>
    %3 = vector.shape_cast %2 : vector<1x8x32xf32> to vector<8x32xf32>
    %c0_5 = arith.constant 0 : index
    %c0_6 = arith.constant 0 : index
    %c0_7 = arith.constant 0 : index
    %4 = vector.load %arg3[%c0_5, %c0_6, %c0_7] : memref<1x8x32xf32, #tpu.memory_space<vmem>>, vector<1x8x32xf32>
    %5 = vector.shape_cast %4 : vector<1x8x32xf32> to vector<8x32xf32>
    %c0_8 = arith.constant 0 : index
    %c0_9 = arith.constant 0 : index
    %c0_10 = arith.constant 0 : index
    %6 = vector.load %arg4[%c0_8, %c0_9, %c0_10] : memref<1x8x32xf32, #tpu.memory_space<vmem>>, vector<1x8x32xf32>
    %7 = vector.shape_cast %6 : vector<1x8x32xf32> to vector<8x32xf32>
    %8 = vector.extract_strided_slice %1 {offsets = [0, 0], sizes = [8, 8], strides = [1, 1]} : vector<8x32xf32> to vector<8x8xf32>
    %9 = vector.extract_strided_slice %3 {offsets = [0, 0], sizes = [8, 8], strides = [1, 1]} : vector<8x32xf32> to vector<8x8xf32>
    %10 = vector.extract_strided_slice %5 {offsets = [0, 0], sizes = [8, 8], strides = [1, 1]} : vector<8x32xf32> to vector<8x8xf32>
    %11 = vector.extract_strided_slice %7 {offsets = [0, 0], sizes = [8, 8], strides = [1, 1]} : vector<8x32xf32> to vector<8x8xf32>
    %12 = tpu.concatenate %8, %11 in 0 : vector<8x8xf32>, vector<8x8xf32> -> vector<16x8xf32>
    %cst = arith.constant dense<0.000000e+00> : vector<16x8xf32>
    %13 = tpu.matmul %12, %9, %cst {dimension_numbers = #tpu.dot_dimension_numbers<[1], [1], [0], [0], [0, 0, 1, 0], [], []>} : vector<16x8xf32>, vector<8x8xf32>, vector<16x8xf32> -> vector<16x8xf32>
    %cst_11 = arith.constant 0.353553385 : f32
    %14 = vector.broadcast %cst_11 : f32 to vector<16x8xf32>
    %15 = arith.mulf %13, %14 : vector<16x8xf32>
    %cst_12 = arith.constant dense<0xFF800000> : vector<16xf32>
    %16 = vector.multi_reduction <maximumf>, %15, %cst_12 [1] : vector<16x8xf32> to vector<16xf32>
    %17 = vector.shape_cast %16 : vector<16xf32> to vector<16x1xf32>
    %18 = vector.broadcast %17 : vector<16x1xf32> to vector<16x8xf32>
    %19 = arith.subf %15, %18 : vector<16x8xf32>
    %20 = math.exp %19 : vector<16x8xf32>
    %cst_13 = arith.constant dense<0.000000e+00> : vector<16xf32>
    %21 = vector.multi_reduction <add>, %20, %cst_13 [1] : vector<16x8xf32> to vector<16xf32>
    %22 = vector.shape_cast %21 : vector<16xf32> to vector<16x1xf32>
    %23 = tpu.reciprocal %22 {approx = true} : vector<16x1xf32> -> vector<16x1xf32>
    %24 = vector.broadcast %23 : vector<16x1xf32> to vector<16x8xf32>
    %25 = arith.mulf %20, %24 : vector<16x8xf32>
    %cst_14 = arith.constant dense<0.000000e+00> : vector<16x8xf32>
    %26 = tpu.matmul %25, %10, %cst_14 {dimension_numbers = #tpu.dot_dimension_numbers<[1], [0], [0], [1], [0, 0, 1, 1], [], []>} : vector<16x8xf32>, vector<8x8xf32>, vector<16x8xf32> -> vector<16x8xf32>
    %27 = vector.extract_strided_slice %26 {offsets = [0, 0], sizes = [8, 8], strides = [1, 1]} : vector<16x8xf32> to vector<8x8xf32>
    %28 = vector.extract_strided_slice %26 {offsets = [8, 0], sizes = [8, 8], strides = [1, 1]} : vector<16x8xf32> to vector<8x8xf32>
    %29 = vector.extract_strided_slice %25 {offsets = [0, 0], sizes = [8, 8], strides = [1, 1]} : vector<16x8xf32> to vector<8x8xf32>
    %30 = vector.extract_strided_slice %25 {offsets = [8, 0], sizes = [8, 8], strides = [1, 1]} : vector<16x8xf32> to vector<8x8xf32>
    %31 = vector.extract_strided_slice %1 {offsets = [0, 8], sizes = [8, 8], strides = [1, 1]} : vector<8x32xf32> to vector<8x8xf32>
    %32 = vector.extract_strided_slice %3 {offsets = [0, 8], sizes = [8, 8], strides = [1, 1]} : vector<8x32xf32> to vector<8x8xf32>
    %33 = vector.extract_strided_slice %5 {offsets = [0, 8], sizes = [8, 8], strides = [1, 1]} : vector<8x32xf32> to vector<8x8xf32>
    %34 = vector.extract_strided_slice %7 {offsets = [0, 8], sizes = [8, 8], strides = [1, 1]} : vector<8x32xf32> to vector<8x8xf32>
    %35 = tpu.concatenate %31, %34 in 0 : vector<8x8xf32>, vector<8x8xf32> -> vector<16x8xf32>
    %cst_15 = arith.constant dense<0.000000e+00> : vector<16x8xf32>
    %36 = tpu.matmul %35, %32, %cst_15 {dimension_numbers = #tpu.dot_dimension_numbers<[1], [1], [0], [0], [0, 0, 1, 0], [], []>} : vector<16x8xf32>, vector<8x8xf32>, vector<16x8xf32> -> vector<16x8xf32>
    %cst_16 = arith.constant 0.353553385 : f32
    %37 = vector.broadcast %cst_16 : f32 to vector<16x8xf32>
    %38 = arith.mulf %36, %37 : vector<16x8xf32>
    %cst_17 = arith.constant dense<0xFF800000> : vector<16xf32>
    %39 = vector.multi_reduction <maximumf>, %38, %cst_17 [1] : vector<16x8xf32> to vector<16xf32>
    %40 = vector.shape_cast %39 : vector<16xf32> to vector<16x1xf32>
    %41 = vector.broadcast %40 : vector<16x1xf32> to vector<16x8xf32>
    %42 = arith.subf %38, %41 : vector<16x8xf32>
    %43 = math.exp %42 : vector<16x8xf32>
    %cst_18 = arith.constant dense<0.000000e+00> : vector<16xf32>
    %44 = vector.multi_reduction <add>, %43, %cst_18 [1] : vector<16x8xf32> to vector<16xf32>
    %45 = vector.shape_cast %44 : vector<16xf32> to vector<16x1xf32>
    %46 = tpu.reciprocal %45 {approx = true} : vector<16x1xf32> -> vector<16x1xf32>
    %47 = vector.broadcast %46 : vector<16x1xf32> to vector<16x8xf32>
    %48 = arith.mulf %43, %47 : vector<16x8xf32>
    %cst_19 = arith.constant dense<0.000000e+00> : vector<16x8xf32>
    %49 = tpu.matmul %48, %33, %cst_19 {dimension_numbers = #tpu.dot_dimension_numbers<[1], [0], [0], [1], [0, 0, 1, 1], [], []>} : vector<16x8xf32>, vector<8x8xf32>, vector<16x8xf32> -> vector<16x8xf32>
    %50 = vector.extract_strided_slice %49 {offsets = [0, 0], sizes = [8, 8], strides = [1, 1]} : vector<16x8xf32> to vector<8x8xf32>
    %51 = vector.extract_strided_slice %49 {offsets = [8, 0], sizes = [8, 8], strides = [1, 1]} : vector<16x8xf32> to vector<8x8xf32>
    %52 = vector.extract_strided_slice %48 {offsets = [0, 0], sizes = [8, 8], strides = [1, 1]} : vector<16x8xf32> to vector<8x8xf32>
    %53 = vector.extract_strided_slice %48 {offsets = [8, 0], sizes = [8, 8], strides = [1, 1]} : vector<16x8xf32> to vector<8x8xf32>
    %54 = vector.extract_strided_slice %1 {offsets = [0, 16], sizes = [8, 8], strides = [1, 1]} : vector<8x32xf32> to vector<8x8xf32>
    %55 = vector.extract_strided_slice %3 {offsets = [0, 16], sizes = [8, 8], strides = [1, 1]} : vector<8x32xf32> to vector<8x8xf32>
    %56 = vector.extract_strided_slice %5 {offsets = [0, 16], sizes = [8, 8], strides = [1, 1]} : vector<8x32xf32> to vector<8x8xf32>
    %57 = vector.extract_strided_slice %7 {offsets = [0, 16], sizes = [8, 8], strides = [1, 1]} : vector<8x32xf32> to vector<8x8xf32>
    %58 = tpu.concatenate %54, %57 in 0 : vector<8x8xf32>, vector<8x8xf32> -> vector<16x8xf32>
    %cst_20 = arith.constant dense<0.000000e+00> : vector<16x8xf32>
    %59 = tpu.matmul %58, %55, %cst_20 {dimension_numbers = #tpu.dot_dimension_numbers<[1], [1], [0], [0], [0, 0, 1, 0], [], []>} : vector<16x8xf32>, vector<8x8xf32>, vector<16x8xf32> -> vector<16x8xf32>
    %cst_21 = arith.constant 0.353553385 : f32
    %60 = vector.broadcast %cst_21 : f32 to vector<16x8xf32>
    %61 = arith.mulf %59, %60 : vector<16x8xf32>
    %cst_22 = arith.constant dense<0xFF800000> : vector<16xf32>
    %62 = vector.multi_reduction <maximumf>, %61, %cst_22 [1] : vector<16x8xf32> to vector<16xf32>
    %63 = vector.shape_cast %62 : vector<16xf32> to vector<16x1xf32>
    %64 = vector.broadcast %63 : vector<16x1xf32> to vector<16x8xf32>
    %65 = arith.subf %61, %64 : vector<16x8xf32>
    %66 = math.exp %65 : vector<16x8xf32>
    %cst_23 = arith.constant dense<0.000000e+00> : vector<16xf32>
    %67 = vector.multi_reduction <add>, %66, %cst_23 [1] : vector<16x8xf32> to vector<16xf32>
    %68 = vector.shape_cast %67 : vector<16xf32> to vector<16x1xf32>
    %69 = tpu.reciprocal %68 {approx = true} : vector<16x1xf32> -> vector<16x1xf32>
    %70 = vector.broadcast %69 : vector<16x1xf32> to vector<16x8xf32>
    %71 = arith.mulf %66, %70 : vector<16x8xf32>
    %cst_24 = arith.constant dense<0.000000e+00> : vector<16x8xf32>
    %72 = tpu.matmul %71, %56, %cst_24 {dimension_numbers = #tpu.dot_dimension_numbers<[1], [0], [0], [1], [0, 0, 1, 1], [], []>} : vector<16x8xf32>, vector<8x8xf32>, vector<16x8xf32> -> vector<16x8xf32>
    %73 = vector.extract_strided_slice %72 {offsets = [0, 0], sizes = [8, 8], strides = [1, 1]} : vector<16x8xf32> to vector<8x8xf32>
    %74 = vector.extract_strided_slice %72 {offsets = [8, 0], sizes = [8, 8], strides = [1, 1]} : vector<16x8xf32> to vector<8x8xf32>
    %75 = vector.extract_strided_slice %71 {offsets = [0, 0], sizes = [8, 8], strides = [1, 1]} : vector<16x8xf32> to vector<8x8xf32>
    %76 = vector.extract_strided_slice %71 {offsets = [8, 0], sizes = [8, 8], strides = [1, 1]} : vector<16x8xf32> to vector<8x8xf32>
    %77 = vector.extract_strided_slice %1 {offsets = [0, 24], sizes = [8, 8], strides = [1, 1]} : vector<8x32xf32> to vector<8x8xf32>
    %78 = vector.extract_strided_slice %3 {offsets = [0, 24], sizes = [8, 8], strides = [1, 1]} : vector<8x32xf32> to vector<8x8xf32>
    %79 = vector.extract_strided_slice %5 {offsets = [0, 24], sizes = [8, 8], strides = [1, 1]} : vector<8x32xf32> to vector<8x8xf32>
    %80 = vector.extract_strided_slice %7 {offsets = [0, 24], sizes = [8, 8], strides = [1, 1]} : vector<8x32xf32> to vector<8x8xf32>
    %81 = tpu.concatenate %77, %80 in 0 : vector<8x8xf32>, vector<8x8xf32> -> vector<16x8xf32>
    %cst_25 = arith.constant dense<0.000000e+00> : vector<16x8xf32>
    %82 = tpu.matmul %81, %78, %cst_25 {dimension_numbers = #tpu.dot_dimension_numbers<[1], [1], [0], [0], [0, 0, 1, 0], [], []>} : vector<16x8xf32>, vector<8x8xf32>, vector<16x8xf32> -> vector<16x8xf32>
    %cst_26 = arith.constant 0.353553385 : f32
    %83 = vector.broadcast %cst_26 : f32 to vector<16x8xf32>
    %84 = arith.mulf %82, %83 : vector<16x8xf32>
    %cst_27 = arith.constant dense<0xFF800000> : vector<16xf32>
    %85 = vector.multi_reduction <maximumf>, %84, %cst_27 [1] : vector<16x8xf32> to vector<16xf32>
    %86 = vector.shape_cast %85 : vector<16xf32> to vector<16x1xf32>
    %87 = vector.broadcast %86 : vector<16x1xf32> to vector<16x8xf32>
    %88 = arith.subf %84, %87 : vector<16x8xf32>
    %89 = math.exp %88 : vector<16x8xf32>
    %cst_28 = arith.constant dense<0.000000e+00> : vector<16xf32>
    %90 = vector.multi_reduction <add>, %89, %cst_28 [1] : vector<16x8xf32> to vector<16xf32>
    %91 = vector.shape_cast %90 : vector<16xf32> to vector<16x1xf32>
    %92 = tpu.reciprocal %91 {approx = true} : vector<16x1xf32> -> vector<16x1xf32>
    %93 = vector.broadcast %92 : vector<16x1xf32> to vector<16x8xf32>
    %94 = arith.mulf %89, %93 : vector<16x8xf32>
    %cst_29 = arith.constant dense<0.000000e+00> : vector<16x8xf32>
    %95 = tpu.matmul %94, %79, %cst_29 {dimension_numbers = #tpu.dot_dimension_numbers<[1], [0], [0], [1], [0, 0, 1, 1], [], []>} : vector<16x8xf32>, vector<8x8xf32>, vector<16x8xf32> -> vector<16x8xf32>
    %96 = vector.extract_strided_slice %95 {offsets = [0, 0], sizes = [8, 8], strides = [1, 1]} : vector<16x8xf32> to vector<8x8xf32>
    %97 = vector.extract_strided_slice %95 {offsets = [8, 0], sizes = [8, 8], strides = [1, 1]} : vector<16x8xf32> to vector<8x8xf32>
    %98 = vector.extract_strided_slice %94 {offsets = [0, 0], sizes = [8, 8], strides = [1, 1]} : vector<16x8xf32> to vector<8x8xf32>
    %99 = vector.extract_strided_slice %94 {offsets = [8, 0], sizes = [8, 8], strides = [1, 1]} : vector<16x8xf32> to vector<8x8xf32>
    %100 = tpu.concatenate %27, %50, %73, %96 in 1 : vector<8x8xf32>, vector<8x8xf32>, vector<8x8xf32>, vector<8x8xf32> -> vector<8x32xf32>
    %101 = tpu.concatenate %28, %51, %74, %97 in 1 : vector<8x8xf32>, vector<8x8xf32>, vector<8x8xf32>, vector<8x8xf32> -> vector<8x32xf32>
    %c0_30 = arith.constant 0 : index
    %c0_31 = arith.constant 0 : index
    %c0_32 = arith.constant 0 : index
    %102 = vector.load %arg5[%c0_30, %c0_31, %c0_32] : memref<1x8x32xf32, #tpu.memory_space<vmem>>, vector<1x8x32xf32>
    %103 = vector.shape_cast %102 : vector<1x8x32xf32> to vector<8x32xf32>
    %104 = vector.shape_cast %100 : vector<8x32xf32> to vector<1x8x32xf32>
    tpu.vector_store %arg5[%c0_30, %c0_31, %c0_32], %104 {strides = array<i32>} : memref<1x8x32xf32, #tpu.memory_space<vmem>>, vector<1x8x32xf32>,
    %c0_33 = arith.constant 0 : index
    %c0_34 = arith.constant 0 : index
    %c0_35 = arith.constant 0 : index
    %105 = vector.load %arg6[%c0_33, %c0_34, %c0_35] : memref<1x8x32xf32, #tpu.memory_space<vmem>>, vector<1x8x32xf32>
    %106 = vector.shape_cast %105 : vector<1x8x32xf32> to vector<8x32xf32>
    %107 = vector.shape_cast %101 : vector<8x32xf32> to vector<1x8x32xf32>
    tpu.vector_store %arg6[%c0_33, %c0_34, %c0_35], %107 {strides = array<i32>} : memref<1x8x32xf32, #tpu.memory_space<vmem>>, vector<1x8x32xf32>,
    %c0_36 = arith.constant 0 : index
    %c0_37 = arith.constant 0 : index
    %c0_38 = arith.constant 0 : index
    %c0_39 = arith.constant 0 : index
    %108 = vector.load %arg7[%c0_36, %c0_37, %c0_38, %c0_39] : memref<1x4x8x8xf32, #tpu.memory_space<vmem>>, vector<1x1x8x8xf32>
    %109 = vector.shape_cast %108 : vector<1x1x8x8xf32> to vector<8x8xf32>
    %110 = vector.shape_cast %29 : vector<8x8xf32> to vector<1x1x8x8xf32>
    tpu.vector_store %arg7[%c0_36, %c0_37, %c0_38, %c0_39], %110 {strides = array<i32>} : memref<1x4x8x8xf32, #tpu.memory_space<vmem>>, vector<1x1x8x8xf32>,
    %c0_40 = arith.constant 0 : index
    %c0_41 = arith.constant 0 : index
    %c0_42 = arith.constant 0 : index
    %c0_43 = arith.constant 0 : index
    %111 = vector.load %arg8[%c0_40, %c0_41, %c0_42, %c0_43] : memref<1x4x8x8xf32, #tpu.memory_space<vmem>>, vector<1x1x8x8xf32>
    %112 = vector.shape_cast %111 : vector<1x1x8x8xf32> to vector<8x8xf32>
    %113 = vector.shape_cast %30 : vector<8x8xf32> to vector<1x1x8x8xf32>
    tpu.vector_store %arg8[%c0_40, %c0_41, %c0_42, %c0_43], %113 {strides = array<i32>} : memref<1x4x8x8xf32, #tpu.memory_space<vmem>>, vector<1x1x8x8xf32>,
    %c0_44 = arith.constant 0 : index
    %c1 = arith.constant 1 : index
    %c0_45 = arith.constant 0 : index
    %c0_46 = arith.constant 0 : index
    %114 = vector.load %arg7[%c0_44, %c1, %c0_45, %c0_46] : memref<1x4x8x8xf32, #tpu.memory_space<vmem>>, vector<1x1x8x8xf32>
    %115 = vector.shape_cast %114 : vector<1x1x8x8xf32> to vector<8x8xf32>
    %116 = vector.shape_cast %52 : vector<8x8xf32> to vector<1x1x8x8xf32>
    tpu.vector_store %arg7[%c0_44, %c1, %c0_45, %c0_46], %116 {strides = array<i32>} : memref<1x4x8x8xf32, #tpu.memory_space<vmem>>, vector<1x1x8x8xf32>,
    %c0_47 = arith.constant 0 : index
    %c1_48 = arith.constant 1 : index
    %c0_49 = arith.constant 0 : index
    %c0_50 = arith.constant 0 : index
    %117 = vector.load %arg8[%c0_47, %c1_48, %c0_49, %c0_50] : memref<1x4x8x8xf32, #tpu.memory_space<vmem>>, vector<1x1x8x8xf32>
    %118 = vector.shape_cast %117 : vector<1x1x8x8xf32> to vector<8x8xf32>
    %119 = vector.shape_cast %53 : vector<8x8xf32> to vector<1x1x8x8xf32>
    tpu.vector_store %arg8[%c0_47, %c1_48, %c0_49, %c0_50], %119 {strides = array<i32>} : memref<1x4x8x8xf32, #tpu.memory_space<vmem>>, vector<1x1x8x8xf32>,
    %c0_51 = arith.constant 0 : index
    %c2 = arith.constant 2 : index
    %c0_52 = arith.constant 0 : index
    %c0_53 = arith.constant 0 : index
    %120 = vector.load %arg7[%c0_51, %c2, %c0_52, %c0_53] : memref<1x4x8x8xf32, #tpu.memory_space<vmem>>, vector<1x1x8x8xf32>
    %121 = vector.shape_cast %120 : vector<1x1x8x8xf32> to vector<8x8xf32>
    %122 = vector.shape_cast %75 : vector<8x8xf32> to vector<1x1x8x8xf32>
    tpu.vector_store %arg7[%c0_51, %c2, %c0_52, %c0_53], %122 {strides = array<i32>} : memref<1x4x8x8xf32, #tpu.memory_space<vmem>>, vector<1x1x8x8xf32>,
    %c0_54 = arith.constant 0 : index
    %c2_55 = arith.constant 2 : index
    %c0_56 = arith.constant 0 : index
    %c0_57 = arith.constant 0 : index
    %123 = vector.load %arg8[%c0_54, %c2_55, %c0_56, %c0_57] : memref<1x4x8x8xf32, #tpu.memory_space<vmem>>, vector<1x1x8x8xf32>
    %124 = vector.shape_cast %123 : vector<1x1x8x8xf32> to vector<8x8xf32>
    %125 = vector.shape_cast %76 : vector<8x8xf32> to vector<1x1x8x8xf32>
    tpu.vector_store %arg8[%c0_54, %c2_55, %c0_56, %c0_57], %125 {strides = array<i32>} : memref<1x4x8x8xf32, #tpu.memory_space<vmem>>, vector<1x1x8x8xf32>,
    %c0_58 = arith.constant 0 : index
    %c3 = arith.constant 3 : index
    %c0_59 = arith.constant 0 : index
    %c0_60 = arith.constant 0 : index
    %126 = vector.load %arg7[%c0_58, %c3, %c0_59, %c0_60] : memref<1x4x8x8xf32, #tpu.memory_space<vmem>>, vector<1x1x8x8xf32>
    %127 = vector.shape_cast %126 : vector<1x1x8x8xf32> to vector<8x8xf32>
    %128 = vector.shape_cast %98 : vector<8x8xf32> to vector<1x1x8x8xf32>
    tpu.vector_store %arg7[%c0_58, %c3, %c0_59, %c0_60], %128 {strides = array<i32>} : memref<1x4x8x8xf32, #tpu.memory_space<vmem>>, vector<1x1x8x8xf32>,
    %c0_61 = arith.constant 0 : index
    %c3_62 = arith.constant 3 : index
    %c0_63 = arith.constant 0 : index
    %c0_64 = arith.constant 0 : index
    %129 = vector.load %arg8[%c0_61, %c3_62, %c0_63, %c0_64] : memref<1x4x8x8xf32, #tpu.memory_space<vmem>>, vector<1x1x8x8xf32>
    %130 = vector.shape_cast %129 : vector<1x1x8x8xf32> to vector<8x8xf32>
    %131 = vector.shape_cast %99 : vector<8x8xf32> to vector<1x1x8x8xf32>
    tpu.vector_store %arg8[%c0_61, %c3_62, %c0_63, %c0_64], %131 {strides = array<i32>} : memref<1x4x8x8xf32, #tpu.memory_space<vmem>>, vector<1x1x8x8xf32>,
    return
  }
  func.func @transform_0(%arg0: i32) -> (i32, i32, i32) {
    %c0_i32 = arith.constant 0 : i32
    %c0_i32_0 = arith.constant 0 : i32
    %c0_i32_1 = arith.constant 0 : i32
    return %arg0, %c0_i32, %c0_i32_0 : i32, i32, i32
  }
  func.func @transform_1(%arg0: i32) -> (i32, i32, i32) {
    %c0_i32 = arith.constant 0 : i32
    %c0_i32_0 = arith.constant 0 : i32
    %c0_i32_1 = arith.constant 0 : i32
    return %arg0, %c0_i32, %c0_i32_0 : i32, i32, i32
  }
  func.func @transform_2(%arg0: i32) -> (i32, i32, i32) {
    %c0_i32 = arith.constant 0 : i32
    %c0_i32_0 = arith.constant 0 : i32
    %c0_i32_1 = arith.constant 0 : i32
    return %arg0, %c0_i32, %c0_i32_0 : i32, i32, i32
  }
  func.func @transform_3(%arg0: i32) -> (i32, i32, i32) {
    %c0_i32 = arith.constant 0 : i32
    %c0_i32_0 = arith.constant 0 : i32
    %c0_i32_1 = arith.constant 0 : i32
    return %arg0, %c0_i32, %c0_i32_0 : i32, i32, i32
  }
  func.func @transform_4(%arg0: i32) -> (i32, i32, i32) {
    %c0_i32 = arith.constant 0 : i32
    %c0_i32_0 = arith.constant 0 : i32
    %c0_i32_1 = arith.constant 0 : i32
    return %arg0, %c0_i32, %c0_i32_0 : i32, i32, i32
  }
  func.func @transform_5(%arg0: i32) -> (i32, i32, i32) {
    %c0_i32 = arith.constant 0 : i32
    %c0_i32_0 = arith.constant 0 : i32
    %c0_i32_1 = arith.constant 0 : i32
    return %arg0, %c0_i32, %c0_i32_0 : i32, i32, i32
  }
  func.func @transform_6(%arg0: i32) -> (i32, i32, i32, i32) {
    %c0_i32 = arith.constant 0 : i32
    %c0_i32_0 = arith.constant 0 : i32
    %c0_i32_1 = arith.constant 0 : i32
    %c0_i32_2 = arith.constant 0 : i32
    return %arg0, %c0_i32, %c0_i32_0, %c0_i32_1 : i32, i32, i32, i32
  }
  func.func @transform_7(%arg0: i32) -> (i32, i32, i32, i32) {
    %c0_i32 = arith.constant 0 : i32
    %c0_i32_0 = arith.constant 0 : i32
    %c0_i32_1 = arith.constant 0 : i32
    %c0_i32_2 = arith.constant 0 : i32
    return %arg0, %c0_i32, %c0_i32_0, %c0_i32_1 : i32, i32, i32, i32
  }
}

module attributes {stable_mosaic.version = 11 : i64} {
  func.func @_fc_out_kernel(%arg0: i32, %arg1: memref<16x64xf32, #tpu.memory_space<vmem>>, %arg2: memref<64x32xf32, #tpu.memory_space<vmem>>, %arg3: memref<1x32xf32, #tpu.memory_space<vmem>>, %arg4: memref<32x32xf32, #tpu.memory_space<vmem>>, %arg5: memref<1x32xf32, #tpu.memory_space<vmem>>, %arg6: memref<16x32xf32, #tpu.memory_space<vmem>>) attributes {dimension_semantics = [#tpu.dimension_semantics<parallel>], iteration_bounds = array<i64: 1>, scalar_prefetch = 0 : i64, scratch_operands = 0 : i64, tpu.core_type = #tpu.core_type<tc>, window_params = [{transform_indices = @transform_0, window_bounds = array<i64: 16, 64>}, {pipeline_mode = #tpu.pipeline_mode<synchronous>, transform_indices = @transform_1, window_bounds = array<i64: 64, 32>}, {pipeline_mode = #tpu.pipeline_mode<synchronous>, transform_indices = @transform_2, window_bounds = array<i64: 1, 32>}, {pipeline_mode = #tpu.pipeline_mode<synchronous>, transform_indices = @transform_3, window_bounds = array<i64: 32, 32>}, {pipeline_mode = #tpu.pipeline_mode<synchronous>, transform_indices = @transform_4, window_bounds = array<i64: 1, 32>}, {transform_indices = @transform_5, window_bounds = array<i64: 16, 32>}]} {
    %c0 = arith.constant 0 : index
    %c0_0 = arith.constant 0 : index
    %0 = vector.load %arg1[%c0, %c0_0] : memref<16x64xf32, #tpu.memory_space<vmem>>, vector<16x64xf32>
    %c0_1 = arith.constant 0 : index
    %c0_2 = arith.constant 0 : index
    %1 = vector.load %arg2[%c0_1, %c0_2] : memref<64x32xf32, #tpu.memory_space<vmem>>, vector<64x32xf32>
    %cst = arith.constant dense<0.000000e+00> : vector<16x32xf32>
    %2 = tpu.matmul %0, %1, %cst {dimension_numbers = #tpu.dot_dimension_numbers<[1], [0], [0], [1], [0, 0, 1, 1], [], []>} : vector<16x64xf32>, vector<64x32xf32>, vector<16x32xf32> -> vector<16x32xf32>
    %c0_3 = arith.constant 0 : index
    %c0_4 = arith.constant 0 : index
    %3 = vector.load %arg3[%c0_3, %c0_4] : memref<1x32xf32, #tpu.memory_space<vmem>>, vector<1x32xf32>
    %4 = vector.broadcast %3 : vector<1x32xf32> to vector<16x32xf32>
    %5 = arith.addf %2, %4 : vector<16x32xf32>
    %c0_5 = arith.constant 0 : index
    %c0_6 = arith.constant 0 : index
    %6 = vector.load %arg4[%c0_5, %c0_6] : memref<32x32xf32, #tpu.memory_space<vmem>>, vector<32x32xf32>
    %cst_7 = arith.constant dense<0.000000e+00> : vector<16x32xf32>
    %7 = tpu.matmul %5, %6, %cst_7 {dimension_numbers = #tpu.dot_dimension_numbers<[1], [0], [0], [1], [0, 0, 1, 1], [], []>} : vector<16x32xf32>, vector<32x32xf32>, vector<16x32xf32> -> vector<16x32xf32>
    %c0_8 = arith.constant 0 : index
    %c0_9 = arith.constant 0 : index
    %8 = vector.load %arg5[%c0_8, %c0_9] : memref<1x32xf32, #tpu.memory_space<vmem>>, vector<1x32xf32>
    %9 = vector.broadcast %8 : vector<1x32xf32> to vector<16x32xf32>
    %10 = arith.addf %7, %9 : vector<16x32xf32>
    %c0_10 = arith.constant 0 : index
    %c0_11 = arith.constant 0 : index
    %11 = vector.load %arg6[%c0_10, %c0_11] : memref<16x32xf32, #tpu.memory_space<vmem>>, vector<16x32xf32>
    tpu.vector_store %arg6[%c0_10, %c0_11], %10 {strides = array<i32>} : memref<16x32xf32, #tpu.memory_space<vmem>>, vector<16x32xf32>,
    return
  }
  func.func @transform_0(%arg0: i32) -> (i32, i32) {
    %c0_i32 = arith.constant 0 : i32
    %c0_i32_0 = arith.constant 0 : i32
    return %arg0, %c0_i32 : i32, i32
  }
  func.func @transform_1(%arg0: i32) -> (i32, i32) {
    %c0_i32 = arith.constant 0 : i32
    %c0_i32_0 = arith.constant 0 : i32
    %c0_i32_1 = arith.constant 0 : i32
    return %c0_i32, %c0_i32_0 : i32, i32
  }
  func.func @transform_2(%arg0: i32) -> (i32, i32) {
    %c0_i32 = arith.constant 0 : i32
    %c0_i32_0 = arith.constant 0 : i32
    %c0_i32_1 = arith.constant 0 : i32
    return %c0_i32, %c0_i32_0 : i32, i32
  }
  func.func @transform_3(%arg0: i32) -> (i32, i32) {
    %c0_i32 = arith.constant 0 : i32
    %c0_i32_0 = arith.constant 0 : i32
    %c0_i32_1 = arith.constant 0 : i32
    return %c0_i32, %c0_i32_0 : i32, i32
  }
  func.func @transform_4(%arg0: i32) -> (i32, i32) {
    %c0_i32 = arith.constant 0 : i32
    %c0_i32_0 = arith.constant 0 : i32
    %c0_i32_1 = arith.constant 0 : i32
    return %c0_i32, %c0_i32_0 : i32, i32
  }
  func.func @transform_5(%arg0: i32) -> (i32, i32) {
    %c0_i32 = arith.constant 0 : i32
    %c0_i32_0 = arith.constant 0 : i32
    return %arg0, %c0_i32 : i32, i32
  }
}

module attributes {stable_mosaic.version = 11 : i64} {
  func.func @_paired_attn_kernel(%arg0: i32, %arg1: memref<1x8x32xf32, #tpu.memory_space<vmem>>, %arg2: memref<1x8x32xf32, #tpu.memory_space<vmem>>, %arg3: memref<1x8x32xf32, #tpu.memory_space<vmem>>, %arg4: memref<1x8x32xf32, #tpu.memory_space<vmem>>, %arg5: memref<1x8x32xf32, #tpu.memory_space<vmem>>, %arg6: memref<1x8x32xf32, #tpu.memory_space<vmem>>) attributes {dimension_semantics = [#tpu.dimension_semantics<parallel>], iteration_bounds = array<i64: 2>, scalar_prefetch = 0 : i64, scratch_operands = 0 : i64, tpu.core_type = #tpu.core_type<tc>, window_params = [{transform_indices = @transform_0, window_bounds = array<i64: 1, 8, 32>}, {transform_indices = @transform_1, window_bounds = array<i64: 1, 8, 32>}, {transform_indices = @transform_2, window_bounds = array<i64: 1, 8, 32>}, {transform_indices = @transform_3, window_bounds = array<i64: 1, 8, 32>}, {transform_indices = @transform_4, window_bounds = array<i64: 1, 8, 32>}, {transform_indices = @transform_5, window_bounds = array<i64: 1, 8, 32>}]} {
    %c0 = arith.constant 0 : index
    %c0_0 = arith.constant 0 : index
    %c0_1 = arith.constant 0 : index
    %0 = vector.load %arg1[%c0, %c0_0, %c0_1] : memref<1x8x32xf32, #tpu.memory_space<vmem>>, vector<1x8x32xf32>
    %1 = vector.shape_cast %0 : vector<1x8x32xf32> to vector<8x32xf32>
    %c0_2 = arith.constant 0 : index
    %c0_3 = arith.constant 0 : index
    %c0_4 = arith.constant 0 : index
    %2 = vector.load %arg2[%c0_2, %c0_3, %c0_4] : memref<1x8x32xf32, #tpu.memory_space<vmem>>, vector<1x8x32xf32>
    %3 = vector.shape_cast %2 : vector<1x8x32xf32> to vector<8x32xf32>
    %c0_5 = arith.constant 0 : index
    %c0_6 = arith.constant 0 : index
    %c0_7 = arith.constant 0 : index
    %4 = vector.load %arg3[%c0_5, %c0_6, %c0_7] : memref<1x8x32xf32, #tpu.memory_space<vmem>>, vector<1x8x32xf32>
    %5 = vector.shape_cast %4 : vector<1x8x32xf32> to vector<8x32xf32>
    %c0_8 = arith.constant 0 : index
    %c0_9 = arith.constant 0 : index
    %c0_10 = arith.constant 0 : index
    %6 = vector.load %arg4[%c0_8, %c0_9, %c0_10] : memref<1x8x32xf32, #tpu.memory_space<vmem>>, vector<1x8x32xf32>
    %7 = vector.shape_cast %6 : vector<1x8x32xf32> to vector<8x32xf32>
    %8 = vector.extract_strided_slice %1 {offsets = [0, 0], sizes = [8, 8], strides = [1, 1]} : vector<8x32xf32> to vector<8x8xf32>
    %9 = vector.extract_strided_slice %3 {offsets = [0, 0], sizes = [8, 8], strides = [1, 1]} : vector<8x32xf32> to vector<8x8xf32>
    %10 = vector.extract_strided_slice %5 {offsets = [0, 0], sizes = [8, 8], strides = [1, 1]} : vector<8x32xf32> to vector<8x8xf32>
    %11 = vector.extract_strided_slice %7 {offsets = [0, 0], sizes = [8, 8], strides = [1, 1]} : vector<8x32xf32> to vector<8x8xf32>
    %12 = tpu.concatenate %8, %11 in 0 : vector<8x8xf32>, vector<8x8xf32> -> vector<16x8xf32>
    %cst = arith.constant dense<0.000000e+00> : vector<16x8xf32>
    %13 = tpu.matmul %12, %9, %cst {dimension_numbers = #tpu.dot_dimension_numbers<[1], [1], [0], [0], [0, 0, 1, 0], [], []>} : vector<16x8xf32>, vector<8x8xf32>, vector<16x8xf32> -> vector<16x8xf32>
    %cst_11 = arith.constant 0.353553385 : f32
    %14 = vector.broadcast %cst_11 : f32 to vector<16x8xf32>
    %15 = arith.mulf %13, %14 : vector<16x8xf32>
    %cst_12 = arith.constant dense<0xFF800000> : vector<16xf32>
    %16 = vector.multi_reduction <maximumf>, %15, %cst_12 [1] : vector<16x8xf32> to vector<16xf32>
    %17 = vector.shape_cast %16 : vector<16xf32> to vector<16x1xf32>
    %18 = vector.broadcast %17 : vector<16x1xf32> to vector<16x8xf32>
    %19 = arith.subf %15, %18 : vector<16x8xf32>
    %20 = math.exp %19 : vector<16x8xf32>
    %cst_13 = arith.constant dense<0.000000e+00> : vector<16xf32>
    %21 = vector.multi_reduction <add>, %20, %cst_13 [1] : vector<16x8xf32> to vector<16xf32>
    %22 = vector.shape_cast %21 : vector<16xf32> to vector<16x1xf32>
    %23 = tpu.reciprocal %22 {approx = true} : vector<16x1xf32> -> vector<16x1xf32>
    %24 = vector.broadcast %23 : vector<16x1xf32> to vector<16x8xf32>
    %25 = arith.mulf %20, %24 : vector<16x8xf32>
    %cst_14 = arith.constant dense<0.000000e+00> : vector<16x8xf32>
    %26 = tpu.matmul %25, %10, %cst_14 {dimension_numbers = #tpu.dot_dimension_numbers<[1], [0], [0], [1], [0, 0, 1, 1], [], []>} : vector<16x8xf32>, vector<8x8xf32>, vector<16x8xf32> -> vector<16x8xf32>
    %27 = vector.extract_strided_slice %26 {offsets = [0, 0], sizes = [8, 8], strides = [1, 1]} : vector<16x8xf32> to vector<8x8xf32>
    %28 = vector.extract_strided_slice %26 {offsets = [8, 0], sizes = [8, 8], strides = [1, 1]} : vector<16x8xf32> to vector<8x8xf32>
    %29 = vector.extract_strided_slice %1 {offsets = [0, 8], sizes = [8, 8], strides = [1, 1]} : vector<8x32xf32> to vector<8x8xf32>
    %30 = vector.extract_strided_slice %3 {offsets = [0, 8], sizes = [8, 8], strides = [1, 1]} : vector<8x32xf32> to vector<8x8xf32>
    %31 = vector.extract_strided_slice %5 {offsets = [0, 8], sizes = [8, 8], strides = [1, 1]} : vector<8x32xf32> to vector<8x8xf32>
    %32 = vector.extract_strided_slice %7 {offsets = [0, 8], sizes = [8, 8], strides = [1, 1]} : vector<8x32xf32> to vector<8x8xf32>
    %33 = tpu.concatenate %29, %32 in 0 : vector<8x8xf32>, vector<8x8xf32> -> vector<16x8xf32>
    %cst_15 = arith.constant dense<0.000000e+00> : vector<16x8xf32>
    %34 = tpu.matmul %33, %30, %cst_15 {dimension_numbers = #tpu.dot_dimension_numbers<[1], [1], [0], [0], [0, 0, 1, 0], [], []>} : vector<16x8xf32>, vector<8x8xf32>, vector<16x8xf32> -> vector<16x8xf32>
    %cst_16 = arith.constant 0.353553385 : f32
    %35 = vector.broadcast %cst_16 : f32 to vector<16x8xf32>
    %36 = arith.mulf %34, %35 : vector<16x8xf32>
    %cst_17 = arith.constant dense<0xFF800000> : vector<16xf32>
    %37 = vector.multi_reduction <maximumf>, %36, %cst_17 [1] : vector<16x8xf32> to vector<16xf32>
    %38 = vector.shape_cast %37 : vector<16xf32> to vector<16x1xf32>
    %39 = vector.broadcast %38 : vector<16x1xf32> to vector<16x8xf32>
    %40 = arith.subf %36, %39 : vector<16x8xf32>
    %41 = math.exp %40 : vector<16x8xf32>
    %cst_18 = arith.constant dense<0.000000e+00> : vector<16xf32>
    %42 = vector.multi_reduction <add>, %41, %cst_18 [1] : vector<16x8xf32> to vector<16xf32>
    %43 = vector.shape_cast %42 : vector<16xf32> to vector<16x1xf32>
    %44 = tpu.reciprocal %43 {approx = true} : vector<16x1xf32> -> vector<16x1xf32>
    %45 = vector.broadcast %44 : vector<16x1xf32> to vector<16x8xf32>
    %46 = arith.mulf %41, %45 : vector<16x8xf32>
    %cst_19 = arith.constant dense<0.000000e+00> : vector<16x8xf32>
    %47 = tpu.matmul %46, %31, %cst_19 {dimension_numbers = #tpu.dot_dimension_numbers<[1], [0], [0], [1], [0, 0, 1, 1], [], []>} : vector<16x8xf32>, vector<8x8xf32>, vector<16x8xf32> -> vector<16x8xf32>
    %48 = vector.extract_strided_slice %47 {offsets = [0, 0], sizes = [8, 8], strides = [1, 1]} : vector<16x8xf32> to vector<8x8xf32>
    %49 = vector.extract_strided_slice %47 {offsets = [8, 0], sizes = [8, 8], strides = [1, 1]} : vector<16x8xf32> to vector<8x8xf32>
    %50 = vector.extract_strided_slice %1 {offsets = [0, 16], sizes = [8, 8], strides = [1, 1]} : vector<8x32xf32> to vector<8x8xf32>
    %51 = vector.extract_strided_slice %3 {offsets = [0, 16], sizes = [8, 8], strides = [1, 1]} : vector<8x32xf32> to vector<8x8xf32>
    %52 = vector.extract_strided_slice %5 {offsets = [0, 16], sizes = [8, 8], strides = [1, 1]} : vector<8x32xf32> to vector<8x8xf32>
    %53 = vector.extract_strided_slice %7 {offsets = [0, 16], sizes = [8, 8], strides = [1, 1]} : vector<8x32xf32> to vector<8x8xf32>
    %54 = tpu.concatenate %50, %53 in 0 : vector<8x8xf32>, vector<8x8xf32> -> vector<16x8xf32>
    %cst_20 = arith.constant dense<0.000000e+00> : vector<16x8xf32>
    %55 = tpu.matmul %54, %51, %cst_20 {dimension_numbers = #tpu.dot_dimension_numbers<[1], [1], [0], [0], [0, 0, 1, 0], [], []>} : vector<16x8xf32>, vector<8x8xf32>, vector<16x8xf32> -> vector<16x8xf32>
    %cst_21 = arith.constant 0.353553385 : f32
    %56 = vector.broadcast %cst_21 : f32 to vector<16x8xf32>
    %57 = arith.mulf %55, %56 : vector<16x8xf32>
    %cst_22 = arith.constant dense<0xFF800000> : vector<16xf32>
    %58 = vector.multi_reduction <maximumf>, %57, %cst_22 [1] : vector<16x8xf32> to vector<16xf32>
    %59 = vector.shape_cast %58 : vector<16xf32> to vector<16x1xf32>
    %60 = vector.broadcast %59 : vector<16x1xf32> to vector<16x8xf32>
    %61 = arith.subf %57, %60 : vector<16x8xf32>
    %62 = math.exp %61 : vector<16x8xf32>
    %cst_23 = arith.constant dense<0.000000e+00> : vector<16xf32>
    %63 = vector.multi_reduction <add>, %62, %cst_23 [1] : vector<16x8xf32> to vector<16xf32>
    %64 = vector.shape_cast %63 : vector<16xf32> to vector<16x1xf32>
    %65 = tpu.reciprocal %64 {approx = true} : vector<16x1xf32> -> vector<16x1xf32>
    %66 = vector.broadcast %65 : vector<16x1xf32> to vector<16x8xf32>
    %67 = arith.mulf %62, %66 : vector<16x8xf32>
    %cst_24 = arith.constant dense<0.000000e+00> : vector<16x8xf32>
    %68 = tpu.matmul %67, %52, %cst_24 {dimension_numbers = #tpu.dot_dimension_numbers<[1], [0], [0], [1], [0, 0, 1, 1], [], []>} : vector<16x8xf32>, vector<8x8xf32>, vector<16x8xf32> -> vector<16x8xf32>
    %69 = vector.extract_strided_slice %68 {offsets = [0, 0], sizes = [8, 8], strides = [1, 1]} : vector<16x8xf32> to vector<8x8xf32>
    %70 = vector.extract_strided_slice %68 {offsets = [8, 0], sizes = [8, 8], strides = [1, 1]} : vector<16x8xf32> to vector<8x8xf32>
    %71 = vector.extract_strided_slice %1 {offsets = [0, 24], sizes = [8, 8], strides = [1, 1]} : vector<8x32xf32> to vector<8x8xf32>
    %72 = vector.extract_strided_slice %3 {offsets = [0, 24], sizes = [8, 8], strides = [1, 1]} : vector<8x32xf32> to vector<8x8xf32>
    %73 = vector.extract_strided_slice %5 {offsets = [0, 24], sizes = [8, 8], strides = [1, 1]} : vector<8x32xf32> to vector<8x8xf32>
    %74 = vector.extract_strided_slice %7 {offsets = [0, 24], sizes = [8, 8], strides = [1, 1]} : vector<8x32xf32> to vector<8x8xf32>
    %75 = tpu.concatenate %71, %74 in 0 : vector<8x8xf32>, vector<8x8xf32> -> vector<16x8xf32>
    %cst_25 = arith.constant dense<0.000000e+00> : vector<16x8xf32>
    %76 = tpu.matmul %75, %72, %cst_25 {dimension_numbers = #tpu.dot_dimension_numbers<[1], [1], [0], [0], [0, 0, 1, 0], [], []>} : vector<16x8xf32>, vector<8x8xf32>, vector<16x8xf32> -> vector<16x8xf32>
    %cst_26 = arith.constant 0.353553385 : f32
    %77 = vector.broadcast %cst_26 : f32 to vector<16x8xf32>
    %78 = arith.mulf %76, %77 : vector<16x8xf32>
    %cst_27 = arith.constant dense<0xFF800000> : vector<16xf32>
    %79 = vector.multi_reduction <maximumf>, %78, %cst_27 [1] : vector<16x8xf32> to vector<16xf32>
    %80 = vector.shape_cast %79 : vector<16xf32> to vector<16x1xf32>
    %81 = vector.broadcast %80 : vector<16x1xf32> to vector<16x8xf32>
    %82 = arith.subf %78, %81 : vector<16x8xf32>
    %83 = math.exp %82 : vector<16x8xf32>
    %cst_28 = arith.constant dense<0.000000e+00> : vector<16xf32>
    %84 = vector.multi_reduction <add>, %83, %cst_28 [1] : vector<16x8xf32> to vector<16xf32>
    %85 = vector.shape_cast %84 : vector<16xf32> to vector<16x1xf32>
    %86 = tpu.reciprocal %85 {approx = true} : vector<16x1xf32> -> vector<16x1xf32>
    %87 = vector.broadcast %86 : vector<16x1xf32> to vector<16x8xf32>
    %88 = arith.mulf %83, %87 : vector<16x8xf32>
    %cst_29 = arith.constant dense<0.000000e+00> : vector<16x8xf32>
    %89 = tpu.matmul %88, %73, %cst_29 {dimension_numbers = #tpu.dot_dimension_numbers<[1], [0], [0], [1], [0, 0, 1, 1], [], []>} : vector<16x8xf32>, vector<8x8xf32>, vector<16x8xf32> -> vector<16x8xf32>
    %90 = vector.extract_strided_slice %89 {offsets = [0, 0], sizes = [8, 8], strides = [1, 1]} : vector<16x8xf32> to vector<8x8xf32>
    %91 = vector.extract_strided_slice %89 {offsets = [8, 0], sizes = [8, 8], strides = [1, 1]} : vector<16x8xf32> to vector<8x8xf32>
    %92 = tpu.concatenate %27, %48, %69, %90 in 1 : vector<8x8xf32>, vector<8x8xf32>, vector<8x8xf32>, vector<8x8xf32> -> vector<8x32xf32>
    %93 = tpu.concatenate %28, %49, %70, %91 in 1 : vector<8x8xf32>, vector<8x8xf32>, vector<8x8xf32>, vector<8x8xf32> -> vector<8x32xf32>
    %c0_30 = arith.constant 0 : index
    %c0_31 = arith.constant 0 : index
    %c0_32 = arith.constant 0 : index
    %94 = vector.load %arg5[%c0_30, %c0_31, %c0_32] : memref<1x8x32xf32, #tpu.memory_space<vmem>>, vector<1x8x32xf32>
    %95 = vector.shape_cast %94 : vector<1x8x32xf32> to vector<8x32xf32>
    %96 = vector.shape_cast %92 : vector<8x32xf32> to vector<1x8x32xf32>
    tpu.vector_store %arg5[%c0_30, %c0_31, %c0_32], %96 {strides = array<i32>} : memref<1x8x32xf32, #tpu.memory_space<vmem>>, vector<1x8x32xf32>,
    %c0_33 = arith.constant 0 : index
    %c0_34 = arith.constant 0 : index
    %c0_35 = arith.constant 0 : index
    %97 = vector.load %arg6[%c0_33, %c0_34, %c0_35] : memref<1x8x32xf32, #tpu.memory_space<vmem>>, vector<1x8x32xf32>
    %98 = vector.shape_cast %97 : vector<1x8x32xf32> to vector<8x32xf32>
    %99 = vector.shape_cast %93 : vector<8x32xf32> to vector<1x8x32xf32>
    tpu.vector_store %arg6[%c0_33, %c0_34, %c0_35], %99 {strides = array<i32>} : memref<1x8x32xf32, #tpu.memory_space<vmem>>, vector<1x8x32xf32>,
    return
  }
  func.func @transform_0(%arg0: i32) -> (i32, i32, i32) {
    %c0_i32 = arith.constant 0 : i32
    %c0_i32_0 = arith.constant 0 : i32
    %c0_i32_1 = arith.constant 0 : i32
    return %arg0, %c0_i32, %c0_i32_0 : i32, i32, i32
  }
  func.func @transform_1(%arg0: i32) -> (i32, i32, i32) {
    %c0_i32 = arith.constant 0 : i32
    %c0_i32_0 = arith.constant 0 : i32
    %c0_i32_1 = arith.constant 0 : i32
    return %arg0, %c0_i32, %c0_i32_0 : i32, i32, i32
  }
  func.func @transform_2(%arg0: i32) -> (i32, i32, i32) {
    %c0_i32 = arith.constant 0 : i32
    %c0_i32_0 = arith.constant 0 : i32
    %c0_i32_1 = arith.constant 0 : i32
    return %arg0, %c0_i32, %c0_i32_0 : i32, i32, i32
  }
  func.func @transform_3(%arg0: i32) -> (i32, i32, i32) {
    %c0_i32 = arith.constant 0 : i32
    %c0_i32_0 = arith.constant 0 : i32
    %c0_i32_1 = arith.constant 0 : i32
    return %arg0, %c0_i32, %c0_i32_0 : i32, i32, i32
  }
  func.func @transform_4(%arg0: i32) -> (i32, i32, i32) {
    %c0_i32 = arith.constant 0 : i32
    %c0_i32_0 = arith.constant 0 : i32
    %c0_i32_1 = arith.constant 0 : i32
    return %arg0, %c0_i32, %c0_i32_0 : i32, i32, i32
  }
  func.func @transform_5(%arg0: i32) -> (i32, i32, i32) {
    %c0_i32 = arith.constant 0 : i32
    %c0_i32_0 = arith.constant 0 : i32
    %c0_i32_1 = arith.constant 0 : i32
    return %arg0, %c0_i32, %c0_i32_0 : i32, i32, i32
  }
}

</mosaic_0001>

<llo_original>
// kernel: attention_forward.6
$region0: #{attention_forward.6}
  #allocation0 [shape = 'u32[]', space=smem, size = 0x4, offset = 0x4, fixed_abs, tag = 'smem constant byte address 0x4 - core index']
  #allocation1 [shape = 'u32[144,128]{1,0:T(1,128)}', space=vmem, size = 0x12000, scoped, tag = 'internal scratch']
  #allocation2 [shape = 'f32[16,96]{1,0:T(8,128)}', space=vmem, size = 0x2000, scoped, tag = 'scratch operand']
  %s0 = inlined_call_operand.vmem [shape: f32[16,32], index: 0, kind: input, shape index: {}]
  %s1 = inlined_call_operand.vmem [shape: f32[32,96], index: 1, kind: input, shape index: {}]
  %s2 = inlined_call_operand.vmem [shape: f32[1,96], index: 2, kind: input, shape index: {}]
  %s3 = inlined_call_operand.vmem [shape: f32[16,96], index: 3, kind: output, shape index: {}]
  %s4 = sld [smem:[#allocation0]]
  $region30: #{attention_forward.6} parent=0
    _
  %s6 = ssub.s32 1, %s4
  %s7 = scalar_select 0, %s6, %s4
  // Predicated region
  $region2: #{attention_forward.6} parent=0 // pred_check
    _
  $region3: #{attention_forward.6} parent=0 // pred_check_branch
    %9 = sbr.rel (0) target = $region5
  $region4: #{attention_forward.6} parent=0 // pred_region
    _
  $region5: #{attention_forward.6} parent=0 // pred_fallthru
    _
  // Predicated region
  $region6: #{attention_forward.6} parent=0 // pred_check
    _
  $region7: #{attention_forward.6} parent=0 // pred_check_branch
    %11 = sbr.rel (0) target = $region9
  $region8: #{attention_forward.6} parent=0 // pred_region
    _
  $region9: #{attention_forward.6} parent=0 // pred_fallthru
    _
  // Predicated region
  $region10: #{attention_forward.6} parent=0 // pred_check
    _
  $region11: #{attention_forward.6} parent=0 // pred_check_branch
    %13 = sbr.rel (0) target = $region13
  $region12: #{attention_forward.6} parent=0 // pred_region
    _
  $region13: #{attention_forward.6} parent=0 // pred_fallthru
    _
  %p14 = scmp.eq.s32.totalorder 0, 0
  // Predicated region
  $region14: #{attention_forward.6} parent=0 // pred_check
    %p15 = pneg %p14
  $region15: #{attention_forward.6} parent=0 // pred_check_branch
    %17 = sbr.rel (%p15) target = $region17
  $region16: #{attention_forward.6} parent=0 // pred_region
    %vm18 = vcmask 785408
    %19 = vst.msk [vmem:[#allocation2] sm:$0xff] %vm18, 0.0
    %20 = vst.msk [vmem:[#allocation2 + $0x8] sm:$0xff] %vm18, 0.0
  $region17: #{attention_forward.6} parent=0 // pred_fallthru
    _
  %v21 = vld [vmem:[#allocation2] sm:$0xff]
  %v22 = vld [vmem:[#allocation2 + $0x8] sm:$0xff]
  %v23 = vld [vmem:[%s0] sm:$0xff]
  %v24 = vld [vmem:[%s0 + $0x8] sm:$0xff]
  %v25 = vld [vmem:[%s1] sm:$0xff]
  %v26 = vld [vmem:[%s1 + $0x8] sm:$0xff]
  %v27 = vld [vmem:[%s1 + $0x10] sm:$0xff]
  %v28 = vld [vmem:[%s1 + $0x18] sm:$0xff]
  %vm29 = vcmask 261120
  %v31 = vsel %vm29, %v23, 0
  %v34 = vsel %vm29, %v24, 0
  %36 = vmatprep.subr.mxu0 0.0
  %37 = vmatpush1.msra.mxu0 %v25
  %38 = vmatprep.subr.mxu0 0.0
  %39 = vmatpush1.msra.mxu0 %v26
  %40 = vmatprep.subr.mxu0 0.0
  %41 = vmatpush1.msra.mxu0 %v27
  %42 = vmatprep.subr.mxu0 0.0
  %43 = vmatpush1.msra.mxu0 %v28
  %44 = vmatprep.subr.mxu0 0.0
  %45 = vmatpush1.msra.mxu0 0.0
  %46 = vmatprep.subr.mxu0 0.0
  %47 = vmatpush1.msra.mxu0 0.0
  %48 = vmatprep.subr.mxu0 0.0
  %49 = vmatpush1.msra.mxu0 0.0
  %50 = vmatprep.subr.mxu0 0.0
  %51 = vmatpush1.msra.mxu0 0.0
  %52 = vmatprep.subr.mxu0 0.0
  %53 = vmatpush1.msra.mxu0 0.0
  %54 = vmatprep.subr.mxu0 0.0
  %55 = vmatpush1.msra.mxu0 0.0
  %56 = vmatprep.subr.mxu0 0.0
  %57 = vmatpush1.msra.mxu0 0.0
  %58 = vmatprep.subr.mxu0 0.0
  %59 = vmatpush1.msra.mxu0 0.0
  %60 = vmatprep.subr.mxu0 0.0
  %61 = vmatpush1.msra.mxu0 0.0
  %62 = vmatprep.subr.mxu0 0.0
  %63 = vmatpush1.msra.mxu0 0.0
  %64 = vmatprep.subr.mxu0 0.0
  %65 = vmatpush1.msra.mxu0 0.0
  %66 = vmatprep.subr.mxu0 0.0
  %67 = vmatpush1.msra.mxu0 0.0
  %68 = vmatprep.subr.mxu0 0.0
  %69 = vmatpush1.msra.mxu0 0.0
  %70 = vmatprep.subr.mxu0 0.0
  %71 = vmatpush1.msra.mxu0 0.0
  %72 = vmatprep.subr.mxu0 0.0
  %73 = vmatpush1.msra.mxu0 0.0
  %74 = vmatprep.subr.mxu0 0.0
  %75 = vmatpush1.msra.mxu0 0.0
  %76 = vmatprep.subr.mxu0 0.0
  %77 = vmatpush1.msra.mxu0 0.0
  %78 = vmatprep.subr.mxu0 0.0
  %79 = vmatpush1.msra.mxu0 0.0
  %80 = vmatprep.subr.mxu0 0.0
  %81 = vmatpush1.msra.mxu0 0.0
  %82 = vmatprep.subr.mxu0 0.0
  %83 = vmatpush1.msra.mxu0 0.0
  %84 = vmatprep.subr.mxu0 0.0
  %85 = vmatpush1.msra.mxu0 0.0
  %86 = vmatprep.subr.mxu0 0.0
  %87 = vmatpush1.msra.mxu0 0.0
  %88 = vmatprep.subr.mxu0 0.0
  %89 = vmatpush1.msra.mxu0 0.0
  %90 = vmatprep.subr.mxu0 0.0
  %91 = vmatpush1.msra.mxu0 0.0
  %92 = vmatprep.subr.mxu0 0.0
  %93 = vmatpush1.msra.mxu0 0.0
  %94 = vmatprep.subr.mxu0 0.0
  %95 = vmatpush1.msra.mxu0 0.0
  %96 = vmatprep.subr.mxu0 0.0
  %97 = vmatpush1.msra.mxu0 0.0
  %98 = vmatprep.subr.mxu0 0.0
  %99 = vmatpush1.msra.mxu0 0.0
  %100 = vmatprep.mubr.f32.mxu0 0.0
  %101 = vmatmul.mubr.f32.gmra.mrb[0].mxu0 %v31
  %v102 = vpop.f32.mrb[0].mxu0
  %v103 = vadd.f32 0.0, %v102
  %v104 = vpop.f32.mrb[0].mxu0
  %105 = vmatprep.mubr.f32.mxu0 0.0
  %106 = vmatmul.mubr.f32.gmra.mrb[0].mxu0 %v34
  %v107 = vpop.f32.mrb[0].mxu0
  %v108 = vadd.f32 0.0, %v107
  %v109 = vpop.f32.mrb[0].mxu0
  %110 = vdwg.mxu0
  %v111 = vadd.f32 %v21, %v103
  %v112 = vadd.f32 %v22, %v108
  %vm113 = vcmask 785408
  %114 = vst.msk [vmem:[#allocation2] sm:$0xff] %vm113, %v111
  %115 = vst.msk [vmem:[#allocation2 + $0x8] sm:$0xff] %vm113, %v112
  // Predicated region
  $region18: #{attention_forward.6} parent=0 // pred_check
    %p116 = pneg %p14
  $region19: #{attention_forward.6} parent=0 // pred_check_branch
    %118 = sbr.rel (%p116) target = $region21
  $region20: #{attention_forward.6} parent=0 // pred_region
    %v119 = vld [vmem:[#allocation2] sm:$0xff]
    %v120 = vld [vmem:[#allocation2 + $0x8] sm:$0xff]
    %v121 = vld [vmem:[%s2] sm:$0x1]
    %v123 = vlaneseq
    %v124 = vshrl.u32 %v123, 7
    %v125 = vsub.s32 0, %v124
    %v126 = vrot.slane %v121, %v125
    %v128 = vadd.f32 %v119, %v126
    %v129 = vadd.f32 %v120, %v126
    %130 = vst.msk [vmem:[%s3] sm:$0xff] %vm113, %v128
    %131 = vst.msk [vmem:[%s3 + $0x8] sm:$0xff] %vm113, %v129
  $region21: #{attention_forward.6} parent=0 // pred_fallthru
    _
  // Predicated region
  $region22: #{attention_forward.6} parent=0 // pred_check
    _
  $region23: #{attention_forward.6} parent=0 // pred_check_branch
    %133 = sbr.rel (0) target = $region25
  $region24: #{attention_forward.6} parent=0 // pred_region
    _
  $region25: #{attention_forward.6} parent=0 // pred_fallthru
    _
  // Predicated region
  $region26: #{attention_forward.6} parent=0 // pred_check
    _
  $region27: #{attention_forward.6} parent=0 // pred_check_branch
    %135 = sbr.rel (0) target = $region29
  $region28: #{attention_forward.6} parent=0 // pred_region
    _
  $region29: #{attention_forward.6} parent=0 // pred_fallthru
    _

// kernel: attention_forward.9
$region0: #{attention_forward.9}
  #allocation0 [shape = 'u32[]', space=smem, size = 0x4, offset = 0x4, fixed_abs, tag = 'smem constant byte address 0x4 - core index']
  #allocation1 [shape = 'u32[144,128]{1,0:T(1,128)}', space=vmem, size = 0x12000, scoped, tag = 'internal scratch']
  %s0 = inlined_call_operand.vmem [shape: f32[16,64], index: 0, kind: input, shape index: {}]
  %s1 = inlined_call_operand.vmem [shape: f32[64,32], index: 1, kind: input, shape index: {}]
  %s2 = inlined_call_operand.vmem [shape: f32[1,32], index: 2, kind: input, shape index: {}]
  %s3 = inlined_call_operand.vmem [shape: f32[32,32], index: 3, kind: input, shape index: {}]
  %s4 = inlined_call_operand.vmem [shape: f32[1,32], index: 4, kind: input, shape index: {}]
  %s5 = inlined_call_operand.hbm [shape: f32[16,32], index: 5, kind: output, shape index: {}]
  %s6 = sld [smem:[#allocation0]]
  $region30: #{attention_forward.9} parent=0
    _
  %s8 = ssub.s32 1, %s6
  %s9 = scalar_select 0, %s8, %s6
  $region1: #{attention_forward.9} parent=0
    #allocation2 [shape = 'u8[8192]{0}', space=vmem, size = 0x2000, scoped, tag = 'output window, operand 0, single buffered']
    #allocation3 [shape = 's32[1]{0}', space=sflag, size = 0x4, scoped, tag = 'scoped memory for attention_forward.9']
    %10 = vsyncpa [#allocation3], 0
    // Predicated region
    $region2: #{attention_forward.9} parent=1 // pred_check
      _
    $region3: #{attention_forward.9} parent=1 // pred_check_branch
      %12 = sbr.rel (0) target = $region5
    $region4: #{attention_forward.9} parent=1 // pred_region
      _
    $region5: #{attention_forward.9} parent=1 // pred_fallthru
      _
    // Predicated region
    $region6: #{attention_forward.9} parent=1 // pred_check
      _
    $region7: #{attention_forward.9} parent=1 // pred_check_branch
      %14 = sbr.rel (0) target = $region9
    $region8: #{attention_forward.9} parent=1 // pred_region
      _
    $region9: #{attention_forward.9} parent=1 // pred_fallthru
      _
    // Predicated region
    $region10: #{attention_forward.9} parent=1 // pred_check
      _
    $region11: #{attention_forward.9} parent=1 // pred_check_branch
      %16 = sbr.rel (0) target = $region13
    $region12: #{attention_forward.9} parent=1 // pred_region
      _
    $region13: #{attention_forward.9} parent=1 // pred_fallthru
      _
    // Predicated region
    $region14: #{attention_forward.9} parent=1 // pred_check
      _
    $region15: #{attention_forward.9} parent=1 // pred_check_branch
      %18 = sbr.rel (0) target = $region17
    $region16: #{attention_forward.9} parent=1 // pred_region
      _
    $region17: #{attention_forward.9} parent=1 // pred_fallthru
      _
    // Predicated region
    $region18: #{attention_forward.9} parent=1 // pred_check
      _
    $region19: #{attention_forward.9} parent=1 // pred_check_branch
      %20 = sbr.rel (0) target = $region21
    $region20: #{attention_forward.9} parent=1 // pred_region
      _
    $region21: #{attention_forward.9} parent=1 // pred_fallthru
      _
    %v21 = vld [vmem:[%s0] sm:$0xff]
    %v22 = vld [vmem:[%s0 + $0x8] sm:$0xff]
    %v23 = vld [vmem:[%s1] sm:$0xff]
    %v24 = vld [vmem:[%s1 + $0x8] sm:$0xff]
    %v25 = vld [vmem:[%s1 + $0x10] sm:$0xff]
    %v26 = vld [vmem:[%s1 + $0x18] sm:$0xff]
    %v27 = vld [vmem:[%s1 + $0x20] sm:$0xff]
    %v28 = vld [vmem:[%s1 + $0x28] sm:$0xff]
    %v29 = vld [vmem:[%s1 + $0x30] sm:$0xff]
    %v30 = vld [vmem:[%s1 + $0x38] sm:$0xff]
    %v31 = vld [vmem:[%s2] sm:$0x1]
    %v33 = vlaneseq
    %v34 = vshrl.u32 %v33, 7
    %v35 = vsub.s32 0, %v34
    %v36 = vrot.slane %v31, %v35
    %vm38 = vcmask 523264
    %v40 = vsel %vm38, %v21, 0
    %v43 = vsel %vm38, %v22, 0
    %45 = vmatprep.subr.mxu0 0.0
    %46 = vmatpush1.msra.mxu0 %v23
    %47 = vmatprep.subr.mxu0 0.0
    %48 = vmatpush1.msra.mxu0 %v24
    %49 = vmatprep.subr.mxu0 0.0
    %50 = vmatpush1.msra.mxu0 %v25
    %51 = vmatprep.subr.mxu0 0.0
    %52 = vmatpush1.msra.mxu0 %v26
    %53 = vmatprep.subr.mxu0 0.0
    %54 = vmatpush1.msra.mxu0 %v27
    %55 = vmatprep.subr.mxu0 0.0
    %56 = vmatpush1.msra.mxu0 %v28
    %57 = vmatprep.subr.mxu0 0.0
    %58 = vmatpush1.msra.mxu0 %v29
    %59 = vmatprep.subr.mxu0 0.0
    %60 = vmatpush1.msra.mxu0 %v30
    %61 = vmatprep.subr.mxu0 0.0
    %62 = vmatpush1.msra.mxu0 0.0
    %63 = vmatprep.subr.mxu0 0.0
    %64 = vmatpush1.msra.mxu0 0.0
    %65 = vmatprep.subr.mxu0 0.0
    %66 = vmatpush1.msra.mxu0 0.0
    %67 = vmatprep.subr.mxu0 0.0
    %68 = vmatpush1.msra.mxu0 0.0
    %69 = vmatprep.subr.mxu0 0.0
    %70 = vmatpush1.msra.mxu0 0.0
    %71 = vmatprep.subr.mxu0 0.0
    %72 = vmatpush1.msra.mxu0 0.0
    %73 = vmatprep.subr.mxu0 0.0
    %74 = vmatpush1.msra.mxu0 0.0
    %75 = vmatprep.subr.mxu0 0.0
    %76 = vmatpush1.msra.mxu0 0.0
    %77 = vmatprep.subr.mxu0 0.0
    %78 = vmatpush1.msra.mxu0 0.0
    %79 = vmatprep.subr.mxu0 0.0
    %80 = vmatpush1.msra.mxu0 0.0
    %81 = vmatprep.subr.mxu0 0.0
    %82 = vmatpush1.msra.mxu0 0.0
    %83 = vmatprep.subr.mxu0 0.0
    %84 = vmatpush1.msra.mxu0 0.0
    %85 = vmatprep.subr.mxu0 0.0
    %86 = vmatpush1.msra.mxu0 0.0
    %87 = vmatprep.subr.mxu0 0.0
    %88 = vmatpush1.msra.mxu0 0.0
    %89 = vmatprep.subr.mxu0 0.0
    %90 = vmatpush1.msra.mxu0 0.0
    %91 = vmatprep.subr.mxu0 0.0
    %92 = vmatpush1.msra.mxu0 0.0
    %93 = vmatprep.subr.mxu0 0.0
    %94 = vmatpush1.msra.mxu0 0.0
    %95 = vmatprep.subr.mxu0 0.0
    %96 = vmatpush1.msra.mxu0 0.0
    %97 = vmatprep.subr.mxu0 0.0
    %98 = vmatpush1.msra.mxu0 0.0
    %99 = vmatprep.subr.mxu0 0.0
    %100 = vmatpush1.msra.mxu0 0.0
    %101 = vmatprep.subr.mxu0 0.0
    %102 = vmatpush1.msra.mxu0 0.0
    %103 = vmatprep.subr.mxu0 0.0
    %104 = vmatpush1.msra.mxu0 0.0
    %105 = vmatprep.subr.mxu0 0.0
    %106 = vmatpush1.msra.mxu0 0.0
    %107 = vmatprep.subr.mxu0 0.0
    %108 = vmatpush1.msra.mxu0 0.0
    %109 = vmatprep.mubr.f32.mxu0 0.0
    %110 = vmatmul.mubr.f32.gmra.mrb[0].mxu0 %v40
    %v111 = vpop.f32.mrb[0].mxu0
    %v112 = vadd.f32 %v36, %v111
    %v113 = vpop.f32.mrb[0].mxu0
    %114 = vmatprep.mubr.f32.mxu0 0.0
    %115 = vmatmul.mubr.f32.gmra.mrb[0].mxu0 %v43
    %v116 = vpop.f32.mrb[0].mxu0
    %v117 = vadd.f32 %v36, %v116
    %v118 = vpop.f32.mrb[0].mxu0
    %119 = vdwg.mxu0
    %v120 = vld [vmem:[%s3] sm:$0xff]
    %v121 = vld [vmem:[%s3 + $0x8] sm:$0xff]
    %v122 = vld [vmem:[%s3 + $0x10] sm:$0xff]
    %v123 = vld [vmem:[%s3 + $0x18] sm:$0xff]
    %v124 = vld [vmem:[%s4] sm:$0x1]
    %v126 = vlaneseq
    %v127 = vshrl.u32 %v126, 7
    %v128 = vsub.s32 0, %v127
    %v129 = vrot.slane %v124, %v128
    %vm131 = vcmask 261120
    %v133 = vsel %vm131, %v112, 0
    %v136 = vsel %vm131, %v117, 0
    %138 = vmatprep.subr.mxu0 0.0
    %139 = vmatpush1.msra.mxu0 %v120
    %140 = vmatprep.subr.mxu0 0.0
    %141 = vmatpush1.msra.mxu0 %v121
    %142 = vmatprep.subr.mxu0 0.0
    %143 = vmatpush1.msra.mxu0 %v122
    %144 = vmatprep.subr.mxu0 0.0
    %145 = vmatpush1.msra.mxu0 %v123
    %146 = vmatprep.subr.mxu0 0.0
    %147 = vmatpush1.msra.mxu0 0.0
    %148 = vmatprep.subr.mxu0 0.0
    %149 = vmatpush1.msra.mxu0 0.0
    %150 = vmatprep.subr.mxu0 0.0
    %151 = vmatpush1.msra.mxu0 0.0
    %152 = vmatprep.subr.mxu0 0.0
    %153 = vmatpush1.msra.mxu0 0.0
    %154 = vmatprep.subr.mxu0 0.0
    %155 = vmatpush1.msra.mxu0 0.0
    %156 = vmatprep.subr.mxu0 0.0
    %157 = vmatpush1.msra.mxu0 0.0
    %158 = vmatprep.subr.mxu0 0.0
    %159 = vmatpush1.msra.mxu0 0.0
    %160 = vmatprep.subr.mxu0 0.0
    %161 = vmatpush1.msra.mxu0 0.0
    %162 = vmatprep.subr.mxu0 0.0
    %163 = vmatpush1.msra.mxu0 0.0
    %164 = vmatprep.subr.mxu0 0.0
    %165 = vmatpush1.msra.mxu0 0.0
    %166 = vmatprep.subr.mxu0 0.0
    %167 = vmatpush1.msra.mxu0 0.0
    %168 = vmatprep.subr.mxu0 0.0
    %169 = vmatpush1.msra.mxu0 0.0
    %170 = vmatprep.subr.mxu0 0.0
    %171 = vmatpush1.msra.mxu0 0.0
    %172 = vmatprep.subr.mxu0 0.0
    %173 = vmatpush1.msra.mxu0 0.0
    %174 = vmatprep.subr.mxu0 0.0
    %175 = vmatpush1.msra.mxu0 0.0
    %176 = vmatprep.subr.mxu0 0.0
    %177 = vmatpush1.msra.mxu0 0.0
    %178 = vmatprep.subr.mxu0 0.0
    %179 = vmatpush1.msra.mxu0 0.0
    %180 = vmatprep.subr.mxu0 0.0
    %181 = vmatpush1.msra.mxu0 0.0
    %182 = vmatprep.subr.mxu0 0.0
    %183 = vmatpush1.msra.mxu0 0.0
    %184 = vmatprep.subr.mxu0 0.0
    %185 = vmatpush1.msra.mxu0 0.0
    %186 = vmatprep.subr.mxu0 0.0
    %187 = vmatpush1.msra.mxu0 0.0
    %188 = vmatprep.subr.mxu0 0.0
    %189 = vmatpush1.msra.mxu0 0.0
    %190 = vmatprep.subr.mxu0 0.0
    %191 = vmatpush1.msra.mxu0 0.0
    %192 = vmatprep.subr.mxu0 0.0
    %193 = vmatpush1.msra.mxu0 0.0
    %194 = vmatprep.subr.mxu0 0.0
    %195 = vmatpush1.msra.mxu0 0.0
    %196 = vmatprep.subr.mxu0 0.0
    %197 = vmatpush1.msra.mxu0 0.0
    %198 = vmatprep.subr.mxu0 0.0
    %199 = vmatpush1.msra.mxu0 0.0
    %200 = vmatprep.subr.mxu0 0.0
    %201 = vmatpush1.msra.mxu0 0.0
    %202 = vmatprep.mubr.f32.mxu0 0.0
    %203 = vmatmul.mubr.f32.gmra.mrb[0].mxu0 %v133
    %v204 = vpop.f32.mrb[0].mxu0
    %v205 = vadd.f32 %v129, %v204
    %v206 = vpop.f32.mrb[0].mxu0
    %207 = vmatprep.mubr.f32.mxu0 0.0
    %208 = vmatmul.mubr.f32.gmra.mrb[0].mxu0 %v136
    %v209 = vpop.f32.mrb[0].mxu0
    %v210 = vadd.f32 %v129, %v209
    %v211 = vpop.f32.mrb[0].mxu0
    %212 = vdwg.mxu0
    %213 = vst.msk [vmem:[#allocation2] sm:$0xff] %vm131, %v205
    %214 = vst.msk [vmem:[#allocation2 + $0x8] sm:$0xff] %vm131, %v210
    // Predicated region
    $region22: #{attention_forward.9} parent=1 // pred_check
      _
    $region23: #{attention_forward.9} parent=1 // pred_check_branch
      %216 = sbr.rel (0) target = $region25
    $region24: #{attention_forward.9} parent=1 // pred_region
      %s218 = ssub.s32 256, 256
      %219 = vsyncadd [#allocation3], %s218
      %s220 = sshll.u32 [#allocation2], 4
      %s221 = int_to_ptr.vmem [resolvable:$true] %s220
      %226 = dma.vmem_to_hbm [thread:$0]  %s221, 256, %s5, [#allocation3], 128, 128, 8
    $region25: #{attention_forward.9} parent=1 // pred_fallthru
      _
    // Predicated region
    $region26: #{attention_forward.9} parent=1 // pred_check
      _
    $region27: #{attention_forward.9} parent=1 // pred_check_branch
      %228 = sbr.rel (0) target = $region29
    $region28: #{attention_forward.9} parent=1 // pred_region
      %229 = dma.done [#allocation3], 256
    $region29: #{attention_forward.9} parent=1 // pred_fallthru
      _
    %230 = vsyncpa [#allocation3], 1

// kernel: attention_forward.8
$region0: #{attention_forward.8}
  #allocation0 [shape = 'u32[]', space=smem, size = 0x4, offset = 0x4, fixed_abs, tag = 'smem constant byte address 0x4 - core index']
  #allocation1 [shape = 'u32[144,128]{1,0:T(1,128)}', space=vmem, size = 0x12000, scoped, tag = 'internal scratch']
  %s0 = inlined_call_operand.vmem [shape: f32[2,8,32], index: 0, kind: input, shape index: {}]
  %s1 = inlined_call_operand.vmem [shape: f32[2,8,32], index: 1, kind: input, shape index: {}]
  %s2 = inlined_call_operand.vmem [shape: f32[2,8,32], index: 2, kind: input, shape index: {}]
  %s3 = inlined_call_operand.vmem [shape: f32[2,8,32], index: 3, kind: input, shape index: {}]
  %s4 = inlined_call_operand.vmem [shape: f32[2,8,32], index: 4, kind: output, shape index: {0}]
  %s5 = inlined_call_operand.vmem [shape: f32[2,8,32], index: 5, kind: output, shape index: {1}]
  %s6 = inlined_call_operand.hbm [shape: f32[2,4,8,8], index: 6, kind: output, shape index: {2}]
  %s7 = inlined_call_operand.hbm [shape: f32[2,4,8,8], index: 7, kind: output, shape index: {3}]
  %8 = xla_tuple %s4, %s5, %s6, %s7
  %s9 = sld [smem:[#allocation0]]
  $region73: #{attention_forward.8} parent=0
    _
  %s11 = ssub.s32 1, %s9
  %s12 = scalar_select 0, %s11, %s9
  $region1: #{attention_forward.8} parent=0
    #allocation2 [shape = 'u8[32768]{0}', space=vmem, size = 0x8000, scoped, tag = 'output window, operand 2']
    #allocation3 [shape = 's32[2]{0}', space=sflag, size = 0x8, scoped, tag = 'scoped memory for attention_forward.8']
    #allocation4 [shape = 'u8[32768]{0}', space=vmem, size = 0x8000, scoped, tag = 'output window, operand 3']
    #allocation5 [shape = 's32[2]{0}', space=sflag, size = 0x8, scoped, tag = 'scoped memory for attention_forward.8']
    %13 = vsyncpa [#allocation3], 0
    %s14 = scalar_lea.sflag [#allocation3], 1
    %15 = vsyncpa %s14, 0
    %16 = vsyncpa [#allocation5], 0
    %s17 = scalar_lea.sflag [#allocation5], 1
    %18 = vsyncpa %s17, 0
    loop: start=0, step=1, limit=4
    $region2: #{attention_forward.8} parent=1 // loop_pre_header
      _
    $region3: #{attention_forward.8} parent=1 // loop_header
      %s20 = sphi 0, %s24
      %p21 = scmp.ge.s32.totalorder %s20, 4
      %s30 = sphi 0, %s32
      %s33 = sphi 0, %s30
      %s34 = sphi 0, %s33
      %s50 = sphi 0, %s34
      %s56 = sphi 0, %s58
      %s59 = sphi 0, %s56
      %s60 = sphi 0, %s59
      %s76 = sphi 0, %s60
      %s82 = sphi 0, %s84
      %s85 = sphi 0, %s82
      %s86 = sphi 0, %s85
      %s102 = sphi 0, %s86
      %s108 = sphi 0, %s110
      %s111 = sphi 0, %s108
      %s112 = sphi 0, %s111
      %s128 = sphi 0, %s112
      %s134 = sphi 0, %s136
      %s137 = sphi 0, %s134
      %s138 = sphi 0, %s137
      %s154 = sphi 0, %s138
      %s160 = sphi 0, %s162
      %s163 = sphi 0, %s160
      %s164 = sphi 0, %s163
      %s180 = sphi 0, %s164
      %s186 = sphi 0, %s188
      %s189 = sphi 0, %s186
      %s190 = sphi 0, %s189
      %s206 = sphi 0, %s190
      %s212 = sphi 0, %s214
      %s215 = sphi 0, %s212
      %s216 = sphi 0, %s215
      %s232 = sphi 0, %s216
    $region4: #{attention_forward.8} parent=1 // loop_header_branch
      %23 = sbr.rel (%p21) target = $region8
    $region5: #{attention_forward.8} parent=1 // loop_body
      %s25 = ssub.s32 %s20, 1
      %s26 = ssub.s32 %s20, 2
      %s27 = sadd.s32 %s20, 1
      %s28 = ssub.s32 %s20, %s27
      %p29 = scmp.eq.s32.totalorder %s28, 0
      %s31 = sadd.s32 %s30, 1
      %s32 = scalar_select %p29, %s30, %s31
      %p35 = pneg %p29
      %p36 = scmp.eq.s32.totalorder %s20, 1
      %p37 = por %p35, %p36
      %p38 = scmp.ne.s32.totalorder %s30, %s33
      %p39 = scmp.eq.s32.totalorder %s20, 0
      %p40 = por %p38, %p39
      %p41 = scmp.ne.s32.totalorder %s30, %s33
      %p42 = scmp.eq.s32.totalorder %s25, 1
      %p43 = por %p41, %p42
      %p44 = scmp.ne.s32.totalorder %s33, %s34
      %p45 = scmp.eq.s32.totalorder %s25, 0
      %p46 = por %p44, %p45
      %p47 = scmp.ne.s32.totalorder %s33, %s34
      %p48 = scmp.eq.s32.totalorder %s26, 1
      %p49 = por %p47, %p48
      %p51 = scmp.ne.s32.totalorder %s34, %s50
      %p52 = scmp.eq.s32.totalorder %s26, 0
      %p53 = por %p51, %p52
      %s54 = ssub.s32 %s20, %s27
      %p55 = scmp.eq.s32.totalorder %s54, 0
      %s57 = sadd.s32 %s56, 1
      %s58 = scalar_select %p55, %s56, %s57
      %p61 = pneg %p55
      %p62 = scmp.eq.s32.totalorder %s20, 1
      %p63 = por %p61, %p62
      %p64 = scmp.ne.s32.totalorder %s56, %s59
      %p65 = scmp.eq.s32.totalorder %s20, 0
      %p66 = por %p64, %p65
      %p67 = scmp.ne.s32.totalorder %s56, %s59
      %p68 = scmp.eq.s32.totalorder %s25, 1
      %p69 = por %p67, %p68
      %p70 = scmp.ne.s32.totalorder %s59, %s60
      %p71 = scmp.eq.s32.totalorder %s25, 0
      %p72 = por %p70, %p71
      %p73 = scmp.ne.s32.totalorder %s59, %s60
      %p74 = scmp.eq.s32.totalorder %s26, 1
      %p75 = por %p73, %p74
      %p77 = scmp.ne.s32.totalorder %s60, %s76
      %p78 = scmp.eq.s32.totalorder %s26, 0
      %p79 = por %p77, %p78
      %s80 = ssub.s32 %s20, %s27
      %p81 = scmp.eq.s32.totalorder %s80, 0
      %s83 = sadd.s32 %s82, 1
      %s84 = scalar_select %p81, %s82, %s83
      %p87 = pneg %p81
      %p88 = scmp.eq.s32.totalorder %s20, 1
      %p89 = por %p87, %p88
      %p90 = scmp.ne.s32.totalorder %s82, %s85
      %p91 = scmp.eq.s32.totalorder %s20, 0
      %p92 = por %p90, %p91
      %p93 = scmp.ne.s32.totalorder %s82, %s85
      %p94 = scmp.eq.s32.totalorder %s25, 1
      %p95 = por %p93, %p94
      %p96 = scmp.ne.s32.totalorder %s85, %s86
      %p97 = scmp.eq.s32.totalorder %s25, 0
      %p98 = por %p96, %p97
      %p99 = scmp.ne.s32.totalorder %s85, %s86
      %p100 = scmp.eq.s32.totalorder %s26, 1
      %p101 = por %p99, %p100
      %p103 = scmp.ne.s32.totalorder %s86, %s102
      %p104 = scmp.eq.s32.totalorder %s26, 0
      %p105 = por %p103, %p104
      %s106 = ssub.s32 %s20, %s27
      %p107 = scmp.eq.s32.totalorder %s106, 0
      %s109 = sadd.s32 %s108, 1
      %s110 = scalar_select %p107, %s108, %s109
      %p113 = pneg %p107
      %p114 = scmp.eq.s32.totalorder %s20, 1
      %p115 = por %p113, %p114
      %p116 = scmp.ne.s32.totalorder %s108, %s111
      %p117 = scmp.eq.s32.totalorder %s20, 0
      %p118 = por %p116, %p117
      %p119 = scmp.ne.s32.totalorder %s108, %s111
      %p120 = scmp.eq.s32.totalorder %s25, 1
      %p121 = por %p119, %p120
      %p122 = scmp.ne.s32.totalorder %s111, %s112
      %p123 = scmp.eq.s32.totalorder %s25, 0
      %p124 = por %p122, %p123
      %p125 = scmp.ne.s32.totalorder %s111, %s112
      %p126 = scmp.eq.s32.totalorder %s26, 1
      %p127 = por %p125, %p126
      %p129 = scmp.ne.s32.totalorder %s112, %s128
      %p130 = scmp.eq.s32.totalorder %s26, 0
      %p131 = por %p129, %p130
      %s132 = ssub.s32 %s20, %s27
      %p133 = scmp.eq.s32.totalorder %s132, 0
      %s135 = sadd.s32 %s134, 1
      %s136 = scalar_select %p133, %s134, %s135
      %p139 = pneg %p133
      %p140 = scmp.eq.s32.totalorder %s20, 1
      %p141 = por %p139, %p140
      %p142 = scmp.ne.s32.totalorder %s134, %s137
      %p143 = scmp.eq.s32.totalorder %s20, 0
      %p144 = por %p142, %p143
      %p145 = scmp.ne.s32.totalorder %s134, %s137
      %p146 = scmp.eq.s32.totalorder %s25, 1
      %p147 = por %p145, %p146
      %p148 = scmp.ne.s32.totalorder %s137, %s138
      %p149 = scmp.eq.s32.totalorder %s25, 0
      %p150 = por %p148, %p149
      %p151 = scmp.ne.s32.totalorder %s137, %s138
      %p152 = scmp.eq.s32.totalorder %s26, 1
      %p153 = por %p151, %p152
      %p155 = scmp.ne.s32.totalorder %s138, %s154
      %p156 = scmp.eq.s32.totalorder %s26, 0
      %p157 = por %p155, %p156
      %s158 = ssub.s32 %s20, %s27
      %p159 = scmp.eq.s32.totalorder %s158, 0
      %s161 = sadd.s32 %s160, 1
      %s162 = scalar_select %p159, %s160, %s161
      %p165 = pneg %p159
      %p166 = scmp.eq.s32.totalorder %s20, 1
      %p167 = por %p165, %p166
      %p168 = scmp.ne.s32.totalorder %s160, %s163
      %p169 = scmp.eq.s32.totalorder %s20, 0
      %p170 = por %p168, %p169
      %p171 = scmp.ne.s32.totalorder %s160, %s163
      %p172 = scmp.eq.s32.totalorder %s25, 1
      %p173 = por %p171, %p172
      %p174 = scmp.ne.s32.totalorder %s163, %s164
      %p175 = scmp.eq.s32.totalorder %s25, 0
      %p176 = por %p174, %p175
      %p177 = scmp.ne.s32.totalorder %s163, %s164
      %p178 = scmp.eq.s32.totalorder %s26, 1
      %p179 = por %p177, %p178
      %p181 = scmp.ne.s32.totalorder %s164, %s180
      %p182 = scmp.eq.s32.totalorder %s26, 0
      %p183 = por %p181, %p182
      %s184 = ssub.s32 %s20, %s27
      %p185 = scmp.eq.s32.totalorder %s184, 0
      %s187 = sadd.s32 %s186, 1
      %s188 = scalar_select %p185, %s186, %s187
      %p191 = pneg %p185
      %p192 = scmp.eq.s32.totalorder %s20, 1
      %p193 = por %p191, %p192
      %p194 = scmp.ne.s32.totalorder %s186, %s189
      %p195 = scmp.eq.s32.totalorder %s20, 0
      %p196 = por %p194, %p195
      %p197 = scmp.ne.s32.totalorder %s186, %s189
      %p198 = scmp.eq.s32.totalorder %s25, 1
      %p199 = por %p197, %p198
      %p200 = scmp.ne.s32.totalorder %s189, %s190
      %p201 = scmp.eq.s32.totalorder %s25, 0
      %p202 = por %p200, %p201
      %p203 = scmp.ne.s32.totalorder %s189, %s190
      %p204 = scmp.eq.s32.totalorder %s26, 1
      %p205 = por %p203, %p204
      %p207 = scmp.ne.s32.totalorder %s190, %s206
      %p208 = scmp.eq.s32.totalorder %s26, 0
      %p209 = por %p207, %p208
      %s210 = ssub.s32 %s20, %s27
      %p211 = scmp.eq.s32.totalorder %s210, 0
      %s213 = sadd.s32 %s212, 1
      %s214 = scalar_select %p211, %s212, %s213
      %p217 = pneg %p211
      %p218 = scmp.eq.s32.totalorder %s20, 1
      %p219 = por %p217, %p218
      %p220 = scmp.ne.s32.totalorder %s212, %s215
      %p221 = scmp.eq.s32.totalorder %s20, 0
      %p222 = por %p220, %p221
      %p223 = scmp.ne.s32.totalorder %s212, %s215
      %p224 = scmp.eq.s32.totalorder %s25, 1
      %p225 = por %p223, %p224
      %p226 = scmp.ne.s32.totalorder %s215, %s216
      %p227 = scmp.eq.s32.totalorder %s25, 0
      %p228 = por %p226, %p227
      %p229 = scmp.ne.s32.totalorder %s215, %s216
      %p230 = scmp.eq.s32.totalorder %s26, 1
      %p231 = por %p229, %p230
      %p233 = scmp.ne.s32.totalorder %s216, %s232
      %p234 = scmp.eq.s32.totalorder %s26, 0
      %p235 = por %p233, %p234
      %p236 = scmp.le.s32.totalorder 1, %s20
      %p237 = scmp.lt.s32.totalorder %s20, 3
      %p238 = pnand %p236, %p237
      %p239 = pneg %p238
      // Predicated region
      $region9: #{attention_forward.8} parent=5 // pred_check
        _
      $region10: #{attention_forward.8} parent=5 // pred_check_branch
        %241 = sbr.rel (%p238) target = $region12
      $region11: #{attention_forward.8} parent=5 // pred_region
        %s242 = ssub.s32 %s20, 1
      $region12: #{attention_forward.8} parent=5 // pred_fallthru
        _
      %p243 = scmp.lt.s32.totalorder %s20, 2
      // Predicated region
      $region13: #{attention_forward.8} parent=5 // pred_check
        %p244 = pneg %p243
      $region14: #{attention_forward.8} parent=5 // pred_check_branch
        %246 = sbr.rel (%p244) target = $region16
      $region15: #{attention_forward.8} parent=5 // pred_region
        // Predicated region
        $region17: #{attention_forward.8} parent=15 // pred_check
          %p247 = pneg %p40
        $region18: #{attention_forward.8} parent=15 // pred_check_branch
          %249 = sbr.rel (%p247) target = $region20
        $region19: #{attention_forward.8} parent=15 // pred_region
          %p250 = scmp.lt.s32.totalorder %s20, 1
          %s251 = scalar_select %p250, %s20, 1
          %s252 = smul.addr %s251, 8
          %s253 = scalar_lea.vmem %s0, %s252
        $region20: #{attention_forward.8} parent=15 // pred_fallthru
          _
        // Predicated region
        $region21: #{attention_forward.8} parent=15 // pred_check
          %p254 = pneg %p66
        $region22: #{attention_forward.8} parent=15 // pred_check_branch
          %256 = sbr.rel (%p254) target = $region24
        $region23: #{attention_forward.8} parent=15 // pred_region
          %p257 = scmp.lt.s32.totalorder %s20, 1
          %s258 = scalar_select %p257, %s20, 1
          %s259 = smul.addr %s258, 8
          %s260 = scalar_lea.vmem %s1, %s259
        $region24: #{attention_forward.8} parent=15 // pred_fallthru
          _
        // Predicated region
        $region25: #{attention_forward.8} parent=15 // pred_check
          %p261 = pneg %p92
        $region26: #{attention_forward.8} parent=15 // pred_check_branch
          %263 = sbr.rel (%p261) target = $region28
        $region27: #{attention_forward.8} parent=15 // pred_region
          %p264 = scmp.lt.s32.totalorder %s20, 1
          %s265 = scalar_select %p264, %s20, 1
          %s266 = smul.addr %s265, 8
          %s267 = scalar_lea.vmem %s2, %s266
        $region28: #{attention_forward.8} parent=15 // pred_fallthru
          _
        // Predicated region
        $region29: #{attention_forward.8} parent=15 // pred_check
          %p268 = pneg %p118
        $region30: #{attention_forward.8} parent=15 // pred_check_branch
          %270 = sbr.rel (%p268) target = $region32
        $region31: #{attention_forward.8} parent=15 // pred_region
          %p271 = scmp.lt.s32.totalorder %s20, 1
          %s272 = scalar_select %p271, %s20, 1
          %s273 = smul.addr %s272, 8
          %s274 = scalar_lea.vmem %s3, %s273
        $region32: #{attention_forward.8} parent=15 // pred_fallthru
          _
      $region16: #{attention_forward.8} parent=5 // pred_fallthru
        _
      %p275 = scmp.le.s32.totalorder 1, %s20
      %p276 = scmp.lt.s32.totalorder %s20, 3
      %p277 = pnand %p275, %p276
      %p278 = pneg %p277
      // Predicated region
      $region33: #{attention_forward.8} parent=5 // pred_check
        _
      $region34: #{attention_forward.8} parent=5 // pred_check_branch
        %280 = sbr.rel (%p277) target = $region36
      $region35: #{attention_forward.8} parent=5 // pred_region
        %s281 = ssub.s32 %s20, 1
        %p282 = scmp.lt.s32.totalorder %s25, 1
        %s283 = scalar_select %p282, %s25, 1
        %s284 = smul.addr %s283, 8
        %s285 = scalar_lea.vmem %s0, %s284
        %p286 = pneg %p46
        %p287 = pneg %p43
        %p288 = scmp.lt.s32.totalorder %s25, 1
        %s289 = scalar_select %p288, %s25, 1
        %s290 = smul.addr %s289, 8
        %s291 = scalar_lea.vmem %s1, %s290
        %p292 = pneg %p72
        %p293 = pneg %p69
        %p294 = scmp.lt.s32.totalorder %s25, 1
        %s295 = scalar_select %p294, %s25, 1
        %s296 = smul.addr %s295, 8
        %s297 = scalar_lea.vmem %s2, %s296
        %p298 = pneg %p98
        %p299 = pneg %p95
        %p300 = scmp.lt.s32.totalorder %s25, 1
        %s301 = scalar_select %p300, %s25, 1
        %s302 = smul.addr %s301, 8
        %s303 = scalar_lea.vmem %s3, %s302
        %p304 = pneg %p124
        %p305 = pneg %p121
        %p306 = pneg %p150
        %p307 = pneg %p147
        %p308 = scmp.lt.s32.totalorder %s25, 1
        %s309 = scalar_select %p308, %s25, 1
        %s310 = smul.addr %s309, 8
        %s311 = scalar_lea.vmem %s4, %s310
        %p312 = pneg %p176
        %p313 = pneg %p173
        %p314 = scmp.lt.s32.totalorder %s25, 1
        %s315 = scalar_select %p314, %s25, 1
        %s316 = smul.addr %s315, 8
        %s317 = scalar_lea.vmem %s5, %s316
        %p318 = pneg %p202
        %p319 = pneg %p199
        %s320 = sand.u32 %s189, 1
        %s321 = scalar_lea.sflag [#allocation3], %s320
        %s322 = sand.u32 %s189, 1
        %s323 = smul.addr %s322, 32
        %s324 = scalar_lea.vmem [#allocation2], %s323
        %p325 = pneg %p228
        %p326 = pneg %p225
        %s327 = sand.u32 %s215, 1
        %s328 = scalar_lea.sflag [#allocation5], %s327
        %s329 = sand.u32 %s215, 1
        %s330 = smul.addr %s329, 32
        %s331 = scalar_lea.vmem [#allocation4], %s330
        %p332 = scmp.lt.s32.totalorder %s25, 1
        %s333 = scalar_select %p332, %s25, 1
        %s334 = smul.addr %s333, 8
        %s335 = scalar_lea.vmem %s0, %s334
        %p336 = scmp.lt.s32.totalorder %s25, 1
        %s337 = scalar_select %p336, %s25, 1
        %s338 = smul.addr %s337, 8
        %s339 = scalar_lea.vmem %s1, %s338
        %p340 = scmp.lt.s32.totalorder %s25, 1
        %s341 = scalar_select %p340, %s25, 1
        %s342 = smul.addr %s341, 8
        %s343 = scalar_lea.vmem %s2, %s342
        %p344 = scmp.lt.s32.totalorder %s25, 1
        %s345 = scalar_select %p344, %s25, 1
        %s346 = smul.addr %s345, 8
        %s347 = scalar_lea.vmem %s3, %s346
        %p348 = scmp.lt.s32.totalorder %s25, 1
        %s349 = scalar_select %p348, %s25, 1
        %s350 = smul.addr %s349, 8
        %s351 = scalar_lea.vmem %s4, %s350
        %p352 = scmp.lt.s32.totalorder %s25, 1
        %s353 = scalar_select %p352, %s25, 1
        %s354 = smul.addr %s353, 8
        %s355 = scalar_lea.vmem %s5, %s354
        %v356 = vld [vmem:[%s335] sm:$0xff]
        %v357 = vld [vmem:[%s339] sm:$0xff]
        %v358 = vld [vmem:[%s343] sm:$0xff]
        %v359 = vld [vmem:[%s347] sm:$0xff]
        %vm360 = vcmask 64512
        %v362 = vsel %vm360, %v356, 0
        %v365 = vsel %vm360, %v359, 0
        %v368 = vsel %vm360, %v357, 0
        %370 = vmatprep.subr.mxu0 0.0
        %371 = vmatpush1.xpose.msra.mxu0 %v368
        %372 = vmatprep.subr.mxu0 0.0
        %373 = vmatpush1.xpose.msra.mxu0 0.0
        %374 = vmatprep.subr.mxu0 0.0
        %375 = vmatpush1.xpose.msra.mxu0 0.0
        %376 = vmatprep.subr.mxu0 0.0
        %377 = vmatpush1.xpose.msra.mxu0 0.0
        %378 = vmatprep.subr.mxu0 0.0
        %379 = vmatpush1.xpose.msra.mxu0 0.0
        %380 = vmatprep.subr.mxu0 0.0
        %381 = vmatpush1.xpose.msra.mxu0 0.0
        %382 = vmatprep.subr.mxu0 0.0
        %383 = vmatpush1.xpose.msra.mxu0 0.0
        %384 = vmatprep.subr.mxu0 0.0
        %385 = vmatpush1.xpose.msra.mxu0 0.0
        %386 = vmatprep.subr.mxu0 0.0
        %387 = vmatpush1.xpose.msra.mxu0 0.0
        %388 = vmatprep.subr.mxu0 0.0
        %389 = vmatpush1.xpose.msra.mxu0 0.0
        %390 = vmatprep.subr.mxu0 0.0
        %391 = vmatpush1.xpose.msra.mxu0 0.0
        %392 = vmatprep.subr.mxu0 0.0
        %393 = vmatpush1.xpose.msra.mxu0 0.0
        %394 = vmatprep.subr.mxu0 0.0
        %395 = vmatpush1.xpose.msra.mxu0 0.0
        %396 = vmatprep.subr.mxu0 0.0
        %397 = vmatpush1.xpose.msra.mxu0 0.0
        %398 = vmatprep.subr.mxu0 0.0
        %399 = vmatpush1.xpose.msra.mxu0 0.0
        %400 = vmatprep.subr.mxu0 0.0
        %401 = vmatpush1.xpose.msra.mxu0 0.0
        %402 = vmatprep.subr.mxu0 0.0
        %403 = vmatpush1.xpose.msra.mxu0 0.0
        %404 = vmatprep.subr.mxu0 0.0
        %405 = vmatpush1.xpose.msra.mxu0 0.0
        %406 = vmatprep.subr.mxu0 0.0
        %407 = vmatpush1.xpose.msra.mxu0 0.0
        %408 = vmatprep.subr.mxu0 0.0
        %409 = vmatpush1.xpose.msra.mxu0 0.0
        %410 = vmatprep.subr.mxu0 0.0
        %411 = vmatpush1.xpose.msra.mxu0 0.0
        %412 = vmatprep.subr.mxu0 0.0
        %413 = vmatpush1.xpose.msra.mxu0 0.0
        %414 = vmatprep.subr.mxu0 0.0
        %415 = vmatpush1.xpose.msra.mxu0 0.0
        %416 = vmatprep.subr.mxu0 0.0
        %417 = vmatpush1.xpose.msra.mxu0 0.0
        %418 = vmatprep.subr.mxu0 0.0
        %419 = vmatpush1.xpose.msra.mxu0 0.0
        %420 = vmatprep.subr.mxu0 0.0
        %421 = vmatpush1.xpose.msra.mxu0 0.0
        %422 = vmatprep.subr.mxu0 0.0
        %423 = vmatpush1.xpose.msra.mxu0 0.0
        %424 = vmatprep.subr.mxu0 0.0
        %425 = vmatpush1.xpose.msra.mxu0 0.0
        %426 = vmatprep.subr.mxu0 0.0
        %427 = vmatpush1.xpose.msra.mxu0 0.0
        %428 = vmatprep.subr.mxu0 0.0
        %429 = vmatpush1.xpose.msra.mxu0 0.0
        %430 = vmatprep.subr.mxu0 0.0
        %431 = vmatpush1.xpose.msra.mxu0 0.0
        %432 = vmatprep.subr.mxu0 0.0
        %433 = vmatpush1.xpose.msra.mxu0 0.0
        %434 = vmatprep.mubr.f32.mxu0 0.0
        %435 = vmatmul.mubr.f32.gmra.mrb[0].mxu0 %v362
        %v436 = vpop.f32.mrb[0].mxu0
        %v437 = vadd.f32 0.0, %v436
        %v438 = vpop.f32.mrb[0].mxu0
        %439 = vmatprep.mubr.f32.mxu0 0.0
        %440 = vmatmul.mubr.f32.gmra.mrb[0].mxu0 %v365
        %v441 = vpop.f32.mrb[0].mxu0
        %v442 = vadd.f32 0.0, %v441
        %v443 = vpop.f32.mrb[0].mxu0
        %444 = vdwg.mxu0
        %v445 = vmul.f32 %v437, 0.35355338
        %v446 = vmul.f32 %v442, 0.35355338
        %v447 = vsel %vm360, %v445, -inf
        %448 = vmax.xlane.f32.xlu0 %v447
        %v449 = vpop.xlane.xlu0 %448
        %v450 = vsel %vm360, %v446, -inf
        %451 = vmax.xlane.f32.xlu0 %v450
        %v452 = vpop.xlane.xlu0 %451
        %v453 = vsub.f32 %v445, %v449
        %v454 = vsub.f32 %v446, %v452
        %v455 = vmul.f32 %v453, 1.442695
        %v456 = vpow.pop %v455
        %v457 = vmul.f32 %v454, 1.442695
        %v458 = vpow.pop %v457
        %v459 = vsel %vm360, %v456, 0.0
        %460 = vadd.xlane.f32.xlu0 %v459
        %v461 = vpop.xlane.xlu0 %460
        %v462 = vsel %vm360, %v458, 0.0
        %463 = vadd.xlane.f32.xlu0 %v462
        %v464 = vpop.xlane.xlu0 %463
        %v465 = vrcp.pop %v461
        %v466 = vrcp.pop %v464
        %v467 = vmul.f32 %v456, %v465
        %v468 = vmul.f32 %v458, %v466
        %v470 = vsel %vm360, %v467, 0
        %v473 = vsel %vm360, %v468, 0
        %475 = vmatprep.subr.mxu0 0.0
        %476 = vmatpush1.msra.mxu0 %v358
        %477 = vmatprep.subr.mxu0 0.0
        %478 = vmatpush1.msra.mxu0 0.0
        %479 = vmatprep.subr.mxu0 0.0
        %480 = vmatpush1.msra.mxu0 0.0
        %481 = vmatprep.subr.mxu0 0.0
        %482 = vmatpush1.msra.mxu0 0.0
        %483 = vmatprep.subr.mxu0 0.0
        %484 = vmatpush1.msra.mxu0 0.0
        %485 = vmatprep.subr.mxu0 0.0
        %486 = vmatpush1.msra.mxu0 0.0
        %487 = vmatprep.subr.mxu0 0.0
        %488 = vmatpush1.msra.mxu0 0.0
        %489 = vmatprep.subr.mxu0 0.0
        %490 = vmatpush1.msra.mxu0 0.0
        %491 = vmatprep.subr.mxu0 0.0
        %492 = vmatpush1.msra.mxu0 0.0
        %493 = vmatprep.subr.mxu0 0.0
        %494 = vmatpush1.msra.mxu0 0.0
        %495 = vmatprep.subr.mxu0 0.0
        %496 = vmatpush1.msra.mxu0 0.0
        %497 = vmatprep.subr.mxu0 0.0
        %498 = vmatpush1.msra.mxu0 0.0
        %499 = vmatprep.subr.mxu0 0.0
        %500 = vmatpush1.msra.mxu0 0.0
        %501 = vmatprep.subr.mxu0 0.0
        %502 = vmatpush1.msra.mxu0 0.0
        %503 = vmatprep.subr.mxu0 0.0
        %504 = vmatpush1.msra.mxu0 0.0
        %505 = vmatprep.subr.mxu0 0.0
        %506 = vmatpush1.msra.mxu0 0.0
        %507 = vmatprep.subr.mxu0 0.0
        %508 = vmatpush1.msra.mxu0 0.0
        %509 = vmatprep.subr.mxu0 0.0
        %510 = vmatpush1.msra.mxu0 0.0
        %511 = vmatprep.subr.mxu0 0.0
        %512 = vmatpush1.msra.mxu0 0.0
        %513 = vmatprep.subr.mxu0 0.0
        %514 = vmatpush1.msra.mxu0 0.0
        %515 = vmatprep.subr.mxu0 0.0
        %516 = vmatpush1.msra.mxu0 0.0
        %517 = vmatprep.subr.mxu0 0.0
        %518 = vmatpush1.msra.mxu0 0.0
        %519 = vmatprep.subr.mxu0 0.0
        %520 = vmatpush1.msra.mxu0 0.0
        %521 = vmatprep.subr.mxu0 0.0
        %522 = vmatpush1.msra.mxu0 0.0
        %523 = vmatprep.subr.mxu0 0.0
        %524 = vmatpush1.msra.mxu0 0.0
        %525 = vmatprep.subr.mxu0 0.0
        %526 = vmatpush1.msra.mxu0 0.0
        %527 = vmatprep.subr.mxu0 0.0
        %528 = vmatpush1.msra.mxu0 0.0
        %529 = vmatprep.subr.mxu0 0.0
        %530 = vmatpush1.msra.mxu0 0.0
        %531 = vmatprep.subr.mxu0 0.0
        %532 = vmatpush1.msra.mxu0 0.0
        %533 = vmatprep.subr.mxu0 0.0
        %534 = vmatpush1.msra.mxu0 0.0
        %535 = vmatprep.subr.mxu0 0.0
        %536 = vmatpush1.msra.mxu0 0.0
        %537 = vmatprep.subr.mxu0 0.0
        %538 = vmatpush1.msra.mxu0 0.0
        %539 = vmatprep.mubr.f32.mxu0 0.0
        %540 = vmatmul.mubr.f32.gmra.mrb[0].mxu0 %v470
        %v541 = vpop.f32.mrb[0].mxu0
        %v542 = vadd.f32 0.0, %v541
        %v543 = vpop.f32.mrb[0].mxu0
        %544 = vmatprep.mubr.f32.mxu0 0.0
        %545 = vmatmul.mubr.f32.gmra.mrb[0].mxu0 %v473
        %v546 = vpop.f32.mrb[0].mxu0
        %v547 = vadd.f32 0.0, %v546
        %v548 = vpop.f32.mrb[0].mxu0
        %549 = vdwg.mxu0
        %550 = vrot.lane.b32.xlu0 %v356, 120
        %v551 = vpop.permute.xlu0 %550
        %552 = vrot.lane.b32.xlu0 %v359, 120
        %v553 = vpop.permute.xlu0 %552
        %554 = vrot.lane.b32.xlu0 %v357, 120
        %v555 = vpop.permute.xlu0 %554
        %v556 = vsel %vm360, %v551, 0
        %v558 = vsel %vm360, %v553, 0
        %v560 = vsel %vm360, %v555, 0
        %562 = vmatprep.subr.mxu0 0.0
        %563 = vmatpush1.xpose.msra.mxu0 %v560
        %564 = vmatprep.subr.mxu0 0.0
        %565 = vmatpush1.xpose.msra.mxu0 0.0
        %566 = vmatprep.subr.mxu0 0.0
        %567 = vmatpush1.xpose.msra.mxu0 0.0
        %568 = vmatprep.subr.mxu0 0.0
        %569 = vmatpush1.xpose.msra.mxu0 0.0
        %570 = vmatprep.subr.mxu0 0.0
        %571 = vmatpush1.xpose.msra.mxu0 0.0
        %572 = vmatprep.subr.mxu0 0.0
        %573 = vmatpush1.xpose.msra.mxu0 0.0
        %574 = vmatprep.subr.mxu0 0.0
        %575 = vmatpush1.xpose.msra.mxu0 0.0
        %576 = vmatprep.subr.mxu0 0.0
        %577 = vmatpush1.xpose.msra.mxu0 0.0
        %578 = vmatprep.subr.mxu0 0.0
        %579 = vmatpush1.xpose.msra.mxu0 0.0
        %580 = vmatprep.subr.mxu0 0.0
        %581 = vmatpush1.xpose.msra.mxu0 0.0
        %582 = vmatprep.subr.mxu0 0.0
        %583 = vmatpush1.xpose.msra.mxu0 0.0
        %584 = vmatprep.subr.mxu0 0.0
        %585 = vmatpush1.xpose.msra.mxu0 0.0
        %586 = vmatprep.subr.mxu0 0.0
        %587 = vmatpush1.xpose.msra.mxu0 0.0
        %588 = vmatprep.subr.mxu0 0.0
        %589 = vmatpush1.xpose.msra.mxu0 0.0
        %590 = vmatprep.subr.mxu0 0.0
        %591 = vmatpush1.xpose.msra.mxu0 0.0
        %592 = vmatprep.subr.mxu0 0.0
        %593 = vmatpush1.xpose.msra.mxu0 0.0
        %594 = vmatprep.subr.mxu0 0.0
        %595 = vmatpush1.xpose.msra.mxu0 0.0
        %596 = vmatprep.subr.mxu0 0.0
        %597 = vmatpush1.xpose.msra.mxu0 0.0
        %598 = vmatprep.subr.mxu0 0.0
        %599 = vmatpush1.xpose.msra.mxu0 0.0
        %600 = vmatprep.subr.mxu0 0.0
        %601 = vmatpush1.xpose.msra.mxu0 0.0
        %602 = vmatprep.subr.mxu0 0.0
        %603 = vmatpush1.xpose.msra.mxu0 0.0
        %604 = vmatprep.subr.mxu0 0.0
        %605 = vmatpush1.xpose.msra.mxu0 0.0
        %606 = vmatprep.subr.mxu0 0.0
        %607 = vmatpush1.xpose.msra.mxu0 0.0
        %608 = vmatprep.subr.mxu0 0.0
        %609 = vmatpush1.xpose.msra.mxu0 0.0
        %610 = vmatprep.subr.mxu0 0.0
        %611 = vmatpush1.xpose.msra.mxu0 0.0
        %612 = vmatprep.subr.mxu0 0.0
        %613 = vmatpush1.xpose.msra.mxu0 0.0
        %614 = vmatprep.subr.mxu0 0.0
        %615 = vmatpush1.xpose.msra.mxu0 0.0
        %616 = vmatprep.subr.mxu0 0.0
        %617 = vmatpush1.xpose.msra.mxu0 0.0
        %618 = vmatprep.subr.mxu0 0.0
        %619 = vmatpush1.xpose.msra.mxu0 0.0
        %620 = vmatprep.subr.mxu0 0.0
        %621 = vmatpush1.xpose.msra.mxu0 0.0
        %622 = vmatprep.subr.mxu0 0.0
        %623 = vmatpush1.xpose.msra.mxu0 0.0
        %624 = vmatprep.subr.mxu0 0.0
        %625 = vmatpush1.xpose.msra.mxu0 0.0
        %626 = vmatprep.mubr.f32.mxu0 0.0
        %627 = vmatmul.mubr.f32.gmra.mrb[0].mxu0 %v556
        %v628 = vpop.f32.mrb[0].mxu0
        %v629 = vadd.f32 0.0, %v628
        %v630 = vpop.f32.mrb[0].mxu0
        %631 = vmatprep.mubr.f32.mxu0 0.0
        %632 = vmatmul.mubr.f32.gmra.mrb[0].mxu0 %v558
        %v633 = vpop.f32.mrb[0].mxu0
        %v634 = vadd.f32 0.0, %v633
        %v635 = vpop.f32.mrb[0].mxu0
        %636 = vdwg.mxu0
        %v637 = vmul.f32 %v629, 0.35355338
        %v638 = vmul.f32 %v634, 0.35355338
        %v639 = vsel %vm360, %v637, -inf
        %640 = vmax.xlane.f32.xlu0 %v639
        %v641 = vpop.xlane.xlu0 %640
        %v642 = vsel %vm360, %v638, -inf
        %643 = vmax.xlane.f32.xlu0 %v642
        %v644 = vpop.xlane.xlu0 %643
        %v645 = vsub.f32 %v637, %v641
        %v646 = vsub.f32 %v638, %v644
        %v647 = vmul.f32 %v645, 1.442695
        %v648 = vpow.pop %v647
        %v649 = vmul.f32 %v646, 1.442695
        %v650 = vpow.pop %v649
        %v651 = vsel %vm360, %v648, 0.0
        %652 = vadd.xlane.f32.xlu0 %v651
        %v653 = vpop.xlane.xlu0 %652
        %v654 = vsel %vm360, %v650, 0.0
        %655 = vadd.xlane.f32.xlu0 %v654
        %v656 = vpop.xlane.xlu0 %655
        %v657 = vrcp.pop %v653
        %v658 = vrcp.pop %v656
        %v659 = vmul.f32 %v648, %v657
        %v660 = vmul.f32 %v650, %v658
        %662 = vrot.lane.b32.xlu0 %v358, 120
        %v663 = vpop.permute.xlu0 %662
        %v666 = vsel %vm360, %v659, 0
        %v669 = vsel %vm360, %v660, 0
        %671 = vmatprep.subr.mxu0 0.0
        %672 = vmatpush1.msra.mxu0 %v663
        %673 = vmatprep.subr.mxu0 0.0
        %674 = vmatpush1.msra.mxu0 0.0
        %675 = vmatprep.subr.mxu0 0.0
        %676 = vmatpush1.msra.mxu0 0.0
        %677 = vmatprep.subr.mxu0 0.0
        %678 = vmatpush1.msra.mxu0 0.0
        %679 = vmatprep.subr.mxu0 0.0
        %680 = vmatpush1.msra.mxu0 0.0
        %681 = vmatprep.subr.mxu0 0.0
        %682 = vmatpush1.msra.mxu0 0.0
        %683 = vmatprep.subr.mxu0 0.0
        %684 = vmatpush1.msra.mxu0 0.0
        %685 = vmatprep.subr.mxu0 0.0
        %686 = vmatpush1.msra.mxu0 0.0
        %687 = vmatprep.subr.mxu0 0.0
        %688 = vmatpush1.msra.mxu0 0.0
        %689 = vmatprep.subr.mxu0 0.0
        %690 = vmatpush1.msra.mxu0 0.0
        %691 = vmatprep.subr.mxu0 0.0
        %692 = vmatpush1.msra.mxu0 0.0
        %693 = vmatprep.subr.mxu0 0.0
        %694 = vmatpush1.msra.mxu0 0.0
        %695 = vmatprep.subr.mxu0 0.0
        %696 = vmatpush1.msra.mxu0 0.0
        %697 = vmatprep.subr.mxu0 0.0
        %698 = vmatpush1.msra.mxu0 0.0
        %699 = vmatprep.subr.mxu0 0.0
        %700 = vmatpush1.msra.mxu0 0.0
        %701 = vmatprep.subr.mxu0 0.0
        %702 = vmatpush1.msra.mxu0 0.0
        %703 = vmatprep.subr.mxu0 0.0
        %704 = vmatpush1.msra.mxu0 0.0
        %705 = vmatprep.subr.mxu0 0.0
        %706 = vmatpush1.msra.mxu0 0.0
        %707 = vmatprep.subr.mxu0 0.0
        %708 = vmatpush1.msra.mxu0 0.0
        %709 = vmatprep.subr.mxu0 0.0
        %710 = vmatpush1.msra.mxu0 0.0
        %711 = vmatprep.subr.mxu0 0.0
        %712 = vmatpush1.msra.mxu0 0.0
        %713 = vmatprep.subr.mxu0 0.0
        %714 = vmatpush1.msra.mxu0 0.0
        %715 = vmatprep.subr.mxu0 0.0
        %716 = vmatpush1.msra.mxu0 0.0
        %717 = vmatprep.subr.mxu0 0.0
        %718 = vmatpush1.msra.mxu0 0.0
        %719 = vmatprep.subr.mxu0 0.0
        %720 = vmatpush1.msra.mxu0 0.0
        %721 = vmatprep.subr.mxu0 0.0
        %722 = vmatpush1.msra.mxu0 0.0
        %723 = vmatprep.subr.mxu0 0.0
        %724 = vmatpush1.msra.mxu0 0.0
        %725 = vmatprep.subr.mxu0 0.0
        %726 = vmatpush1.msra.mxu0 0.0
        %727 = vmatprep.subr.mxu0 0.0
        %728 = vmatpush1.msra.mxu0 0.0
        %729 = vmatprep.subr.mxu0 0.0
        %730 = vmatpush1.msra.mxu0 0.0
        %731 = vmatprep.subr.mxu0 0.0
        %732 = vmatpush1.msra.mxu0 0.0
        %733 = vmatprep.subr.mxu0 0.0
        %734 = vmatpush1.msra.mxu0 0.0
        %735 = vmatprep.mubr.f32.mxu0 0.0
        %736 = vmatmul.mubr.f32.gmra.mrb[0].mxu0 %v666
        %v737 = vpop.f32.mrb[0].mxu0
        %v738 = vadd.f32 0.0, %v737
        %v739 = vpop.f32.mrb[0].mxu0
        %740 = vmatprep.mubr.f32.mxu0 0.0
        %741 = vmatmul.mubr.f32.gmra.mrb[0].mxu0 %v669
        %v742 = vpop.f32.mrb[0].mxu0
        %v743 = vadd.f32 0.0, %v742
        %v744 = vpop.f32.mrb[0].mxu0
        %745 = vdwg.mxu0
        %746 = vrot.lane.b32.xlu0 %v356, 112
        %v747 = vpop.permute.xlu0 %746
        %748 = vrot.lane.b32.xlu0 %v359, 112
        %v749 = vpop.permute.xlu0 %748
        %750 = vrot.lane.b32.xlu0 %v357, 112
        %v751 = vpop.permute.xlu0 %750
        %v752 = vsel %vm360, %v747, 0
        %v754 = vsel %vm360, %v749, 0
        %v756 = vsel %vm360, %v751, 0
        %758 = vmatprep.subr.mxu0 0.0
        %759 = vmatpush1.xpose.msra.mxu0 %v756
        %760 = vmatprep.subr.mxu0 0.0
        %761 = vmatpush1.xpose.msra.mxu0 0.0
        %762 = vmatprep.subr.mxu0 0.0
        %763 = vmatpush1.xpose.msra.mxu0 0.0
        %764 = vmatprep.subr.mxu0 0.0
        %765 = vmatpush1.xpose.msra.mxu0 0.0
        %766 = vmatprep.subr.mxu0 0.0
        %767 = vmatpush1.xpose.msra.mxu0 0.0
        %768 = vmatprep.subr.mxu0 0.0
        %769 = vmatpush1.xpose.msra.mxu0 0.0
        %770 = vmatprep.subr.mxu0 0.0
        %771 = vmatpush1.xpose.msra.mxu0 0.0
        %772 = vmatprep.subr.mxu0 0.0
        %773 = vmatpush1.xpose.msra.mxu0 0.0
        %774 = vmatprep.subr.mxu0 0.0
        %775 = vmatpush1.xpose.msra.mxu0 0.0
        %776 = vmatprep.subr.mxu0 0.0
        %777 = vmatpush1.xpose.msra.mxu0 0.0
        %778 = vmatprep.subr.mxu0 0.0
        %779 = vmatpush1.xpose.msra.mxu0 0.0
        %780 = vmatprep.subr.mxu0 0.0
        %781 = vmatpush1.xpose.msra.mxu0 0.0
        %782 = vmatprep.subr.mxu0 0.0
        %783 = vmatpush1.xpose.msra.mxu0 0.0
        %784 = vmatprep.subr.mxu0 0.0
        %785 = vmatpush1.xpose.msra.mxu0 0.0
        %786 = vmatprep.subr.mxu0 0.0
        %787 = vmatpush1.xpose.msra.mxu0 0.0
        %788 = vmatprep.subr.mxu0 0.0
        %789 = vmatpush1.xpose.msra.mxu0 0.0
        %790 = vmatprep.subr.mxu0 0.0
        %791 = vmatpush1.xpose.msra.mxu0 0.0
        %792 = vmatprep.subr.mxu0 0.0
        %793 = vmatpush1.xpose.msra.mxu0 0.0
        %794 = vmatprep.subr.mxu0 0.0
        %795 = vmatpush1.xpose.msra.mxu0 0.0
        %796 = vmatprep.subr.mxu0 0.0
        %797 = vmatpush1.xpose.msra.mxu0 0.0
        %798 = vmatprep.subr.mxu0 0.0
        %799 = vmatpush1.xpose.msra.mxu0 0.0
        %800 = vmatprep.subr.mxu0 0.0
        %801 = vmatpush1.xpose.msra.mxu0 0.0
        %802 = vmatprep.subr.mxu0 0.0
        %803 = vmatpush1.xpose.msra.mxu0 0.0
        %804 = vmatprep.subr.mxu0 0.0
        %805 = vmatpush1.xpose.msra.mxu0 0.0
        %806 = vmatprep.subr.mxu0 0.0
        %807 = vmatpush1.xpose.msra.mxu0 0.0
        %808 = vmatprep.subr.mxu0 0.0
        %809 = vmatpush1.xpose.msra.mxu0 0.0
        %810 = vmatprep.subr.mxu0 0.0
        %811 = vmatpush1.xpose.msra.mxu0 0.0
        %812 = vmatprep.subr.mxu0 0.0
        %813 = vmatpush1.xpose.msra.mxu0 0.0
        %814 = vmatprep.subr.mxu0 0.0
        %815 = vmatpush1.xpose.msra.mxu0 0.0
        %816 = vmatprep.subr.mxu0 0.0
        %817 = vmatpush1.xpose.msra.mxu0 0.0
        %818 = vmatprep.subr.mxu0 0.0
        %819 = vmatpush1.xpose.msra.mxu0 0.0
        %820 = vmatprep.subr.mxu0 0.0
        %821 = vmatpush1.xpose.msra.mxu0 0.0
        %822 = vmatprep.mubr.f32.mxu0 0.0
        %823 = vmatmul.mubr.f32.gmra.mrb[0].mxu0 %v752
        %v824 = vpop.f32.mrb[0].mxu0
        %v825 = vadd.f32 0.0, %v824
        %v826 = vpop.f32.mrb[0].mxu0
        %827 = vmatprep.mubr.f32.mxu0 0.0
        %828 = vmatmul.mubr.f32.gmra.mrb[0].mxu0 %v754
        %v829 = vpop.f32.mrb[0].mxu0
        %v830 = vadd.f32 0.0, %v829
        %v831 = vpop.f32.mrb[0].mxu0
        %832 = vdwg.mxu0
        %v833 = vmul.f32 %v825, 0.35355338
        %v834 = vmul.f32 %v830, 0.35355338
        %v835 = vsel %vm360, %v833, -inf
        %836 = vmax.xlane.f32.xlu0 %v835
        %v837 = vpop.xlane.xlu0 %836
        %v838 = vsel %vm360, %v834, -inf
        %839 = vmax.xlane.f32.xlu0 %v838
        %v840 = vpop.xlane.xlu0 %839
        %v841 = vsub.f32 %v833, %v837
        %v842 = vsub.f32 %v834, %v840
        %v843 = vmul.f32 %v841, 1.442695
        %v844 = vpow.pop %v843
        %v845 = vmul.f32 %v842, 1.442695
        %v846 = vpow.pop %v845
        %v847 = vsel %vm360, %v844, 0.0
        %848 = vadd.xlane.f32.xlu0 %v847
        %v849 = vpop.xlane.xlu0 %848
        %v850 = vsel %vm360, %v846, 0.0
        %851 = vadd.xlane.f32.xlu0 %v850
        %v852 = vpop.xlane.xlu0 %851
        %v853 = vrcp.pop %v849
        %v854 = vrcp.pop %v852
        %v855 = vmul.f32 %v844, %v853
        %v856 = vmul.f32 %v846, %v854
        %857 = vrot.lane.b32.xlu0 %v358, 112
        %v858 = vpop.permute.xlu0 %857
        %v861 = vsel %vm360, %v855, 0
        %v864 = vsel %vm360, %v856, 0
        %866 = vmatprep.subr.mxu0 0.0
        %867 = vmatpush1.msra.mxu0 %v858
        %868 = vmatprep.subr.mxu0 0.0
        %869 = vmatpush1.msra.mxu0 0.0
        %870 = vmatprep.subr.mxu0 0.0
        %871 = vmatpush1.msra.mxu0 0.0
        %872 = vmatprep.subr.mxu0 0.0
        %873 = vmatpush1.msra.mxu0 0.0
        %874 = vmatprep.subr.mxu0 0.0
        %875 = vmatpush1.msra.mxu0 0.0
        %876 = vmatprep.subr.mxu0 0.0
        %877 = vmatpush1.msra.mxu0 0.0
        %878 = vmatprep.subr.mxu0 0.0
        %879 = vmatpush1.msra.mxu0 0.0
        %880 = vmatprep.subr.mxu0 0.0
        %881 = vmatpush1.msra.mxu0 0.0
        %882 = vmatprep.subr.mxu0 0.0
        %883 = vmatpush1.msra.mxu0 0.0
        %884 = vmatprep.subr.mxu0 0.0
        %885 = vmatpush1.msra.mxu0 0.0
        %886 = vmatprep.subr.mxu0 0.0
        %887 = vmatpush1.msra.mxu0 0.0
        %888 = vmatprep.subr.mxu0 0.0
        %889 = vmatpush1.msra.mxu0 0.0
        %890 = vmatprep.subr.mxu0 0.0
        %891 = vmatpush1.msra.mxu0 0.0
        %892 = vmatprep.subr.mxu0 0.0
        %893 = vmatpush1.msra.mxu0 0.0
        %894 = vmatprep.subr.mxu0 0.0
        %895 = vmatpush1.msra.mxu0 0.0
        %896 = vmatprep.subr.mxu0 0.0
        %897 = vmatpush1.msra.mxu0 0.0
        %898 = vmatprep.subr.mxu0 0.0
        %899 = vmatpush1.msra.mxu0 0.0
        %900 = vmatprep.subr.mxu0 0.0
        %901 = vmatpush1.msra.mxu0 0.0
        %902 = vmatprep.subr.mxu0 0.0
        %903 = vmatpush1.msra.mxu0 0.0
        %904 = vmatprep.subr.mxu0 0.0
        %905 = vmatpush1.msra.mxu0 0.0
        %906 = vmatprep.subr.mxu0 0.0
        %907 = vmatpush1.msra.mxu0 0.0
        %908 = vmatprep.subr.mxu0 0.0
        %909 = vmatpush1.msra.mxu0 0.0
        %910 = vmatprep.subr.mxu0 0.0
        %911 = vmatpush1.msra.mxu0 0.0
        %912 = vmatprep.subr.mxu0 0.0
        %913 = vmatpush1.msra.mxu0 0.0
        %914 = vmatprep.subr.mxu0 0.0
        %915 = vmatpush1.msra.mxu0 0.0
        %916 = vmatprep.subr.mxu0 0.0
        %917 = vmatpush1.msra.mxu0 0.0
        %918 = vmatprep.subr.mxu0 0.0
        %919 = vmatpush1.msra.mxu0 0.0
        %920 = vmatprep.subr.mxu0 0.0
        %921 = vmatpush1.msra.mxu0 0.0
        %922 = vmatprep.subr.mxu0 0.0
        %923 = vmatpush1.msra.mxu0 0.0
        %924 = vmatprep.subr.mxu0 0.0
        %925 = vmatpush1.msra.mxu0 0.0
        %926 = vmatprep.subr.mxu0 0.0
        %927 = vmatpush1.msra.mxu0 0.0
        %928 = vmatprep.subr.mxu0 0.0
        %929 = vmatpush1.msra.mxu0 0.0
        %930 = vmatprep.mubr.f32.mxu0 0.0
        %931 = vmatmul.mubr.f32.gmra.mrb[0].mxu0 %v861
        %v932 = vpop.f32.mrb[0].mxu0
        %v933 = vadd.f32 0.0, %v932
        %v934 = vpop.f32.mrb[0].mxu0
        %935 = vmatprep.mubr.f32.mxu0 0.0
        %936 = vmatmul.mubr.f32.gmra.mrb[0].mxu0 %v864
        %v937 = vpop.f32.mrb[0].mxu0
        %v938 = vadd.f32 0.0, %v937
        %v939 = vpop.f32.mrb[0].mxu0
        %940 = vdwg.mxu0
        %941 = vrot.lane.b32.xlu0 %v356, 104
        %v942 = vpop.permute.xlu0 %941
        %943 = vrot.lane.b32.xlu0 %v359, 104
        %v944 = vpop.permute.xlu0 %943
        %945 = vrot.lane.b32.xlu0 %v357, 104
        %v946 = vpop.permute.xlu0 %945
        %v947 = vsel %vm360, %v942, 0
        %v949 = vsel %vm360, %v944, 0
        %v951 = vsel %vm360, %v946, 0
        %953 = vmatprep.subr.mxu0 0.0
        %954 = vmatpush1.xpose.msra.mxu0 %v951
        %955 = vmatprep.subr.mxu0 0.0
        %956 = vmatpush1.xpose.msra.mxu0 0.0
        %957 = vmatprep.subr.mxu0 0.0
        %958 = vmatpush1.xpose.msra.mxu0 0.0
        %959 = vmatprep.subr.mxu0 0.0
        %960 = vmatpush1.xpose.msra.mxu0 0.0
        %961 = vmatprep.subr.mxu0 0.0
        %962 = vmatpush1.xpose.msra.mxu0 0.0
        %963 = vmatprep.subr.mxu0 0.0
        %964 = vmatpush1.xpose.msra.mxu0 0.0
        %965 = vmatprep.subr.mxu0 0.0
        %966 = vmatpush1.xpose.msra.mxu0 0.0
        %967 = vmatprep.subr.mxu0 0.0
        %968 = vmatpush1.xpose.msra.mxu0 0.0
        %969 = vmatprep.subr.mxu0 0.0
        %970 = vmatpush1.xpose.msra.mxu0 0.0
        %971 = vmatprep.subr.mxu0 0.0
        %972 = vmatpush1.xpose.msra.mxu0 0.0
        %973 = vmatprep.subr.mxu0 0.0
        %974 = vmatpush1.xpose.msra.mxu0 0.0
        %975 = vmatprep.subr.mxu0 0.0
        %976 = vmatpush1.xpose.msra.mxu0 0.0
        %977 = vmatprep.subr.mxu0 0.0
        %978 = vmatpush1.xpose.msra.mxu0 0.0
        %979 = vmatprep.subr.mxu0 0.0
        %980 = vmatpush1.xpose.msra.mxu0 0.0
        %981 = vmatprep.subr.mxu0 0.0
        %982 = vmatpush1.xpose.msra.mxu0 0.0
        %983 = vmatprep.subr.mxu0 0.0
        %984 = vmatpush1.xpose.msra.mxu0 0.0
        %985 = vmatprep.subr.mxu0 0.0
        %986 = vmatpush1.xpose.msra.mxu0 0.0
        %987 = vmatprep.subr.mxu0 0.0
        %988 = vmatpush1.xpose.msra.mxu0 0.0
        %989 = vmatprep.subr.mxu0 0.0
        %990 = vmatpush1.xpose.msra.mxu0 0.0
        %991 = vmatprep.subr.mxu0 0.0
        %992 = vmatpush1.xpose.msra.mxu0 0.0
        %993 = vmatprep.subr.mxu0 0.0
        %994 = vmatpush1.xpose.msra.mxu0 0.0
        %995 = vmatprep.subr.mxu0 0.0
        %996 = vmatpush1.xpose.msra.mxu0 0.0
        %997 = vmatprep.subr.mxu0 0.0
        %998 = vmatpush1.xpose.msra.mxu0 0.0
        %999 = vmatprep.subr.mxu0 0.0
        %1000 = vmatpush1.xpose.msra.mxu0 0.0
        %1001 = vmatprep.subr.mxu0 0.0
        %1002 = vmatpush1.xpose.msra.mxu0 0.0
        %1003 = vmatprep.subr.mxu0 0.0
        %1004 = vmatpush1.xpose.msra.mxu0 0.0
        %1005 = vmatprep.subr.mxu0 0.0
        %1006 = vmatpush1.xpose.msra.mxu0 0.0
        %1007 = vmatprep.subr.mxu0 0.0
        %1008 = vmatpush1.xpose.msra.mxu0 0.0
        %1009 = vmatprep.subr.mxu0 0.0
        %1010 = vmatpush1.xpose.msra.mxu0 0.0
        %1011 = vmatprep.subr.mxu0 0.0
        %1012 = vmatpush1.xpose.msra.mxu0 0.0
        %1013 = vmatprep.subr.mxu0 0.0
        %1014 = vmatpush1.xpose.msra.mxu0 0.0
        %1015 = vmatprep.subr.mxu0 0.0
        %1016 = vmatpush1.xpose.msra.mxu0 0.0
        %1017 = vmatprep.mubr.f32.mxu0 0.0
        %1018 = vmatmul.mubr.f32.gmra.mrb[0].mxu0 %v947
        %v1019 = vpop.f32.mrb[0].mxu0
        %v1020 = vadd.f32 0.0, %v1019
        %v1021 = vpop.f32.mrb[0].mxu0
        %1022 = vmatprep.mubr.f32.mxu0 0.0
        %1023 = vmatmul.mubr.f32.gmra.mrb[0].mxu0 %v949
        %v1024 = vpop.f32.mrb[0].mxu0
        %v1025 = vadd.f32 0.0, %v1024
        %v1026 = vpop.f32.mrb[0].mxu0
        %1027 = vdwg.mxu0
        %v1028 = vmul.f32 %v1020, 0.35355338
        %v1029 = vmul.f32 %v1025, 0.35355338
        %v1030 = vsel %vm360, %v1028, -inf
        %1031 = vmax.xlane.f32.xlu0 %v1030
        %v1032 = vpop.xlane.xlu0 %1031
        %v1033 = vsel %vm360, %v1029, -inf
        %1034 = vmax.xlane.f32.xlu0 %v1033
        %v1035 = vpop.xlane.xlu0 %1034
        %v1036 = vsub.f32 %v1028, %v1032
        %v1037 = vsub.f32 %v1029, %v1035
        %v1038 = vmul.f32 %v1036, 1.442695
        %v1039 = vpow.pop %v1038
        %v1040 = vmul.f32 %v1037, 1.442695
        %v1041 = vpow.pop %v1040
        %v1042 = vsel %vm360, %v1039, 0.0
        %1043 = vadd.xlane.f32.xlu0 %v1042
        %v1044 = vpop.xlane.xlu0 %1043
        %v1045 = vsel %vm360, %v1041, 0.0
        %1046 = vadd.xlane.f32.xlu0 %v1045
        %v1047 = vpop.xlane.xlu0 %1046
        %v1048 = vrcp.pop %v1044
        %v1049 = vrcp.pop %v1047
        %v1050 = vmul.f32 %v1039, %v1048
        %v1051 = vmul.f32 %v1041, %v1049
        %1052 = vrot.lane.b32.xlu0 %v358, 104
        %v1053 = vpop.permute.xlu0 %1052
        %v1056 = vsel %vm360, %v1050, 0
        %v1059 = vsel %vm360, %v1051, 0
        %1061 = vmatprep.subr.mxu0 0.0
        %1062 = vmatpush1.msra.mxu0 %v1053
        %1063 = vmatprep.subr.mxu0 0.0
        %1064 = vmatpush1.msra.mxu0 0.0
        %1065 = vmatprep.subr.mxu0 0.0
        %1066 = vmatpush1.msra.mxu0 0.0
        %1067 = vmatprep.subr.mxu0 0.0
        %1068 = vmatpush1.msra.mxu0 0.0
        %1069 = vmatprep.subr.mxu0 0.0
        %1070 = vmatpush1.msra.mxu0 0.0
        %1071 = vmatprep.subr.mxu0 0.0
        %1072 = vmatpush1.msra.mxu0 0.0
        %1073 = vmatprep.subr.mxu0 0.0
        %1074 = vmatpush1.msra.mxu0 0.0
        %1075 = vmatprep.subr.mxu0 0.0
        %1076 = vmatpush1.msra.mxu0 0.0
        %1077 = vmatprep.subr.mxu0 0.0
        %1078 = vmatpush1.msra.mxu0 0.0
        %1079 = vmatprep.subr.mxu0 0.0
        %1080 = vmatpush1.msra.mxu0 0.0
        %1081 = vmatprep.subr.mxu0 0.0
        %1082 = vmatpush1.msra.mxu0 0.0
        %1083 = vmatprep.subr.mxu0 0.0
        %1084 = vmatpush1.msra.mxu0 0.0
        %1085 = vmatprep.subr.mxu0 0.0
        %1086 = vmatpush1.msra.mxu0 0.0
        %1087 = vmatprep.subr.mxu0 0.0
        %1088 = vmatpush1.msra.mxu0 0.0
        %1089 = vmatprep.subr.mxu0 0.0
        %1090 = vmatpush1.msra.mxu0 0.0
        %1091 = vmatprep.subr.mxu0 0.0
        %1092 = vmatpush1.msra.mxu0 0.0
        %1093 = vmatprep.subr.mxu0 0.0
        %1094 = vmatpush1.msra.mxu0 0.0
        %1095 = vmatprep.subr.mxu0 0.0
        %1096 = vmatpush1.msra.mxu0 0.0
        %1097 = vmatprep.subr.mxu0 0.0
        %1098 = vmatpush1.msra.mxu0 0.0
        %1099 = vmatprep.subr.mxu0 0.0
        %1100 = vmatpush1.msra.mxu0 0.0
        %1101 = vmatprep.subr.mxu0 0.0
        %1102 = vmatpush1.msra.mxu0 0.0
        %1103 = vmatprep.subr.mxu0 0.0
        %1104 = vmatpush1.msra.mxu0 0.0
        %1105 = vmatprep.subr.mxu0 0.0
        %1106 = vmatpush1.msra.mxu0 0.0
        %1107 = vmatprep.subr.mxu0 0.0
        %1108 = vmatpush1.msra.mxu0 0.0
        %1109 = vmatprep.subr.mxu0 0.0
        %1110 = vmatpush1.msra.mxu0 0.0
        %1111 = vmatprep.subr.mxu0 0.0
        %1112 = vmatpush1.msra.mxu0 0.0
        %1113 = vmatprep.subr.mxu0 0.0
        %1114 = vmatpush1.msra.mxu0 0.0
        %1115 = vmatprep.subr.mxu0 0.0
        %1116 = vmatpush1.msra.mxu0 0.0
        %1117 = vmatprep.subr.mxu0 0.0
        %1118 = vmatpush1.msra.mxu0 0.0
        %1119 = vmatprep.subr.mxu0 0.0
        %1120 = vmatpush1.msra.mxu0 0.0
        %1121 = vmatprep.subr.mxu0 0.0
        %1122 = vmatpush1.msra.mxu0 0.0
        %1123 = vmatprep.subr.mxu0 0.0
        %1124 = vmatpush1.msra.mxu0 0.0
        %1125 = vmatprep.mubr.f32.mxu0 0.0
        %1126 = vmatmul.mubr.f32.gmra.mrb[0].mxu0 %v1056
        %v1127 = vpop.f32.mrb[0].mxu0
        %v1128 = vadd.f32 0.0, %v1127
        %v1129 = vpop.f32.mrb[0].mxu0
        %1130 = vmatprep.mubr.f32.mxu0 0.0
        %1131 = vmatmul.mubr.f32.gmra.mrb[0].mxu0 %v1059
        %v1132 = vpop.f32.mrb[0].mxu0
        %v1133 = vadd.f32 0.0, %v1132
        %v1134 = vpop.f32.mrb[0].mxu0
        %1135 = vdwg.mxu0
        %1137 = vrot.lane.b32.xlu0 %v738, 8
        %v1138 = vpop.permute.xlu0 %1137
        %1141 = vrot.lane.b32.xlu0 %v933, 16
        %v1142 = vpop.permute.xlu0 %1141
        %1145 = vrot.lane.b32.xlu0 %v1128, 24
        %v1146 = vpop.permute.xlu0 %1145
        %v1148 = vsel %vm360, %v542, %v1138
        %vm1149 = vcmask 130048
        %v1150 = vsel %vm1149, %v1148, %v1142
        %vm1151 = vcmask 195584
        %v1152 = vsel %vm1151, %v1150, %v1146
        %1154 = vrot.lane.b32.xlu0 %v743, 8
        %v1155 = vpop.permute.xlu0 %1154
        %1158 = vrot.lane.b32.xlu0 %v938, 16
        %v1159 = vpop.permute.xlu0 %1158
        %1162 = vrot.lane.b32.xlu0 %v1133, 24
        %v1163 = vpop.permute.xlu0 %1162
        %v1165 = vsel %vm360, %v547, %v1155
        %v1166 = vsel %vm1149, %v1165, %v1159
        %v1167 = vsel %vm1151, %v1166, %v1163
        %vm1168 = vcmask 261120
        %1169 = vst.msk [vmem:[%s351] sm:$0xff] %vm1168, %v1152
        %1170 = vst.msk [vmem:[%s355] sm:$0xff] %vm1168, %v1167
        %1171 = vst.msk [vmem:[%s324] sm:$0xff] %vm360, %v467
        %1172 = vst.msk [vmem:[%s331] sm:$0xff] %vm360, %v468
        %s1173 = scalar_lea.vmem %s324, 8 [#allocation2]
        %1174 = vst.msk [vmem:[%s1173] sm:$0xff] %vm360, %v659
        %s1175 = scalar_lea.vmem %s331, 8 [#allocation4]
        %1176 = vst.msk [vmem:[%s1175] sm:$0xff] %vm360, %v660
        %s1177 = scalar_lea.vmem %s324, 16 [#allocation2]
        %1178 = vst.msk [vmem:[%s1177] sm:$0xff] %vm360, %v855
        %s1179 = scalar_lea.vmem %s331, 16 [#allocation4]
        %1180 = vst.msk [vmem:[%s1179] sm:$0xff] %vm360, %v856
        %s1181 = scalar_lea.vmem %s324, 24 [#allocation2]
        %1182 = vst.msk [vmem:[%s1181] sm:$0xff] %vm360, %v1050
        %s1183 = scalar_lea.vmem %s331, 24 [#allocation4]
        %1184 = vst.msk [vmem:[%s1183] sm:$0xff] %vm360, %v1051
        %p1185 = scmp.lt.s32.totalorder %s25, 1
        %s1186 = scalar_select %p1185, %s25, 1
        %s1187 = smul.addr %s1186, 8
        %s1188 = scalar_lea.vmem %s4, %s1187
        %p1189 = scmp.lt.s32.totalorder %s25, 1
        %s1190 = scalar_select %p1189, %s25, 1
        %s1191 = smul.addr %s1190, 8
        %s1192 = scalar_lea.vmem %s5, %s1191
        %s1193 = sand.u32 %s189, 1
        %s1194 = scalar_lea.sflag [#allocation3], %s1193
        %s1195 = sand.u32 %s189, 1
        %s1196 = smul.addr %s1195, 32
        %s1197 = scalar_lea.vmem [#allocation2], %s1196
        %s1198 = sand.u32 %s215, 1
        %s1199 = scalar_lea.sflag [#allocation5], %s1198
        %s1200 = sand.u32 %s215, 1
        %s1201 = smul.addr %s1200, 32
        %s1202 = scalar_lea.vmem [#allocation4], %s1201
        // Predicated region
        $region37: #{attention_forward.8} parent=35 // pred_check
          %p1203 = pneg %p147
        $region38: #{attention_forward.8} parent=35 // pred_check_branch
          %1205 = sbr.rel (%p1203) target = $region40
        $region39: #{attention_forward.8} parent=35 // pred_region
          _
        $region40: #{attention_forward.8} parent=35 // pred_fallthru
          _
        // Predicated region
        $region41: #{attention_forward.8} parent=35 // pred_check
          %p1206 = pneg %p173
        $region42: #{attention_forward.8} parent=35 // pred_check_branch
          %1208 = sbr.rel (%p1206) target = $region44
        $region43: #{attention_forward.8} parent=35 // pred_region
          _
        $region44: #{attention_forward.8} parent=35 // pred_fallthru
          _
        // Predicated region
        $region45: #{attention_forward.8} parent=35 // pred_check
          %p1209 = pneg %p199
        $region46: #{attention_forward.8} parent=35 // pred_check_branch
          %1211 = sbr.rel (%p1209) target = $region48
        $region47: #{attention_forward.8} parent=35 // pred_region
          %s1213 = ssub.s32 512, 512
          %1214 = vsyncadd %s1194, %s1213
          %s1215 = smul.addr %s25, 4
          %s1216 = smul.addr %s1215, 128
          %s1217 = scalar_lea.hbm %s6, %s1216
          %s1218 = sshll.u32 %s1197, 4
          %s1219 = int_to_ptr.vmem [resolvable:$true] %s1218
          %1224 = dma.vmem_to_hbm [thread:$0]  %s1219, 512, %s1217, %s1194, 128, 128, 8
        $region48: #{attention_forward.8} parent=35 // pred_fallthru
          _
        // Predicated region
        $region49: #{attention_forward.8} parent=35 // pred_check
          %p1225 = pneg %p225
        $region50: #{attention_forward.8} parent=35 // pred_check_branch
          %1227 = sbr.rel (%p1225) target = $region52
        $region51: #{attention_forward.8} parent=35 // pred_region
          %s1229 = ssub.s32 512, 512
          %1230 = vsyncadd %s1199, %s1229
          %s1231 = smul.addr %s25, 4
          %s1232 = smul.addr %s1231, 128
          %s1233 = scalar_lea.hbm %s7, %s1232
          %s1234 = sshll.u32 %s1202, 4
          %s1235 = int_to_ptr.vmem [resolvable:$true] %s1234
          %1240 = dma.vmem_to_hbm [thread:$0]  %s1235, 512, %s1233, %s1199, 128, 128, 8
        $region52: #{attention_forward.8} parent=35 // pred_fallthru
          _
      $region36: #{attention_forward.8} parent=5 // pred_fallthru
        _
      %p1241 = scmp.le.s32.totalorder 2, %s20
      // Predicated region
      $region53: #{attention_forward.8} parent=5 // pred_check
        %p1242 = pneg %p1241
      $region54: #{attention_forward.8} parent=5 // pred_check_branch
        %1244 = sbr.rel (%p1242) target = $region56
      $region55: #{attention_forward.8} parent=5 // pred_region
        %s1245 = ssub.s32 %s20, 2
        // Predicated region
        $region57: #{attention_forward.8} parent=55 // pred_check
          %p1246 = pneg %p153
        $region58: #{attention_forward.8} parent=55 // pred_check_branch
          %1248 = sbr.rel (%p1246) target = $region60
        $region59: #{attention_forward.8} parent=55 // pred_region
          %p1249 = scmp.lt.s32.totalorder %s26, 1
          %s1250 = scalar_select %p1249, %s26, 1
          %s1251 = smul.addr %s1250, 8
          %s1252 = scalar_lea.vmem %s4, %s1251
        $region60: #{attention_forward.8} parent=55 // pred_fallthru
          _
        // Predicated region
        $region61: #{attention_forward.8} parent=55 // pred_check
          %p1253 = pneg %p179
        $region62: #{attention_forward.8} parent=55 // pred_check_branch
          %1255 = sbr.rel (%p1253) target = $region64
        $region63: #{attention_forward.8} parent=55 // pred_region
          %p1256 = scmp.lt.s32.totalorder %s26, 1
          %s1257 = scalar_select %p1256, %s26, 1
          %s1258 = smul.addr %s1257, 8
          %s1259 = scalar_lea.vmem %s5, %s1258
        $region64: #{attention_forward.8} parent=55 // pred_fallthru
          _
        // Predicated region
        $region65: #{attention_forward.8} parent=55 // pred_check
          %p1260 = pneg %p205
        $region66: #{attention_forward.8} parent=55 // pred_check_branch
          %1262 = sbr.rel (%p1260) target = $region68
        $region67: #{attention_forward.8} parent=55 // pred_region
          %s1263 = sand.u32 %s190, 1
          %s1264 = scalar_lea.sflag [#allocation3], %s1263
          %s1265 = sand.u32 %s190, 1
          %s1266 = smul.addr %s1265, 32
          %s1267 = scalar_lea.vmem [#allocation2], %s1266
          %1268 = dma.done %s1264, 512
        $region68: #{attention_forward.8} parent=55 // pred_fallthru
          _
        // Predicated region
        $region69: #{attention_forward.8} parent=55 // pred_check
          %p1269 = pneg %p231
        $region70: #{attention_forward.8} parent=55 // pred_check_branch
          %1271 = sbr.rel (%p1269) target = $region72
        $region71: #{attention_forward.8} parent=55 // pred_region
          %s1272 = sand.u32 %s216, 1
          %s1273 = scalar_lea.sflag [#allocation5], %s1272
          %s1274 = sand.u32 %s216, 1
          %s1275 = smul.addr %s1274, 32
          %s1276 = scalar_lea.vmem [#allocation4], %s1275
          %1277 = dma.done %s1273, 512
        $region72: #{attention_forward.8} parent=55 // pred_fallthru
          _
      $region56: #{attention_forward.8} parent=5 // pred_fallthru
        _
    $region6: #{attention_forward.8} parent=1 // loop_footer
      %s24 = sadd.s32 1, %s20
    $region7: #{attention_forward.8} parent=1 // loop_footer_branch
      %19 = sbr.rel target = $region3
    $region8: #{attention_forward.8} parent=1 // loop_exit
      _
    %1278 = vsyncpa [#allocation3], 1
    %s1279 = scalar_lea.sflag [#allocation3], 1
    %1280 = vsyncpa %s1279, 1
    %1281 = vsyncpa [#allocation5], 1
    %s1282 = scalar_lea.sflag [#allocation5], 1
    %1283 = vsyncpa %s1282, 1

// kernel: attention_forward.10
$region0: #{attention_forward.10}
  #allocation0 [shape = 'u32[]', space=smem, size = 0x4, offset = 0x4, fixed_abs, tag = 'smem constant byte address 0x4 - core index']
  #allocation1 [shape = 'u32[144,128]{1,0:T(1,128)}', space=vmem, size = 0x12000, scoped, tag = 'internal scratch']
  %s0 = inlined_call_operand.vmem [shape: f32[2,8,32], index: 0, kind: input, shape index: {}]
  %s1 = inlined_call_operand.vmem [shape: f32[2,8,32], index: 1, kind: input, shape index: {}]
  %s2 = inlined_call_operand.vmem [shape: f32[2,8,32], index: 2, kind: input, shape index: {}]
  %s3 = inlined_call_operand.vmem [shape: f32[2,8,32], index: 3, kind: input, shape index: {}]
  %s4 = inlined_call_operand.vmem [shape: f32[2,8,32], index: 4, kind: output, shape index: {0}]
  %s5 = inlined_call_operand.vmem [shape: f32[2,8,32], index: 5, kind: output, shape index: {1}]
  %6 = xla_tuple %s4, %s5
  %s7 = sld [smem:[#allocation0]]
  $region57: #{attention_forward.10} parent=0
    _
  %s9 = ssub.s32 1, %s7
  %s10 = scalar_select 0, %s9, %s7
  loop: start=0, step=1, limit=4
  $region2: #{attention_forward.10} parent=0 // loop_pre_header
    _
  $region3: #{attention_forward.10} parent=0 // loop_header
    %s12 = sphi 0, %s16
    %p13 = scmp.ge.s32.totalorder %s12, 4
    %s22 = sphi 0, %s24
    %s25 = sphi 0, %s22
    %s26 = sphi 0, %s25
    %s42 = sphi 0, %s26
    %s48 = sphi 0, %s50
    %s51 = sphi 0, %s48
    %s52 = sphi 0, %s51
    %s68 = sphi 0, %s52
    %s74 = sphi 0, %s76
    %s77 = sphi 0, %s74
    %s78 = sphi 0, %s77
    %s94 = sphi 0, %s78
    %s100 = sphi 0, %s102
    %s103 = sphi 0, %s100
    %s104 = sphi 0, %s103
    %s120 = sphi 0, %s104
    %s126 = sphi 0, %s128
    %s129 = sphi 0, %s126
    %s130 = sphi 0, %s129
    %s146 = sphi 0, %s130
    %s152 = sphi 0, %s154
    %s155 = sphi 0, %s152
    %s156 = sphi 0, %s155
    %s172 = sphi 0, %s156
  $region4: #{attention_forward.10} parent=0 // loop_header_branch
    %15 = sbr.rel (%p13) target = $region8
  $region5: #{attention_forward.10} parent=0 // loop_body
    %s17 = ssub.s32 %s12, 1
    %s18 = ssub.s32 %s12, 2
    %s19 = sadd.s32 %s12, 1
    %s20 = ssub.s32 %s12, %s19
    %p21 = scmp.eq.s32.totalorder %s20, 0
    %s23 = sadd.s32 %s22, 1
    %s24 = scalar_select %p21, %s22, %s23
    %p27 = pneg %p21
    %p28 = scmp.eq.s32.totalorder %s12, 1
    %p29 = por %p27, %p28
    %p30 = scmp.ne.s32.totalorder %s22, %s25
    %p31 = scmp.eq.s32.totalorder %s12, 0
    %p32 = por %p30, %p31
    %p33 = scmp.ne.s32.totalorder %s22, %s25
    %p34 = scmp.eq.s32.totalorder %s17, 1
    %p35 = por %p33, %p34
    %p36 = scmp.ne.s32.totalorder %s25, %s26
    %p37 = scmp.eq.s32.totalorder %s17, 0
    %p38 = por %p36, %p37
    %p39 = scmp.ne.s32.totalorder %s25, %s26
    %p40 = scmp.eq.s32.totalorder %s18, 1
    %p41 = por %p39, %p40
    %p43 = scmp.ne.s32.totalorder %s26, %s42
    %p44 = scmp.eq.s32.totalorder %s18, 0
    %p45 = por %p43, %p44
    %s46 = ssub.s32 %s12, %s19
    %p47 = scmp.eq.s32.totalorder %s46, 0
    %s49 = sadd.s32 %s48, 1
    %s50 = scalar_select %p47, %s48, %s49
    %p53 = pneg %p47
    %p54 = scmp.eq.s32.totalorder %s12, 1
    %p55 = por %p53, %p54
    %p56 = scmp.ne.s32.totalorder %s48, %s51
    %p57 = scmp.eq.s32.totalorder %s12, 0
    %p58 = por %p56, %p57
    %p59 = scmp.ne.s32.totalorder %s48, %s51
    %p60 = scmp.eq.s32.totalorder %s17, 1
    %p61 = por %p59, %p60
    %p62 = scmp.ne.s32.totalorder %s51, %s52
    %p63 = scmp.eq.s32.totalorder %s17, 0
    %p64 = por %p62, %p63
    %p65 = scmp.ne.s32.totalorder %s51, %s52
    %p66 = scmp.eq.s32.totalorder %s18, 1
    %p67 = por %p65, %p66
    %p69 = scmp.ne.s32.totalorder %s52, %s68
    %p70 = scmp.eq.s32.totalorder %s18, 0
    %p71 = por %p69, %p70
    %s72 = ssub.s32 %s12, %s19
    %p73 = scmp.eq.s32.totalorder %s72, 0
    %s75 = sadd.s32 %s74, 1
    %s76 = scalar_select %p73, %s74, %s75
    %p79 = pneg %p73
    %p80 = scmp.eq.s32.totalorder %s12, 1
    %p81 = por %p79, %p80
    %p82 = scmp.ne.s32.totalorder %s74, %s77
    %p83 = scmp.eq.s32.totalorder %s12, 0
    %p84 = por %p82, %p83
    %p85 = scmp.ne.s32.totalorder %s74, %s77
    %p86 = scmp.eq.s32.totalorder %s17, 1
    %p87 = por %p85, %p86
    %p88 = scmp.ne.s32.totalorder %s77, %s78
    %p89 = scmp.eq.s32.totalorder %s17, 0
    %p90 = por %p88, %p89
    %p91 = scmp.ne.s32.totalorder %s77, %s78
    %p92 = scmp.eq.s32.totalorder %s18, 1
    %p93 = por %p91, %p92
    %p95 = scmp.ne.s32.totalorder %s78, %s94
    %p96 = scmp.eq.s32.totalorder %s18, 0
    %p97 = por %p95, %p96
    %s98 = ssub.s32 %s12, %s19
    %p99 = scmp.eq.s32.totalorder %s98, 0
    %s101 = sadd.s32 %s100, 1
    %s102 = scalar_select %p99, %s100, %s101
    %p105 = pneg %p99
    %p106 = scmp.eq.s32.totalorder %s12, 1
    %p107 = por %p105, %p106
    %p108 = scmp.ne.s32.totalorder %s100, %s103
    %p109 = scmp.eq.s32.totalorder %s12, 0
    %p110 = por %p108, %p109
    %p111 = scmp.ne.s32.totalorder %s100, %s103
    %p112 = scmp.eq.s32.totalorder %s17, 1
    %p113 = por %p111, %p112
    %p114 = scmp.ne.s32.totalorder %s103, %s104
    %p115 = scmp.eq.s32.totalorder %s17, 0
    %p116 = por %p114, %p115
    %p117 = scmp.ne.s32.totalorder %s103, %s104
    %p118 = scmp.eq.s32.totalorder %s18, 1
    %p119 = por %p117, %p118
    %p121 = scmp.ne.s32.totalorder %s104, %s120
    %p122 = scmp.eq.s32.totalorder %s18, 0
    %p123 = por %p121, %p122
    %s124 = ssub.s32 %s12, %s19
    %p125 = scmp.eq.s32.totalorder %s124, 0
    %s127 = sadd.s32 %s126, 1
    %s128 = scalar_select %p125, %s126, %s127
    %p131 = pneg %p125
    %p132 = scmp.eq.s32.totalorder %s12, 1
    %p133 = por %p131, %p132
    %p134 = scmp.ne.s32.totalorder %s126, %s129
    %p135 = scmp.eq.s32.totalorder %s12, 0
    %p136 = por %p134, %p135
    %p137 = scmp.ne.s32.totalorder %s126, %s129
    %p138 = scmp.eq.s32.totalorder %s17, 1
    %p139 = por %p137, %p138
    %p140 = scmp.ne.s32.totalorder %s129, %s130
    %p141 = scmp.eq.s32.totalorder %s17, 0
    %p142 = por %p140, %p141
    %p143 = scmp.ne.s32.totalorder %s129, %s130
    %p144 = scmp.eq.s32.totalorder %s18, 1
    %p145 = por %p143, %p144
    %p147 = scmp.ne.s32.totalorder %s130, %s146
    %p148 = scmp.eq.s32.totalorder %s18, 0
    %p149 = por %p147, %p148
    %s150 = ssub.s32 %s12, %s19
    %p151 = scmp.eq.s32.totalorder %s150, 0
    %s153 = sadd.s32 %s152, 1
    %s154 = scalar_select %p151, %s152, %s153
    %p157 = pneg %p151
    %p158 = scmp.eq.s32.totalorder %s12, 1
    %p159 = por %p157, %p158
    %p160 = scmp.ne.s32.totalorder %s152, %s155
    %p161 = scmp.eq.s32.totalorder %s12, 0
    %p162 = por %p160, %p161
    %p163 = scmp.ne.s32.totalorder %s152, %s155
    %p164 = scmp.eq.s32.totalorder %s17, 1
    %p165 = por %p163, %p164
    %p166 = scmp.ne.s32.totalorder %s155, %s156
    %p167 = scmp.eq.s32.totalorder %s17, 0
    %p168 = por %p166, %p167
    %p169 = scmp.ne.s32.totalorder %s155, %s156
    %p170 = scmp.eq.s32.totalorder %s18, 1
    %p171 = por %p169, %p170
    %p173 = scmp.ne.s32.totalorder %s156, %s172
    %p174 = scmp.eq.s32.totalorder %s18, 0
    %p175 = por %p173, %p174
    %p176 = scmp.le.s32.totalorder 1, %s12
    %p177 = scmp.lt.s32.totalorder %s12, 3
    %p178 = pnand %p176, %p177
    %p179 = pneg %p178
    // Predicated region
    $region9: #{attention_forward.10} parent=5 // pred_check
      _
    $region10: #{attention_forward.10} parent=5 // pred_check_branch
      %181 = sbr.rel (%p178) target = $region12
    $region11: #{attention_forward.10} parent=5 // pred_region
      %s182 = ssub.s32 %s12, 1
    $region12: #{attention_forward.10} parent=5 // pred_fallthru
      _
    %p183 = scmp.lt.s32.totalorder %s12, 2
    // Predicated region
    $region13: #{attention_forward.10} parent=5 // pred_check
      %p184 = pneg %p183
    $region14: #{attention_forward.10} parent=5 // pred_check_branch
      %186 = sbr.rel (%p184) target = $region16
    $region15: #{attention_forward.10} parent=5 // pred_region
      // Predicated region
      $region17: #{attention_forward.10} parent=15 // pred_check
        %p187 = pneg %p32
      $region18: #{attention_forward.10} parent=15 // pred_check_branch
        %189 = sbr.rel (%p187) target = $region20
      $region19: #{attention_forward.10} parent=15 // pred_region
        %p190 = scmp.lt.s32.totalorder %s12, 1
        %s191 = scalar_select %p190, %s12, 1
        %s192 = smul.addr %s191, 8
        %s193 = scalar_lea.vmem %s0, %s192
      $region20: #{attention_forward.10} parent=15 // pred_fallthru
        _
      // Predicated region
      $region21: #{attention_forward.10} parent=15 // pred_check
        %p194 = pneg %p58
      $region22: #{attention_forward.10} parent=15 // pred_check_branch
        %196 = sbr.rel (%p194) target = $region24
      $region23: #{attention_forward.10} parent=15 // pred_region
        %p197 = scmp.lt.s32.totalorder %s12, 1
        %s198 = scalar_select %p197, %s12, 1
        %s199 = smul.addr %s198, 8
        %s200 = scalar_lea.vmem %s1, %s199
      $region24: #{attention_forward.10} parent=15 // pred_fallthru
        _
      // Predicated region
      $region25: #{attention_forward.10} parent=15 // pred_check
        %p201 = pneg %p84
      $region26: #{attention_forward.10} parent=15 // pred_check_branch
        %203 = sbr.rel (%p201) target = $region28
      $region27: #{attention_forward.10} parent=15 // pred_region
        %p204 = scmp.lt.s32.totalorder %s12, 1
        %s205 = scalar_select %p204, %s12, 1
        %s206 = smul.addr %s205, 8
        %s207 = scalar_lea.vmem %s2, %s206
      $region28: #{attention_forward.10} parent=15 // pred_fallthru
        _
      // Predicated region
      $region29: #{attention_forward.10} parent=15 // pred_check
        %p208 = pneg %p110
      $region30: #{attention_forward.10} parent=15 // pred_check_branch
        %210 = sbr.rel (%p208) target = $region32
      $region31: #{attention_forward.10} parent=15 // pred_region
        %p211 = scmp.lt.s32.totalorder %s12, 1
        %s212 = scalar_select %p211, %s12, 1
        %s213 = smul.addr %s212, 8
        %s214 = scalar_lea.vmem %s3, %s213
      $region32: #{attention_forward.10} parent=15 // pred_fallthru
        _
    $region16: #{attention_forward.10} parent=5 // pred_fallthru
      _
    %p215 = scmp.le.s32.totalorder 1, %s12
    %p216 = scmp.lt.s32.totalorder %s12, 3
    %p217 = pnand %p215, %p216
    %p218 = pneg %p217
    // Predicated region
    $region33: #{attention_forward.10} parent=5 // pred_check
      _
    $region34: #{attention_forward.10} parent=5 // pred_check_branch
      %220 = sbr.rel (%p217) target = $region36
    $region35: #{attention_forward.10} parent=5 // pred_region
      %s221 = ssub.s32 %s12, 1
      %p222 = scmp.lt.s32.totalorder %s17, 1
      %s223 = scalar_select %p222, %s17, 1
      %s224 = smul.addr %s223, 8
      %s225 = scalar_lea.vmem %s0, %s224
      %p226 = pneg %p38
      %p227 = pneg %p35
      %p228 = scmp.lt.s32.totalorder %s17, 1
      %s229 = scalar_select %p228, %s17, 1
      %s230 = smul.addr %s229, 8
      %s231 = scalar_lea.vmem %s1, %s230
      %p232 = pneg %p64
      %p233 = pneg %p61
      %p234 = scmp.lt.s32.totalorder %s17, 1
      %s235 = scalar_select %p234, %s17, 1
      %s236 = smul.addr %s235, 8
      %s237 = scalar_lea.vmem %s2, %s236
      %p238 = pneg %p90
      %p239 = pneg %p87
      %p240 = scmp.lt.s32.totalorder %s17, 1
      %s241 = scalar_select %p240, %s17, 1
      %s242 = smul.addr %s241, 8
      %s243 = scalar_lea.vmem %s3, %s242
      %p244 = pneg %p116
      %p245 = pneg %p113
      %p246 = pneg %p142
      %p247 = pneg %p139
      %p248 = scmp.lt.s32.totalorder %s17, 1
      %s249 = scalar_select %p248, %s17, 1
      %s250 = smul.addr %s249, 8
      %s251 = scalar_lea.vmem %s4, %s250
      %p252 = pneg %p168
      %p253 = pneg %p165
      %p254 = scmp.lt.s32.totalorder %s17, 1
      %s255 = scalar_select %p254, %s17, 1
      %s256 = smul.addr %s255, 8
      %s257 = scalar_lea.vmem %s5, %s256
      %p258 = scmp.lt.s32.totalorder %s17, 1
      %s259 = scalar_select %p258, %s17, 1
      %s260 = smul.addr %s259, 8
      %s261 = scalar_lea.vmem %s0, %s260
      %p262 = scmp.lt.s32.totalorder %s17, 1
      %s263 = scalar_select %p262, %s17, 1
      %s264 = smul.addr %s263, 8
      %s265 = scalar_lea.vmem %s1, %s264
      %p266 = scmp.lt.s32.totalorder %s17, 1
      %s267 = scalar_select %p266, %s17, 1
      %s268 = smul.addr %s267, 8
      %s269 = scalar_lea.vmem %s2, %s268
      %p270 = scmp.lt.s32.totalorder %s17, 1
      %s271 = scalar_select %p270, %s17, 1
      %s272 = smul.addr %s271, 8
      %s273 = scalar_lea.vmem %s3, %s272
      %p274 = scmp.lt.s32.totalorder %s17, 1
      %s275 = scalar_select %p274, %s17, 1
      %s276 = smul.addr %s275, 8
      %s277 = scalar_lea.vmem %s4, %s276
      %p278 = scmp.lt.s32.totalorder %s17, 1
      %s279 = scalar_select %p278, %s17, 1
      %s280 = smul.addr %s279, 8
      %s281 = scalar_lea.vmem %s5, %s280
      %v282 = vld [vmem:[%s261] sm:$0xff]
      %v283 = vld [vmem:[%s265] sm:$0xff]
      %v284 = vld [vmem:[%s269] sm:$0xff]
      %v285 = vld [vmem:[%s273] sm:$0xff]
      %vm286 = vcmask 64512
      %v288 = vsel %vm286, %v282, 0
      %v291 = vsel %vm286, %v285, 0
      %v294 = vsel %vm286, %v283, 0
      %296 = vmatprep.subr.mxu0 0.0
      %297 = vmatpush1.xpose.msra.mxu0 %v294
      %298 = vmatprep.subr.mxu0 0.0
      %299 = vmatpush1.xpose.msra.mxu0 0.0
      %300 = vmatprep.subr.mxu0 0.0
      %301 = vmatpush1.xpose.msra.mxu0 0.0
      %302 = vmatprep.subr.mxu0 0.0
      %303 = vmatpush1.xpose.msra.mxu0 0.0
      %304 = vmatprep.subr.mxu0 0.0
      %305 = vmatpush1.xpose.msra.mxu0 0.0
      %306 = vmatprep.subr.mxu0 0.0
      %307 = vmatpush1.xpose.msra.mxu0 0.0
      %308 = vmatprep.subr.mxu0 0.0
      %309 = vmatpush1.xpose.msra.mxu0 0.0
      %310 = vmatprep.subr.mxu0 0.0
      %311 = vmatpush1.xpose.msra.mxu0 0.0
      %312 = vmatprep.subr.mxu0 0.0
      %313 = vmatpush1.xpose.msra.mxu0 0.0
      %314 = vmatprep.subr.mxu0 0.0
      %315 = vmatpush1.xpose.msra.mxu0 0.0
      %316 = vmatprep.subr.mxu0 0.0
      %317 = vmatpush1.xpose.msra.mxu0 0.0
      %318 = vmatprep.subr.mxu0 0.0
      %319 = vmatpush1.xpose.msra.mxu0 0.0
      %320 = vmatprep.subr.mxu0 0.0
      %321 = vmatpush1.xpose.msra.mxu0 0.0
      %322 = vmatprep.subr.mxu0 0.0
      %323 = vmatpush1.xpose.msra.mxu0 0.0
      %324 = vmatprep.subr.mxu0 0.0
      %325 = vmatpush1.xpose.msra.mxu0 0.0
      %326 = vmatprep.subr.mxu0 0.0
      %327 = vmatpush1.xpose.msra.mxu0 0.0
      %328 = vmatprep.subr.mxu0 0.0
      %329 = vmatpush1.xpose.msra.mxu0 0.0
      %330 = vmatprep.subr.mxu0 0.0
      %331 = vmatpush1.xpose.msra.mxu0 0.0
      %332 = vmatprep.subr.mxu0 0.0
      %333 = vmatpush1.xpose.msra.mxu0 0.0
      %334 = vmatprep.subr.mxu0 0.0
      %335 = vmatpush1.xpose.msra.mxu0 0.0
      %336 = vmatprep.subr.mxu0 0.0
      %337 = vmatpush1.xpose.msra.mxu0 0.0
      %338 = vmatprep.subr.mxu0 0.0
      %339 = vmatpush1.xpose.msra.mxu0 0.0
      %340 = vmatprep.subr.mxu0 0.0
      %341 = vmatpush1.xpose.msra.mxu0 0.0
      %342 = vmatprep.subr.mxu0 0.0
      %343 = vmatpush1.xpose.msra.mxu0 0.0
      %344 = vmatprep.subr.mxu0 0.0
      %345 = vmatpush1.xpose.msra.mxu0 0.0
      %346 = vmatprep.subr.mxu0 0.0
      %347 = vmatpush1.xpose.msra.mxu0 0.0
      %348 = vmatprep.subr.mxu0 0.0
      %349 = vmatpush1.xpose.msra.mxu0 0.0
      %350 = vmatprep.subr.mxu0 0.0
      %351 = vmatpush1.xpose.msra.mxu0 0.0
      %352 = vmatprep.subr.mxu0 0.0
      %353 = vmatpush1.xpose.msra.mxu0 0.0
      %354 = vmatprep.subr.mxu0 0.0
      %355 = vmatpush1.xpose.msra.mxu0 0.0
      %356 = vmatprep.subr.mxu0 0.0
      %357 = vmatpush1.xpose.msra.mxu0 0.0
      %358 = vmatprep.subr.mxu0 0.0
      %359 = vmatpush1.xpose.msra.mxu0 0.0
      %360 = vmatprep.mubr.f32.mxu0 0.0
      %361 = vmatmul.mubr.f32.gmra.mrb[0].mxu0 %v288
      %v362 = vpop.f32.mrb[0].mxu0
      %v363 = vadd.f32 0.0, %v362
      %v364 = vpop.f32.mrb[0].mxu0
      %365 = vmatprep.mubr.f32.mxu0 0.0
      %366 = vmatmul.mubr.f32.gmra.mrb[0].mxu0 %v291
      %v367 = vpop.f32.mrb[0].mxu0
      %v368 = vadd.f32 0.0, %v367
      %v369 = vpop.f32.mrb[0].mxu0
      %370 = vdwg.mxu0
      %v371 = vmul.f32 %v363, 0.35355338
      %v372 = vmul.f32 %v368, 0.35355338
      %v373 = vsel %vm286, %v371, -inf
      %374 = vmax.xlane.f32.xlu0 %v373
      %v375 = vpop.xlane.xlu0 %374
      %v376 = vsel %vm286, %v372, -inf
      %377 = vmax.xlane.f32.xlu0 %v376
      %v378 = vpop.xlane.xlu0 %377
      %v379 = vsub.f32 %v371, %v375
      %v380 = vsub.f32 %v372, %v378
      %v381 = vmul.f32 %v379, 1.442695
      %v382 = vpow.pop %v381
      %v383 = vmul.f32 %v380, 1.442695
      %v384 = vpow.pop %v383
      %v385 = vsel %vm286, %v382, 0.0
      %386 = vadd.xlane.f32.xlu0 %v385
      %v387 = vpop.xlane.xlu0 %386
      %v388 = vsel %vm286, %v384, 0.0
      %389 = vadd.xlane.f32.xlu0 %v388
      %v390 = vpop.xlane.xlu0 %389
      %v391 = vrcp.pop %v387
      %v392 = vrcp.pop %v390
      %v393 = vmul.f32 %v382, %v391
      %v394 = vmul.f32 %v384, %v392
      %v396 = vsel %vm286, %v393, 0
      %v399 = vsel %vm286, %v394, 0
      %401 = vmatprep.subr.mxu0 0.0
      %402 = vmatpush1.msra.mxu0 %v284
      %403 = vmatprep.subr.mxu0 0.0
      %404 = vmatpush1.msra.mxu0 0.0
      %405 = vmatprep.subr.mxu0 0.0
      %406 = vmatpush1.msra.mxu0 0.0
      %407 = vmatprep.subr.mxu0 0.0
      %408 = vmatpush1.msra.mxu0 0.0
      %409 = vmatprep.subr.mxu0 0.0
      %410 = vmatpush1.msra.mxu0 0.0
      %411 = vmatprep.subr.mxu0 0.0
      %412 = vmatpush1.msra.mxu0 0.0
      %413 = vmatprep.subr.mxu0 0.0
      %414 = vmatpush1.msra.mxu0 0.0
      %415 = vmatprep.subr.mxu0 0.0
      %416 = vmatpush1.msra.mxu0 0.0
      %417 = vmatprep.subr.mxu0 0.0
      %418 = vmatpush1.msra.mxu0 0.0
      %419 = vmatprep.subr.mxu0 0.0
      %420 = vmatpush1.msra.mxu0 0.0
      %421 = vmatprep.subr.mxu0 0.0
      %422 = vmatpush1.msra.mxu0 0.0
      %423 = vmatprep.subr.mxu0 0.0
      %424 = vmatpush1.msra.mxu0 0.0
      %425 = vmatprep.subr.mxu0 0.0
      %426 = vmatpush1.msra.mxu0 0.0
      %427 = vmatprep.subr.mxu0 0.0
      %428 = vmatpush1.msra.mxu0 0.0
      %429 = vmatprep.subr.mxu0 0.0
      %430 = vmatpush1.msra.mxu0 0.0
      %431 = vmatprep.subr.mxu0 0.0
      %432 = vmatpush1.msra.mxu0 0.0
      %433 = vmatprep.subr.mxu0 0.0
      %434 = vmatpush1.msra.mxu0 0.0
      %435 = vmatprep.subr.mxu0 0.0
      %436 = vmatpush1.msra.mxu0 0.0
      %437 = vmatprep.subr.mxu0 0.0
      %438 = vmatpush1.msra.mxu0 0.0
      %439 = vmatprep.subr.mxu0 0.0
      %440 = vmatpush1.msra.mxu0 0.0
      %441 = vmatprep.subr.mxu0 0.0
      %442 = vmatpush1.msra.mxu0 0.0
      %443 = vmatprep.subr.mxu0 0.0
      %444 = vmatpush1.msra.mxu0 0.0
      %445 = vmatprep.subr.mxu0 0.0
      %446 = vmatpush1.msra.mxu0 0.0
      %447 = vmatprep.subr.mxu0 0.0
      %448 = vmatpush1.msra.mxu0 0.0
      %449 = vmatprep.subr.mxu0 0.0
      %450 = vmatpush1.msra.mxu0 0.0
      %451 = vmatprep.subr.mxu0 0.0
      %452 = vmatpush1.msra.mxu0 0.0
      %453 = vmatprep.subr.mxu0 0.0
      %454 = vmatpush1.msra.mxu0 0.0
      %455 = vmatprep.subr.mxu0 0.0
      %456 = vmatpush1.msra.mxu0 0.0
      %457 = vmatprep.subr.mxu0 0.0
      %458 = vmatpush1.msra.mxu0 0.0
      %459 = vmatprep.subr.mxu0 0.0
      %460 = vmatpush1.msra.mxu0 0.0
      %461 = vmatprep.subr.mxu0 0.0
      %462 = vmatpush1.msra.mxu0 0.0
      %463 = vmatprep.subr.mxu0 0.0
      %464 = vmatpush1.msra.mxu0 0.0
      %465 = vmatprep.mubr.f32.mxu0 0.0
      %466 = vmatmul.mubr.f32.gmra.mrb[0].mxu0 %v396
      %v467 = vpop.f32.mrb[0].mxu0
      %v468 = vadd.f32 0.0, %v467
      %v469 = vpop.f32.mrb[0].mxu0
      %470 = vmatprep.mubr.f32.mxu0 0.0
      %471 = vmatmul.mubr.f32.gmra.mrb[0].mxu0 %v399
      %v472 = vpop.f32.mrb[0].mxu0
      %v473 = vadd.f32 0.0, %v472
      %v474 = vpop.f32.mrb[0].mxu0
      %475 = vdwg.mxu0
      %476 = vrot.lane.b32.xlu0 %v282, 120
      %v477 = vpop.permute.xlu0 %476
      %478 = vrot.lane.b32.xlu0 %v285, 120
      %v479 = vpop.permute.xlu0 %478
      %480 = vrot.lane.b32.xlu0 %v283, 120
      %v481 = vpop.permute.xlu0 %480
      %v482 = vsel %vm286, %v477, 0
      %v484 = vsel %vm286, %v479, 0
      %v486 = vsel %vm286, %v481, 0
      %488 = vmatprep.subr.mxu0 0.0
      %489 = vmatpush1.xpose.msra.mxu0 %v486
      %490 = vmatprep.subr.mxu0 0.0
      %491 = vmatpush1.xpose.msra.mxu0 0.0
      %492 = vmatprep.subr.mxu0 0.0
      %493 = vmatpush1.xpose.msra.mxu0 0.0
      %494 = vmatprep.subr.mxu0 0.0
      %495 = vmatpush1.xpose.msra.mxu0 0.0
      %496 = vmatprep.subr.mxu0 0.0
      %497 = vmatpush1.xpose.msra.mxu0 0.0
      %498 = vmatprep.subr.mxu0 0.0
      %499 = vmatpush1.xpose.msra.mxu0 0.0
      %500 = vmatprep.subr.mxu0 0.0
      %501 = vmatpush1.xpose.msra.mxu0 0.0
      %502 = vmatprep.subr.mxu0 0.0
      %503 = vmatpush1.xpose.msra.mxu0 0.0
      %504 = vmatprep.subr.mxu0 0.0
      %505 = vmatpush1.xpose.msra.mxu0 0.0
      %506 = vmatprep.subr.mxu0 0.0
      %507 = vmatpush1.xpose.msra.mxu0 0.0
      %508 = vmatprep.subr.mxu0 0.0
      %509 = vmatpush1.xpose.msra.mxu0 0.0
      %510 = vmatprep.subr.mxu0 0.0
      %511 = vmatpush1.xpose.msra.mxu0 0.0
      %512 = vmatprep.subr.mxu0 0.0
      %513 = vmatpush1.xpose.msra.mxu0 0.0
      %514 = vmatprep.subr.mxu0 0.0
      %515 = vmatpush1.xpose.msra.mxu0 0.0
      %516 = vmatprep.subr.mxu0 0.0
      %517 = vmatpush1.xpose.msra.mxu0 0.0
      %518 = vmatprep.subr.mxu0 0.0
      %519 = vmatpush1.xpose.msra.mxu0 0.0
      %520 = vmatprep.subr.mxu0 0.0
      %521 = vmatpush1.xpose.msra.mxu0 0.0
      %522 = vmatprep.subr.mxu0 0.0
      %523 = vmatpush1.xpose.msra.mxu0 0.0
      %524 = vmatprep.subr.mxu0 0.0
      %525 = vmatpush1.xpose.msra.mxu0 0.0
      %526 = vmatprep.subr.mxu0 0.0
      %527 = vmatpush1.xpose.msra.mxu0 0.0
      %528 = vmatprep.subr.mxu0 0.0
      %529 = vmatpush1.xpose.msra.mxu0 0.0
      %530 = vmatprep.subr.mxu0 0.0
      %531 = vmatpush1.xpose.msra.mxu0 0.0
      %532 = vmatprep.subr.mxu0 0.0
      %533 = vmatpush1.xpose.msra.mxu0 0.0
      %534 = vmatprep.subr.mxu0 0.0
      %535 = vmatpush1.xpose.msra.mxu0 0.0
      %536 = vmatprep.subr.mxu0 0.0
      %537 = vmatpush1.xpose.msra.mxu0 0.0
      %538 = vmatprep.subr.mxu0 0.0
      %539 = vmatpush1.xpose.msra.mxu0 0.0
      %540 = vmatprep.subr.mxu0 0.0
      %541 = vmatpush1.xpose.msra.mxu0 0.0
      %542 = vmatprep.subr.mxu0 0.0
      %543 = vmatpush1.xpose.msra.mxu0 0.0
      %544 = vmatprep.subr.mxu0 0.0
      %545 = vmatpush1.xpose.msra.mxu0 0.0
      %546 = vmatprep.subr.mxu0 0.0
      %547 = vmatpush1.xpose.msra.mxu0 0.0
      %548 = vmatprep.subr.mxu0 0.0
      %549 = vmatpush1.xpose.msra.mxu0 0.0
      %550 = vmatprep.subr.mxu0 0.0
      %551 = vmatpush1.xpose.msra.mxu0 0.0
      %552 = vmatprep.mubr.f32.mxu0 0.0
      %553 = vmatmul.mubr.f32.gmra.mrb[0].mxu0 %v482
      %v554 = vpop.f32.mrb[0].mxu0
      %v555 = vadd.f32 0.0, %v554
      %v556 = vpop.f32.mrb[0].mxu0
      %557 = vmatprep.mubr.f32.mxu0 0.0
      %558 = vmatmul.mubr.f32.gmra.mrb[0].mxu0 %v484
      %v559 = vpop.f32.mrb[0].mxu0
      %v560 = vadd.f32 0.0, %v559
      %v561 = vpop.f32.mrb[0].mxu0
      %562 = vdwg.mxu0
      %v563 = vmul.f32 %v555, 0.35355338
      %v564 = vmul.f32 %v560, 0.35355338
      %v565 = vsel %vm286, %v563, -inf
      %566 = vmax.xlane.f32.xlu0 %v565
      %v567 = vpop.xlane.xlu0 %566
      %v568 = vsel %vm286, %v564, -inf
      %569 = vmax.xlane.f32.xlu0 %v568
      %v570 = vpop.xlane.xlu0 %569
      %v571 = vsub.f32 %v563, %v567
      %v572 = vsub.f32 %v564, %v570
      %v573 = vmul.f32 %v571, 1.442695
      %v574 = vpow.pop %v573
      %v575 = vmul.f32 %v572, 1.442695
      %v576 = vpow.pop %v575
      %v577 = vsel %vm286, %v574, 0.0
      %578 = vadd.xlane.f32.xlu0 %v577
      %v579 = vpop.xlane.xlu0 %578
      %v580 = vsel %vm286, %v576, 0.0
      %581 = vadd.xlane.f32.xlu0 %v580
      %v582 = vpop.xlane.xlu0 %581
      %v583 = vrcp.pop %v579
      %v584 = vrcp.pop %v582
      %v585 = vmul.f32 %v574, %v583
      %v586 = vmul.f32 %v576, %v584
      %588 = vrot.lane.b32.xlu0 %v284, 120
      %v589 = vpop.permute.xlu0 %588
      %v592 = vsel %vm286, %v585, 0
      %v595 = vsel %vm286, %v586, 0
      %597 = vmatprep.subr.mxu0 0.0
      %598 = vmatpush1.msra.mxu0 %v589
      %599 = vmatprep.subr.mxu0 0.0
      %600 = vmatpush1.msra.mxu0 0.0
      %601 = vmatprep.subr.mxu0 0.0
      %602 = vmatpush1.msra.mxu0 0.0
      %603 = vmatprep.subr.mxu0 0.0
      %604 = vmatpush1.msra.mxu0 0.0
      %605 = vmatprep.subr.mxu0 0.0
      %606 = vmatpush1.msra.mxu0 0.0
      %607 = vmatprep.subr.mxu0 0.0
      %608 = vmatpush1.msra.mxu0 0.0
      %609 = vmatprep.subr.mxu0 0.0
      %610 = vmatpush1.msra.mxu0 0.0
      %611 = vmatprep.subr.mxu0 0.0
      %612 = vmatpush1.msra.mxu0 0.0
      %613 = vmatprep.subr.mxu0 0.0
      %614 = vmatpush1.msra.mxu0 0.0
      %615 = vmatprep.subr.mxu0 0.0
      %616 = vmatpush1.msra.mxu0 0.0
      %617 = vmatprep.subr.mxu0 0.0
      %618 = vmatpush1.msra.mxu0 0.0
      %619 = vmatprep.subr.mxu0 0.0
      %620 = vmatpush1.msra.mxu0 0.0
      %621 = vmatprep.subr.mxu0 0.0
      %622 = vmatpush1.msra.mxu0 0.0
      %623 = vmatprep.subr.mxu0 0.0
      %624 = vmatpush1.msra.mxu0 0.0
      %625 = vmatprep.subr.mxu0 0.0
      %626 = vmatpush1.msra.mxu0 0.0
      %627 = vmatprep.subr.mxu0 0.0
      %628 = vmatpush1.msra.mxu0 0.0
      %629 = vmatprep.subr.mxu0 0.0
      %630 = vmatpush1.msra.mxu0 0.0
      %631 = vmatprep.subr.mxu0 0.0
      %632 = vmatpush1.msra.mxu0 0.0
      %633 = vmatprep.subr.mxu0 0.0
      %634 = vmatpush1.msra.mxu0 0.0
      %635 = vmatprep.subr.mxu0 0.0
      %636 = vmatpush1.msra.mxu0 0.0
      %637 = vmatprep.subr.mxu0 0.0
      %638 = vmatpush1.msra.mxu0 0.0
      %639 = vmatprep.subr.mxu0 0.0
      %640 = vmatpush1.msra.mxu0 0.0
      %641 = vmatprep.subr.mxu0 0.0
      %642 = vmatpush1.msra.mxu0 0.0
      %643 = vmatprep.subr.mxu0 0.0
      %644 = vmatpush1.msra.mxu0 0.0
      %645 = vmatprep.subr.mxu0 0.0
      %646 = vmatpush1.msra.mxu0 0.0
      %647 = vmatprep.subr.mxu0 0.0
      %648 = vmatpush1.msra.mxu0 0.0
      %649 = vmatprep.subr.mxu0 0.0
      %650 = vmatpush1.msra.mxu0 0.0
      %651 = vmatprep.subr.mxu0 0.0
      %652 = vmatpush1.msra.mxu0 0.0
      %653 = vmatprep.subr.mxu0 0.0
      %654 = vmatpush1.msra.mxu0 0.0
      %655 = vmatprep.subr.mxu0 0.0
      %656 = vmatpush1.msra.mxu0 0.0
      %657 = vmatprep.subr.mxu0 0.0
      %658 = vmatpush1.msra.mxu0 0.0
      %659 = vmatprep.subr.mxu0 0.0
      %660 = vmatpush1.msra.mxu0 0.0
      %661 = vmatprep.mubr.f32.mxu0 0.0
      %662 = vmatmul.mubr.f32.gmra.mrb[0].mxu0 %v592
      %v663 = vpop.f32.mrb[0].mxu0
      %v664 = vadd.f32 0.0, %v663
      %v665 = vpop.f32.mrb[0].mxu0
      %666 = vmatprep.mubr.f32.mxu0 0.0
      %667 = vmatmul.mubr.f32.gmra.mrb[0].mxu0 %v595
      %v668 = vpop.f32.mrb[0].mxu0
      %v669 = vadd.f32 0.0, %v668
      %v670 = vpop.f32.mrb[0].mxu0
      %671 = vdwg.mxu0
      %672 = vrot.lane.b32.xlu0 %v282, 112
      %v673 = vpop.permute.xlu0 %672
      %674 = vrot.lane.b32.xlu0 %v285, 112
      %v675 = vpop.permute.xlu0 %674
      %676 = vrot.lane.b32.xlu0 %v283, 112
      %v677 = vpop.permute.xlu0 %676
      %v678 = vsel %vm286, %v673, 0
      %v680 = vsel %vm286, %v675, 0
      %v682 = vsel %vm286, %v677, 0
      %684 = vmatprep.subr.mxu0 0.0
      %685 = vmatpush1.xpose.msra.mxu0 %v682
      %686 = vmatprep.subr.mxu0 0.0
      %687 = vmatpush1.xpose.msra.mxu0 0.0
      %688 = vmatprep.subr.mxu0 0.0
      %689 = vmatpush1.xpose.msra.mxu0 0.0
      %690 = vmatprep.subr.mxu0 0.0
      %691 = vmatpush1.xpose.msra.mxu0 0.0
      %692 = vmatprep.subr.mxu0 0.0
      %693 = vmatpush1.xpose.msra.mxu0 0.0
      %694 = vmatprep.subr.mxu0 0.0
      %695 = vmatpush1.xpose.msra.mxu0 0.0
      %696 = vmatprep.subr.mxu0 0.0
      %697 = vmatpush1.xpose.msra.mxu0 0.0
      %698 = vmatprep.subr.mxu0 0.0
      %699 = vmatpush1.xpose.msra.mxu0 0.0
      %700 = vmatprep.subr.mxu0 0.0
      %701 = vmatpush1.xpose.msra.mxu0 0.0
      %702 = vmatprep.subr.mxu0 0.0
      %703 = vmatpush1.xpose.msra.mxu0 0.0
      %704 = vmatprep.subr.mxu0 0.0
      %705 = vmatpush1.xpose.msra.mxu0 0.0
      %706 = vmatprep.subr.mxu0 0.0
      %707 = vmatpush1.xpose.msra.mxu0 0.0
      %708 = vmatprep.subr.mxu0 0.0
      %709 = vmatpush1.xpose.msra.mxu0 0.0
      %710 = vmatprep.subr.mxu0 0.0
      %711 = vmatpush1.xpose.msra.mxu0 0.0
      %712 = vmatprep.subr.mxu0 0.0
      %713 = vmatpush1.xpose.msra.mxu0 0.0
      %714 = vmatprep.subr.mxu0 0.0
      %715 = vmatpush1.xpose.msra.mxu0 0.0
      %716 = vmatprep.subr.mxu0 0.0
      %717 = vmatpush1.xpose.msra.mxu0 0.0
      %718 = vmatprep.subr.mxu0 0.0
      %719 = vmatpush1.xpose.msra.mxu0 0.0
      %720 = vmatprep.subr.mxu0 0.0
      %721 = vmatpush1.xpose.msra.mxu0 0.0
      %722 = vmatprep.subr.mxu0 0.0
      %723 = vmatpush1.xpose.msra.mxu0 0.0
      %724 = vmatprep.subr.mxu0 0.0
      %725 = vmatpush1.xpose.msra.mxu0 0.0
      %726 = vmatprep.subr.mxu0 0.0
      %727 = vmatpush1.xpose.msra.mxu0 0.0
      %728 = vmatprep.subr.mxu0 0.0
      %729 = vmatpush1.xpose.msra.mxu0 0.0
      %730 = vmatprep.subr.mxu0 0.0
      %731 = vmatpush1.xpose.msra.mxu0 0.0
      %732 = vmatprep.subr.mxu0 0.0
      %733 = vmatpush1.xpose.msra.mxu0 0.0
      %734 = vmatprep.subr.mxu0 0.0
      %735 = vmatpush1.xpose.msra.mxu0 0.0
      %736 = vmatprep.subr.mxu0 0.0
      %737 = vmatpush1.xpose.msra.mxu0 0.0
      %738 = vmatprep.subr.mxu0 0.0
      %739 = vmatpush1.xpose.msra.mxu0 0.0
      %740 = vmatprep.subr.mxu0 0.0
      %741 = vmatpush1.xpose.msra.mxu0 0.0
      %742 = vmatprep.subr.mxu0 0.0
      %743 = vmatpush1.xpose.msra.mxu0 0.0
      %744 = vmatprep.subr.mxu0 0.0
      %745 = vmatpush1.xpose.msra.mxu0 0.0
      %746 = vmatprep.subr.mxu0 0.0
      %747 = vmatpush1.xpose.msra.mxu0 0.0
      %748 = vmatprep.mubr.f32.mxu0 0.0
      %749 = vmatmul.mubr.f32.gmra.mrb[0].mxu0 %v678
      %v750 = vpop.f32.mrb[0].mxu0
      %v751 = vadd.f32 0.0, %v750
      %v752 = vpop.f32.mrb[0].mxu0
      %753 = vmatprep.mubr.f32.mxu0 0.0
      %754 = vmatmul.mubr.f32.gmra.mrb[0].mxu0 %v680
      %v755 = vpop.f32.mrb[0].mxu0
      %v756 = vadd.f32 0.0, %v755
      %v757 = vpop.f32.mrb[0].mxu0
      %758 = vdwg.mxu0
      %v759 = vmul.f32 %v751, 0.35355338
      %v760 = vmul.f32 %v756, 0.35355338
      %v761 = vsel %vm286, %v759, -inf
      %762 = vmax.xlane.f32.xlu0 %v761
      %v763 = vpop.xlane.xlu0 %762
      %v764 = vsel %vm286, %v760, -inf
      %765 = vmax.xlane.f32.xlu0 %v764
      %v766 = vpop.xlane.xlu0 %765
      %v767 = vsub.f32 %v759, %v763
      %v768 = vsub.f32 %v760, %v766
      %v769 = vmul.f32 %v767, 1.442695
      %v770 = vpow.pop %v769
      %v771 = vmul.f32 %v768, 1.442695
      %v772 = vpow.pop %v771
      %v773 = vsel %vm286, %v770, 0.0
      %774 = vadd.xlane.f32.xlu0 %v773
      %v775 = vpop.xlane.xlu0 %774
      %v776 = vsel %vm286, %v772, 0.0
      %777 = vadd.xlane.f32.xlu0 %v776
      %v778 = vpop.xlane.xlu0 %777
      %v779 = vrcp.pop %v775
      %v780 = vrcp.pop %v778
      %v781 = vmul.f32 %v770, %v779
      %v782 = vmul.f32 %v772, %v780
      %783 = vrot.lane.b32.xlu0 %v284, 112
      %v784 = vpop.permute.xlu0 %783
      %v787 = vsel %vm286, %v781, 0
      %v790 = vsel %vm286, %v782, 0
      %792 = vmatprep.subr.mxu0 0.0
      %793 = vmatpush1.msra.mxu0 %v784
      %794 = vmatprep.subr.mxu0 0.0
      %795 = vmatpush1.msra.mxu0 0.0
      %796 = vmatprep.subr.mxu0 0.0
      %797 = vmatpush1.msra.mxu0 0.0
      %798 = vmatprep.subr.mxu0 0.0
      %799 = vmatpush1.msra.mxu0 0.0
      %800 = vmatprep.subr.mxu0 0.0
      %801 = vmatpush1.msra.mxu0 0.0
      %802 = vmatprep.subr.mxu0 0.0
      %803 = vmatpush1.msra.mxu0 0.0
      %804 = vmatprep.subr.mxu0 0.0
      %805 = vmatpush1.msra.mxu0 0.0
      %806 = vmatprep.subr.mxu0 0.0
      %807 = vmatpush1.msra.mxu0 0.0
      %808 = vmatprep.subr.mxu0 0.0
      %809 = vmatpush1.msra.mxu0 0.0
      %810 = vmatprep.subr.mxu0 0.0
      %811 = vmatpush1.msra.mxu0 0.0
      %812 = vmatprep.subr.mxu0 0.0
      %813 = vmatpush1.msra.mxu0 0.0
      %814 = vmatprep.subr.mxu0 0.0
      %815 = vmatpush1.msra.mxu0 0.0
      %816 = vmatprep.subr.mxu0 0.0
      %817 = vmatpush1.msra.mxu0 0.0
      %818 = vmatprep.subr.mxu0 0.0
      %819 = vmatpush1.msra.mxu0 0.0
      %820 = vmatprep.subr.mxu0 0.0
      %821 = vmatpush1.msra.mxu0 0.0
      %822 = vmatprep.subr.mxu0 0.0
      %823 = vmatpush1.msra.mxu0 0.0
      %824 = vmatprep.subr.mxu0 0.0
      %825 = vmatpush1.msra.mxu0 0.0
      %826 = vmatprep.subr.mxu0 0.0
      %827 = vmatpush1.msra.mxu0 0.0
      %828 = vmatprep.subr.mxu0 0.0
      %829 = vmatpush1.msra.mxu0 0.0
      %830 = vmatprep.subr.mxu0 0.0
      %831 = vmatpush1.msra.mxu0 0.0
      %832 = vmatprep.subr.mxu0 0.0
      %833 = vmatpush1.msra.mxu0 0.0
      %834 = vmatprep.subr.mxu0 0.0
      %835 = vmatpush1.msra.mxu0 0.0
      %836 = vmatprep.subr.mxu0 0.0
      %837 = vmatpush1.msra.mxu0 0.0
      %838 = vmatprep.subr.mxu0 0.0
      %839 = vmatpush1.msra.mxu0 0.0
      %840 = vmatprep.subr.mxu0 0.0
      %841 = vmatpush1.msra.mxu0 0.0
      %842 = vmatprep.subr.mxu0 0.0
      %843 = vmatpush1.msra.mxu0 0.0
      %844 = vmatprep.subr.mxu0 0.0
      %845 = vmatpush1.msra.mxu0 0.0
      %846 = vmatprep.subr.mxu0 0.0
      %847 = vmatpush1.msra.mxu0 0.0
      %848 = vmatprep.subr.mxu0 0.0
      %849 = vmatpush1.msra.mxu0 0.0
      %850 = vmatprep.subr.mxu0 0.0
      %851 = vmatpush1.msra.mxu0 0.0
      %852 = vmatprep.subr.mxu0 0.0
      %853 = vmatpush1.msra.mxu0 0.0
      %854 = vmatprep.subr.mxu0 0.0
      %855 = vmatpush1.msra.mxu0 0.0
      %856 = vmatprep.mubr.f32.mxu0 0.0
      %857 = vmatmul.mubr.f32.gmra.mrb[0].mxu0 %v787
      %v858 = vpop.f32.mrb[0].mxu0
      %v859 = vadd.f32 0.0, %v858
      %v860 = vpop.f32.mrb[0].mxu0
      %861 = vmatprep.mubr.f32.mxu0 0.0
      %862 = vmatmul.mubr.f32.gmra.mrb[0].mxu0 %v790
      %v863 = vpop.f32.mrb[0].mxu0
      %v864 = vadd.f32 0.0, %v863
      %v865 = vpop.f32.mrb[0].mxu0
      %866 = vdwg.mxu0
      %867 = vrot.lane.b32.xlu0 %v282, 104
      %v868 = vpop.permute.xlu0 %867
      %869 = vrot.lane.b32.xlu0 %v285, 104
      %v870 = vpop.permute.xlu0 %869
      %871 = vrot.lane.b32.xlu0 %v283, 104
      %v872 = vpop.permute.xlu0 %871
      %v873 = vsel %vm286, %v868, 0
      %v875 = vsel %vm286, %v870, 0
      %v877 = vsel %vm286, %v872, 0
      %879 = vmatprep.subr.mxu0 0.0
      %880 = vmatpush1.xpose.msra.mxu0 %v877
      %881 = vmatprep.subr.mxu0 0.0
      %882 = vmatpush1.xpose.msra.mxu0 0.0
      %883 = vmatprep.subr.mxu0 0.0
      %884 = vmatpush1.xpose.msra.mxu0 0.0
      %885 = vmatprep.subr.mxu0 0.0
      %886 = vmatpush1.xpose.msra.mxu0 0.0
      %887 = vmatprep.subr.mxu0 0.0
      %888 = vmatpush1.xpose.msra.mxu0 0.0
      %889 = vmatprep.subr.mxu0 0.0
      %890 = vmatpush1.xpose.msra.mxu0 0.0
      %891 = vmatprep.subr.mxu0 0.0
      %892 = vmatpush1.xpose.msra.mxu0 0.0
      %893 = vmatprep.subr.mxu0 0.0
      %894 = vmatpush1.xpose.msra.mxu0 0.0
      %895 = vmatprep.subr.mxu0 0.0
      %896 = vmatpush1.xpose.msra.mxu0 0.0
      %897 = vmatprep.subr.mxu0 0.0
      %898 = vmatpush1.xpose.msra.mxu0 0.0
      %899 = vmatprep.subr.mxu0 0.0
      %900 = vmatpush1.xpose.msra.mxu0 0.0
      %901 = vmatprep.subr.mxu0 0.0
      %902 = vmatpush1.xpose.msra.mxu0 0.0
      %903 = vmatprep.subr.mxu0 0.0
      %904 = vmatpush1.xpose.msra.mxu0 0.0
      %905 = vmatprep.subr.mxu0 0.0
      %906 = vmatpush1.xpose.msra.mxu0 0.0
      %907 = vmatprep.subr.mxu0 0.0
      %908 = vmatpush1.xpose.msra.mxu0 0.0
      %909 = vmatprep.subr.mxu0 0.0
      %910 = vmatpush1.xpose.msra.mxu0 0.0
      %911 = vmatprep.subr.mxu0 0.0
      %912 = vmatpush1.xpose.msra.mxu0 0.0
      %913 = vmatprep.subr.mxu0 0.0
      %914 = vmatpush1.xpose.msra.mxu0 0.0
      %915 = vmatprep.subr.mxu0 0.0
      %916 = vmatpush1.xpose.msra.mxu0 0.0
      %917 = vmatprep.subr.mxu0 0.0
      %918 = vmatpush1.xpose.msra.mxu0 0.0
      %919 = vmatprep.subr.mxu0 0.0
      %920 = vmatpush1.xpose.msra.mxu0 0.0
      %921 = vmatprep.subr.mxu0 0.0
      %922 = vmatpush1.xpose.msra.mxu0 0.0
      %923 = vmatprep.subr.mxu0 0.0
      %924 = vmatpush1.xpose.msra.mxu0 0.0
      %925 = vmatprep.subr.mxu0 0.0
      %926 = vmatpush1.xpose.msra.mxu0 0.0
      %927 = vmatprep.subr.mxu0 0.0
      %928 = vmatpush1.xpose.msra.mxu0 0.0
      %929 = vmatprep.subr.mxu0 0.0
      %930 = vmatpush1.xpose.msra.mxu0 0.0
      %931 = vmatprep.subr.mxu0 0.0
      %932 = vmatpush1.xpose.msra.mxu0 0.0
      %933 = vmatprep.subr.mxu0 0.0
      %934 = vmatpush1.xpose.msra.mxu0 0.0
      %935 = vmatprep.subr.mxu0 0.0
      %936 = vmatpush1.xpose.msra.mxu0 0.0
      %937 = vmatprep.subr.mxu0 0.0
      %938 = vmatpush1.xpose.msra.mxu0 0.0
      %939 = vmatprep.subr.mxu0 0.0
      %940 = vmatpush1.xpose.msra.mxu0 0.0
      %941 = vmatprep.subr.mxu0 0.0
      %942 = vmatpush1.xpose.msra.mxu0 0.0
      %943 = vmatprep.mubr.f32.mxu0 0.0
      %944 = vmatmul.mubr.f32.gmra.mrb[0].mxu0 %v873
      %v945 = vpop.f32.mrb[0].mxu0
      %v946 = vadd.f32 0.0, %v945
      %v947 = vpop.f32.mrb[0].mxu0
      %948 = vmatprep.mubr.f32.mxu0 0.0
      %949 = vmatmul.mubr.f32.gmra.mrb[0].mxu0 %v875
      %v950 = vpop.f32.mrb[0].mxu0
      %v951 = vadd.f32 0.0, %v950
      %v952 = vpop.f32.mrb[0].mxu0
      %953 = vdwg.mxu0
      %v954 = vmul.f32 %v946, 0.35355338
      %v955 = vmul.f32 %v951, 0.35355338
      %v956 = vsel %vm286, %v954, -inf
      %957 = vmax.xlane.f32.xlu0 %v956
      %v958 = vpop.xlane.xlu0 %957
      %v959 = vsel %vm286, %v955, -inf
      %960 = vmax.xlane.f32.xlu0 %v959
      %v961 = vpop.xlane.xlu0 %960
      %v962 = vsub.f32 %v954, %v958
      %v963 = vsub.f32 %v955, %v961
      %v964 = vmul.f32 %v962, 1.442695
      %v965 = vpow.pop %v964
      %v966 = vmul.f32 %v963, 1.442695
      %v967 = vpow.pop %v966
      %v968 = vsel %vm286, %v965, 0.0
      %969 = vadd.xlane.f32.xlu0 %v968
      %v970 = vpop.xlane.xlu0 %969
      %v971 = vsel %vm286, %v967, 0.0
      %972 = vadd.xlane.f32.xlu0 %v971
      %v973 = vpop.xlane.xlu0 %972
      %v974 = vrcp.pop %v970
      %v975 = vrcp.pop %v973
      %v976 = vmul.f32 %v965, %v974
      %v977 = vmul.f32 %v967, %v975
      %978 = vrot.lane.b32.xlu0 %v284, 104
      %v979 = vpop.permute.xlu0 %978
      %v982 = vsel %vm286, %v976, 0
      %v985 = vsel %vm286, %v977, 0
      %987 = vmatprep.subr.mxu0 0.0
      %988 = vmatpush1.msra.mxu0 %v979
      %989 = vmatprep.subr.mxu0 0.0
      %990 = vmatpush1.msra.mxu0 0.0
      %991 = vmatprep.subr.mxu0 0.0
      %992 = vmatpush1.msra.mxu0 0.0
      %993 = vmatprep.subr.mxu0 0.0
      %994 = vmatpush1.msra.mxu0 0.0
      %995 = vmatprep.subr.mxu0 0.0
      %996 = vmatpush1.msra.mxu0 0.0
      %997 = vmatprep.subr.mxu0 0.0
      %998 = vmatpush1.msra.mxu0 0.0
      %999 = vmatprep.subr.mxu0 0.0
      %1000 = vmatpush1.msra.mxu0 0.0
      %1001 = vmatprep.subr.mxu0 0.0
      %1002 = vmatpush1.msra.mxu0 0.0
      %1003 = vmatprep.subr.mxu0 0.0
      %1004 = vmatpush1.msra.mxu0 0.0
      %1005 = vmatprep.subr.mxu0 0.0
      %1006 = vmatpush1.msra.mxu0 0.0
      %1007 = vmatprep.subr.mxu0 0.0
      %1008 = vmatpush1.msra.mxu0 0.0
      %1009 = vmatprep.subr.mxu0 0.0
      %1010 = vmatpush1.msra.mxu0 0.0
      %1011 = vmatprep.subr.mxu0 0.0
      %1012 = vmatpush1.msra.mxu0 0.0
      %1013 = vmatprep.subr.mxu0 0.0
      %1014 = vmatpush1.msra.mxu0 0.0
      %1015 = vmatprep.subr.mxu0 0.0
      %1016 = vmatpush1.msra.mxu0 0.0
      %1017 = vmatprep.subr.mxu0 0.0
      %1018 = vmatpush1.msra.mxu0 0.0
      %1019 = vmatprep.subr.mxu0 0.0
      %1020 = vmatpush1.msra.mxu0 0.0
      %1021 = vmatprep.subr.mxu0 0.0
      %1022 = vmatpush1.msra.mxu0 0.0
      %1023 = vmatprep.subr.mxu0 0.0
      %1024 = vmatpush1.msra.mxu0 0.0
      %1025 = vmatprep.subr.mxu0 0.0
      %1026 = vmatpush1.msra.mxu0 0.0
      %1027 = vmatprep.subr.mxu0 0.0
      %1028 = vmatpush1.msra.mxu0 0.0
      %1029 = vmatprep.subr.mxu0 0.0
      %1030 = vmatpush1.msra.mxu0 0.0
      %1031 = vmatprep.subr.mxu0 0.0
      %1032 = vmatpush1.msra.mxu0 0.0
      %1033 = vmatprep.subr.mxu0 0.0
      %1034 = vmatpush1.msra.mxu0 0.0
      %1035 = vmatprep.subr.mxu0 0.0
      %1036 = vmatpush1.msra.mxu0 0.0
      %1037 = vmatprep.subr.mxu0 0.0
      %1038 = vmatpush1.msra.mxu0 0.0
      %1039 = vmatprep.subr.mxu0 0.0
      %1040 = vmatpush1.msra.mxu0 0.0
      %1041 = vmatprep.subr.mxu0 0.0
      %1042 = vmatpush1.msra.mxu0 0.0
      %1043 = vmatprep.subr.mxu0 0.0
      %1044 = vmatpush1.msra.mxu0 0.0
      %1045 = vmatprep.subr.mxu0 0.0
      %1046 = vmatpush1.msra.mxu0 0.0
      %1047 = vmatprep.subr.mxu0 0.0
      %1048 = vmatpush1.msra.mxu0 0.0
      %1049 = vmatprep.subr.mxu0 0.0
      %1050 = vmatpush1.msra.mxu0 0.0
      %1051 = vmatprep.mubr.f32.mxu0 0.0
      %1052 = vmatmul.mubr.f32.gmra.mrb[0].mxu0 %v982
      %v1053 = vpop.f32.mrb[0].mxu0
      %v1054 = vadd.f32 0.0, %v1053
      %v1055 = vpop.f32.mrb[0].mxu0
      %1056 = vmatprep.mubr.f32.mxu0 0.0
      %1057 = vmatmul.mubr.f32.gmra.mrb[0].mxu0 %v985
      %v1058 = vpop.f32.mrb[0].mxu0
      %v1059 = vadd.f32 0.0, %v1058
      %v1060 = vpop.f32.mrb[0].mxu0
      %1061 = vdwg.mxu0
      %1063 = vrot.lane.b32.xlu0 %v664, 8
      %v1064 = vpop.permute.xlu0 %1063
      %1067 = vrot.lane.b32.xlu0 %v859, 16
      %v1068 = vpop.permute.xlu0 %1067
      %1071 = vrot.lane.b32.xlu0 %v1054, 24
      %v1072 = vpop.permute.xlu0 %1071
      %v1074 = vsel %vm286, %v468, %v1064
      %vm1075 = vcmask 130048
      %v1076 = vsel %vm1075, %v1074, %v1068
      %vm1077 = vcmask 195584
      %v1078 = vsel %vm1077, %v1076, %v1072
      %1080 = vrot.lane.b32.xlu0 %v669, 8
      %v1081 = vpop.permute.xlu0 %1080
      %1084 = vrot.lane.b32.xlu0 %v864, 16
      %v1085 = vpop.permute.xlu0 %1084
      %1088 = vrot.lane.b32.xlu0 %v1059, 24
      %v1089 = vpop.permute.xlu0 %1088
      %v1091 = vsel %vm286, %v473, %v1081
      %v1092 = vsel %vm1075, %v1091, %v1085
      %v1093 = vsel %vm1077, %v1092, %v1089
      %vm1094 = vcmask 261120
      %1095 = vst.msk [vmem:[%s277] sm:$0xff] %vm1094, %v1078
      %1096 = vst.msk [vmem:[%s281] sm:$0xff] %vm1094, %v1093
      %p1097 = scmp.lt.s32.totalorder %s17, 1
      %s1098 = scalar_select %p1097, %s17, 1
      %s1099 = smul.addr %s1098, 8
      %s1100 = scalar_lea.vmem %s4, %s1099
      %p1101 = scmp.lt.s32.totalorder %s17, 1
      %s1102 = scalar_select %p1101, %s17, 1
      %s1103 = smul.addr %s1102, 8
      %s1104 = scalar_lea.vmem %s5, %s1103
      // Predicated region
      $region37: #{attention_forward.10} parent=35 // pred_check
        %p1105 = pneg %p139
      $region38: #{attention_forward.10} parent=35 // pred_check_branch
        %1107 = sbr.rel (%p1105) target = $region40
      $region39: #{attention_forward.10} parent=35 // pred_region
        _
      $region40: #{attention_forward.10} parent=35 // pred_fallthru
        _
      // Predicated region
      $region41: #{attention_forward.10} parent=35 // pred_check
        %p1108 = pneg %p165
      $region42: #{attention_forward.10} parent=35 // pred_check_branch
        %1110 = sbr.rel (%p1108) target = $region44
      $region43: #{attention_forward.10} parent=35 // pred_region
        _
      $region44: #{attention_forward.10} parent=35 // pred_fallthru
        _
    $region36: #{attention_forward.10} parent=5 // pred_fallthru
      _
    %p1111 = scmp.le.s32.totalorder 2, %s12
    // Predicated region
    $region45: #{attention_forward.10} parent=5 // pred_check
      %p1112 = pneg %p1111
    $region46: #{attention_forward.10} parent=5 // pred_check_branch
      %1114 = sbr.rel (%p1112) target = $region48
    $region47: #{attention_forward.10} parent=5 // pred_region
      %s1115 = ssub.s32 %s12, 2
      // Predicated region
      $region49: #{attention_forward.10} parent=47 // pred_check
        %p1116 = pneg %p145
      $region50: #{attention_forward.10} parent=47 // pred_check_branch
        %1118 = sbr.rel (%p1116) target = $region52
      $region51: #{attention_forward.10} parent=47 // pred_region
        %p1119 = scmp.lt.s32.totalorder %s18, 1
        %s1120 = scalar_select %p1119, %s18, 1
        %s1121 = smul.addr %s1120, 8
        %s1122 = scalar_lea.vmem %s4, %s1121
      $region52: #{attention_forward.10} parent=47 // pred_fallthru
        _
      // Predicated region
      $region53: #{attention_forward.10} parent=47 // pred_check
        %p1123 = pneg %p171
      $region54: #{attention_forward.10} parent=47 // pred_check_branch
        %1125 = sbr.rel (%p1123) target = $region56
      $region55: #{attention_forward.10} parent=47 // pred_region
        %p1126 = scmp.lt.s32.totalorder %s18, 1
        %s1127 = scalar_select %p1126, %s18, 1
        %s1128 = smul.addr %s1127, 8
        %s1129 = scalar_lea.vmem %s5, %s1128
      $region56: #{attention_forward.10} parent=47 // pred_fallthru
        _
    $region48: #{attention_forward.10} parent=5 // pred_fallthru
      _
  $region6: #{attention_forward.10} parent=0 // loop_footer
    %s16 = sadd.s32 1, %s12
  $region7: #{attention_forward.10} parent=0 // loop_footer_branch
    %11 = sbr.rel target = $region3
  $region8: #{attention_forward.10} parent=0 // loop_exit
    _

</llo_original>
